<compile_context>
chip_gen: v7x
topology: tpu7x:2x2x1
jax: 0.10.0
libtpu: 0.0.40
codegen_flags: <defaults>
</compile_context>

<pallas_src>
import functools

import jax
import jax.numpy as jnp
from jax import lax
from jax.experimental import pallas as pl
from jax.experimental.pallas import tpu as pltpu


def mha_kernel(x_ref, wqkv_ref, bqkv_ref, wp_ref, bp_ref, o_ref,
               qkv_scr, ctx_scr, *, block_b, seq, num_heads, head_dim, scale):
    C = num_heads * head_dim
    M = block_b * seq                       # rows processed this grid step

    # ---- fused QKV projection: a single MXU matmul, (M, 3C) result ---------
    x = x_ref[...].reshape(M, C)            # merge (block_b, seq) -> rows (layout-free)
    qkv_scr[...] = (
        jnp.dot(x, wqkv_ref[...], preferred_element_type=jnp.float32)
        + bqkv_ref[...])

    # ---- per-(batch, head) attention ----------------------------------------
    for b in range(block_b):
        r0 = b * seq
        for h in range(num_heads):
            c0 = h * head_dim
            rows = pl.ds(r0, seq)
            q_h = qkv_scr[rows, pl.ds(c0, head_dim)]              # (N, D)
            k_h = qkv_scr[rows, pl.ds(C + c0, head_dim)]          # (N, D)
            v_h = qkv_scr[rows, pl.ds(2 * C + c0, head_dim)]      # (N, D)

            # q @ k^T without materializing k^T (contract last dims directly).
            # NOTE: the reference ADDS the scale; reproduced exactly.
            logits = lax.dot_general(
                q_h, k_h, (((1,), (1,)), ((), ())),
                preferred_element_type=jnp.float32) + scale

            logits = logits - jnp.max(logits, axis=-1, keepdims=True)
            p = jnp.exp(logits)
            p = p * pl.reciprocal(jnp.sum(p, axis=-1, keepdims=True),
                                  approx=True)

            # Dropout on `p` is identity (eval mode).
            ctx_scr[rows, pl.ds(c0, head_dim)] = jnp.dot(
                p, v_h, preferred_element_type=jnp.float32)

    # ---- output projection ---------------------------------------------------
    y = (jnp.dot(ctx_scr[...], wp_ref[...], preferred_element_type=jnp.float32)
         + bp_ref[...])
    o_ref[...] = y.reshape(block_b, seq, C).astype(o_ref.dtype)


def _pick_block_b(B, N):
    """Fold batch elements into one grid step until ~256 rows (or all of B)."""
    target_rows = 256
    bt = max(1, min(B, max(1, target_rows // max(N, 1))))
    while B % bt:       # need an even split (no masking logic in the kernel)
        bt -= 1
    return bt


def multi_head_attention(x, wqkv, bqkv, wproj, bproj, *, num_heads):
    """x: (B, N, C) f32.  wqkv: (3C, C), bqkv: (3C,), wproj: (C, C), bproj: (C,)."""
    B, N, C = x.shape
    assert C % num_heads == 0
    head_dim = C // num_heads
    scale = head_dim ** (-0.5)

    # Fuse the three projections: x @ [Wq^T | Wk^T | Wv^T] (+ fused bias).
    w_fused = wqkv.T                    # (C, 3C)
    b_fused = bqkv.reshape(1, 3 * C)    # (1, 3C)
    wp = wproj.T                        # (C, C)
    bp = bproj.reshape(1, C)            # (1, C)

    block_b = _pick_block_b(B, N)
    grid = (B // block_b,)
    rows = block_b * N

    kernel = functools.partial(
        mha_kernel, block_b=block_b, seq=N, num_heads=num_heads,
        head_dim=head_dim, scale=scale)

    # Explicit scoped-VMEM budget: double-buffered x/out blocks, grid-invariant
    # weights, and the two scratch slabs (with generous padding margin).
    itemsize = 4
    vmem_bytes = itemsize * (
        2 * rows * C                                   # x block (double-buffered)
        + 2 * rows * C                                 # out block (double-buffered)
        + 2 * (C * 3 * C + 3 * C + C * C + C)          # weights + biases
        + rows * 3 * C + rows * C)                     # scratch
    vmem_limit = int(min(max(2 * vmem_bytes, 16 * 1024 * 1024),
                         32 * 1024 * 1024))

    def invariant(shape):
        return pl.BlockSpec(shape, lambda i: (0,) * len(shape))

    return pl.pallas_call(
        kernel,
        out_shape=jax.ShapeDtypeStruct((B, N, C), x.dtype),
        grid=grid,
        in_specs=[
            pl.BlockSpec((block_b, N, C), lambda i: (i, 0, 0)),   # x
            invariant((C, 3 * C)),                                # fused Wqkv
            invariant((1, 3 * C)),                                # fused bqkv
            invariant((C, C)),                                    # Wproj
            invariant((1, C)),                                    # bproj
        ],
        out_specs=pl.BlockSpec((block_b, N, C), lambda i: (i, 0, 0)),
        scratch_shapes=[
            pltpu.VMEM((rows, 3 * C), jnp.float32),   # fused qkv slab
            pltpu.VMEM((rows, C), jnp.float32),       # per-head context slab
        ],
        compiler_params=pltpu.CompilerParams(
            dimension_semantics=("parallel",),
            vmem_limit_bytes=vmem_limit),
    )(x, w_fused, b_fused, wp, bp)


def ref_mha(x, wqkv, bqkv, wproj, bproj, *, num_heads):
    """Pure-JAX reference matching the PyTorch forward (eval-mode dropout)."""
    B, N, C = x.shape
    D = C // num_heads
    scale = D ** (-0.5)
    qkv = x @ wqkv.T + bqkv                                  # (B, N, 3C)
    qkv = qkv.reshape(B, N, 3, num_heads, D).transpose(2, 0, 3, 1, 4)
    q, k, v = qkv[0], qkv[1], qkv[2]                         # (B, H, N, D)
    attn = jnp.einsum('bhnd,bhmd->bhnm', q, k) + scale       # + scale, as in reference
    attn = jax.nn.softmax(attn, axis=-1)
    out = jnp.einsum('bhnm,bhmd->bhnd', attn, v)
    out = out.transpose(0, 2, 1, 3).reshape(B, N, C)
    return out @ wproj.T + bproj


if __name__ == "__main__":
    B, N, C = 2, 8, 32
    num_heads = 8

    key = jax.random.PRNGKey(0)
    kx, kw1, kb1, kw2, kb2 = jax.random.split(key, 5)

    x = jax.random.normal(kx, (B, N, C), dtype=jnp.float32)

    # nn.Linear-style deterministic init: U(-1/sqrt(in), 1/sqrt(in))
    bound = 1.0 / (C ** 0.5)
    wqkv = jax.random.uniform(kw1, (3 * C, C), jnp.float32, -bound, bound)
    bqkv = jax.random.uniform(kb1, (3 * C,), jnp.float32, -bound, bound)
    wproj = jax.random.uniform(kw2, (C, C), jnp.float32, -bound, bound)
    bproj = jax.random.uniform(kb2, (C,), jnp.float32, -bound, bound)

    out = multi_head_attention(x, wqkv, bqkv, wproj, bproj, num_heads=num_heads)
    out = jax.block_until_ready(out)

    ref = ref_mha(x, wqkv, bqkv, wproj, bproj, num_heads=num_heads)
    assert out.shape == (B, N, C)
    # Tolerance accounts for the EUP approximate reciprocal in the softmax
    # normalization (everything else is f32 with f32 MXU accumulation).
    err = jnp.max(jnp.abs(out - ref))
    assert jnp.allclose(out, ref, atol=2e-3, rtol=2e-3), f"max abs err = {err}"

    print("KERNEL_OK")
</pallas_src>

<mosaic_0001>
module attributes {stable_mosaic.version = 11 : i64} {
  func.func @mha_kernel(%arg0: i32, %arg1: memref<2x8x32xf32, #tpu.memory_space<vmem>>, %arg2: memref<32x96xf32, #tpu.memory_space<vmem>>, %arg3: memref<1x96xf32, #tpu.memory_space<vmem>>, %arg4: memref<32x32xf32, #tpu.memory_space<vmem>>, %arg5: memref<1x32xf32, #tpu.memory_space<vmem>>, %arg6: memref<2x8x32xf32, #tpu.memory_space<vmem>>, %arg7: memref<16x96xf32, #tpu.memory_space<vmem>>, %arg8: memref<16x32xf32, #tpu.memory_space<vmem>>) attributes {dimension_semantics = [#tpu.dimension_semantics<parallel>], iteration_bounds = array<i64: 1>, scalar_prefetch = 0 : i64, scratch_operands = 2 : i64, tpu.core_type = #tpu.core_type<tc>, window_params = [{transform_indices = @transform_0, window_bounds = array<i64: 2, 8, 32>}, {pipeline_mode = #tpu.pipeline_mode<synchronous>, transform_indices = @transform_1, window_bounds = array<i64: 32, 96>}, {pipeline_mode = #tpu.pipeline_mode<synchronous>, transform_indices = @transform_2, window_bounds = array<i64: 1, 96>}, {pipeline_mode = #tpu.pipeline_mode<synchronous>, transform_indices = @transform_3, window_bounds = array<i64: 32, 32>}, {pipeline_mode = #tpu.pipeline_mode<synchronous>, transform_indices = @transform_4, window_bounds = array<i64: 1, 32>}, {transform_indices = @transform_5, window_bounds = array<i64: 2, 8, 32>}]} {
    %c0 = arith.constant 0 : index
    %c0_0 = arith.constant 0 : index
    %c0_1 = arith.constant 0 : index
    %0 = vector.load %arg1[%c0, %c0_0, %c0_1] : memref<2x8x32xf32, #tpu.memory_space<vmem>>, vector<2x8x32xf32>
    %1 = vector.shape_cast %0 : vector<2x8x32xf32> to vector<16x32xf32>
    %c0_2 = arith.constant 0 : index
    %c0_3 = arith.constant 0 : index
    %2 = vector.load %arg2[%c0_2, %c0_3] : memref<32x96xf32, #tpu.memory_space<vmem>>, vector<32x96xf32>
    %cst = arith.constant dense<0.000000e+00> : vector<16x96xf32>
    %3 = tpu.matmul %1, %2, %cst {dimension_numbers = #tpu.dot_dimension_numbers<[1], [0], [0], [1], [0, 0, 1, 1], [], []>} : vector<16x32xf32>, vector<32x96xf32>, vector<16x96xf32> -> vector<16x96xf32>
    %c0_4 = arith.constant 0 : index
    %c0_5 = arith.constant 0 : index
    %4 = vector.load %arg3[%c0_4, %c0_5] : memref<1x96xf32, #tpu.memory_space<vmem>>, vector<1x96xf32>
    %5 = vector.broadcast %4 : vector<1x96xf32> to vector<16x96xf32>
    %6 = arith.addf %3, %5 : vector<16x96xf32>
    %c0_6 = arith.constant 0 : index
    %c0_7 = arith.constant 0 : index
    %7 = vector.load %arg7[%c0_6, %c0_7] : memref<16x96xf32, #tpu.memory_space<vmem>>, vector<16x96xf32>
    tpu.vector_store %arg7[%c0_6, %c0_7], %6 {strides = array<i32>} : memref<16x96xf32, #tpu.memory_space<vmem>>, vector<16x96xf32>,
    %c0_8 = arith.constant 0 : index
    %c0_9 = arith.constant 0 : index
    %8 = vector.load %arg7[%c0_8, %c0_9] : memref<16x96xf32, #tpu.memory_space<vmem>>, vector<8x4xf32>
    %c0_10 = arith.constant 0 : index
    %c32 = arith.constant 32 : index
    %9 = vector.load %arg7[%c0_10, %c32] : memref<16x96xf32, #tpu.memory_space<vmem>>, vector<8x4xf32>
    %c0_11 = arith.constant 0 : index
    %c64 = arith.constant 64 : index
    %10 = vector.load %arg7[%c0_11, %c64] : memref<16x96xf32, #tpu.memory_space<vmem>>, vector<8x4xf32>
    %cst_12 = arith.constant dense<0.000000e+00> : vector<8x8xf32>
    %11 = tpu.matmul %8, %9, %cst_12 {dimension_numbers = #tpu.dot_dimension_numbers<[1], [1], [0], [0], [0, 0, 1, 0], [], []>} : vector<8x4xf32>, vector<8x4xf32>, vector<8x8xf32> -> vector<8x8xf32>
    %cst_13 = arith.constant 5.000000e-01 : f32
    %12 = vector.broadcast %cst_13 : f32 to vector<8x8xf32>
    %13 = arith.addf %11, %12 : vector<8x8xf32>
    %cst_14 = arith.constant dense<0xFF800000> : vector<8xf32>
    %14 = vector.multi_reduction <maximumf>, %13, %cst_14 [1] : vector<8x8xf32> to vector<8xf32>
    %15 = vector.shape_cast %14 : vector<8xf32> to vector<8x1xf32>
    %16 = vector.broadcast %15 : vector<8x1xf32> to vector<8x8xf32>
    %17 = arith.subf %13, %16 : vector<8x8xf32>
    %18 = math.exp %17 : vector<8x8xf32>
    %cst_15 = arith.constant dense<0.000000e+00> : vector<8xf32>
    %19 = vector.multi_reduction <add>, %18, %cst_15 [1] : vector<8x8xf32> to vector<8xf32>
    %20 = vector.shape_cast %19 : vector<8xf32> to vector<8x1xf32>
    %21 = tpu.reciprocal %20 {approx = true} : vector<8x1xf32> -> vector<8x1xf32>
    %22 = vector.broadcast %21 : vector<8x1xf32> to vector<8x8xf32>
    %23 = arith.mulf %18, %22 : vector<8x8xf32>
    %cst_16 = arith.constant dense<0.000000e+00> : vector<8x4xf32>
    %24 = tpu.matmul %23, %10, %cst_16 {dimension_numbers = #tpu.dot_dimension_numbers<[1], [0], [0], [1], [0, 0, 1, 1], [], []>} : vector<8x8xf32>, vector<8x4xf32>, vector<8x4xf32> -> vector<8x4xf32>
    %c0_17 = arith.constant 0 : index
    %c0_18 = arith.constant 0 : index
    %25 = vector.load %arg8[%c0_17, %c0_18] : memref<16x32xf32, #tpu.memory_space<vmem>>, vector<8x4xf32>
    tpu.vector_store %arg8[%c0_17, %c0_18], %24 {strides = array<i32>} : memref<16x32xf32, #tpu.memory_space<vmem>>, vector<8x4xf32>,
    %c0_19 = arith.constant 0 : index
    %c4 = arith.constant 4 : index
    %26 = vector.load %arg7[%c0_19, %c4] : memref<16x96xf32, #tpu.memory_space<vmem>>, vector<8x4xf32>
    %c0_20 = arith.constant 0 : index
    %c36 = arith.constant 36 : index
    %27 = vector.load %arg7[%c0_20, %c36] : memref<16x96xf32, #tpu.memory_space<vmem>>, vector<8x4xf32>
    %c0_21 = arith.constant 0 : index
    %c68 = arith.constant 68 : index
    %28 = vector.load %arg7[%c0_21, %c68] : memref<16x96xf32, #tpu.memory_space<vmem>>, vector<8x4xf32>
    %cst_22 = arith.constant dense<0.000000e+00> : vector<8x8xf32>
    %29 = tpu.matmul %26, %27, %cst_22 {dimension_numbers = #tpu.dot_dimension_numbers<[1], [1], [0], [0], [0, 0, 1, 0], [], []>} : vector<8x4xf32>, vector<8x4xf32>, vector<8x8xf32> -> vector<8x8xf32>
    %cst_23 = arith.constant 5.000000e-01 : f32
    %30 = vector.broadcast %cst_23 : f32 to vector<8x8xf32>
    %31 = arith.addf %29, %30 : vector<8x8xf32>
    %cst_24 = arith.constant dense<0xFF800000> : vector<8xf32>
    %32 = vector.multi_reduction <maximumf>, %31, %cst_24 [1] : vector<8x8xf32> to vector<8xf32>
    %33 = vector.shape_cast %32 : vector<8xf32> to vector<8x1xf32>
    %34 = vector.broadcast %33 : vector<8x1xf32> to vector<8x8xf32>
    %35 = arith.subf %31, %34 : vector<8x8xf32>
    %36 = math.exp %35 : vector<8x8xf32>
    %cst_25 = arith.constant dense<0.000000e+00> : vector<8xf32>
    %37 = vector.multi_reduction <add>, %36, %cst_25 [1] : vector<8x8xf32> to vector<8xf32>
    %38 = vector.shape_cast %37 : vector<8xf32> to vector<8x1xf32>
    %39 = tpu.reciprocal %38 {approx = true} : vector<8x1xf32> -> vector<8x1xf32>
    %40 = vector.broadcast %39 : vector<8x1xf32> to vector<8x8xf32>
    %41 = arith.mulf %36, %40 : vector<8x8xf32>
    %cst_26 = arith.constant dense<0.000000e+00> : vector<8x4xf32>
    %42 = tpu.matmul %41, %28, %cst_26 {dimension_numbers = #tpu.dot_dimension_numbers<[1], [0], [0], [1], [0, 0, 1, 1], [], []>} : vector<8x8xf32>, vector<8x4xf32>, vector<8x4xf32> -> vector<8x4xf32>
    %c0_27 = arith.constant 0 : index
    %c4_28 = arith.constant 4 : index
    %43 = vector.load %arg8[%c0_27, %c4_28] : memref<16x32xf32, #tpu.memory_space<vmem>>, vector<8x4xf32>
    tpu.vector_store %arg8[%c0_27, %c4_28], %42 {strides = array<i32>} : memref<16x32xf32, #tpu.memory_space<vmem>>, vector<8x4xf32>,
    %c0_29 = arith.constant 0 : index
    %c8 = arith.constant 8 : index
    %44 = vector.load %arg7[%c0_29, %c8] : memref<16x96xf32, #tpu.memory_space<vmem>>, vector<8x4xf32>
    %c0_30 = arith.constant 0 : index
    %c40 = arith.constant 40 : index
    %45 = vector.load %arg7[%c0_30, %c40] : memref<16x96xf32, #tpu.memory_space<vmem>>, vector<8x4xf32>
    %c0_31 = arith.constant 0 : index
    %c72 = arith.constant 72 : index
    %46 = vector.load %arg7[%c0_31, %c72] : memref<16x96xf32, #tpu.memory_space<vmem>>, vector<8x4xf32>
    %cst_32 = arith.constant dense<0.000000e+00> : vector<8x8xf32>
    %47 = tpu.matmul %44, %45, %cst_32 {dimension_numbers = #tpu.dot_dimension_numbers<[1], [1], [0], [0], [0, 0, 1, 0], [], []>} : vector<8x4xf32>, vector<8x4xf32>, vector<8x8xf32> -> vector<8x8xf32>
    %cst_33 = arith.constant 5.000000e-01 : f32
    %48 = vector.broadcast %cst_33 : f32 to vector<8x8xf32>
    %49 = arith.addf %47, %48 : vector<8x8xf32>
    %cst_34 = arith.constant dense<0xFF800000> : vector<8xf32>
    %50 = vector.multi_reduction <maximumf>, %49, %cst_34 [1] : vector<8x8xf32> to vector<8xf32>
    %51 = vector.shape_cast %50 : vector<8xf32> to vector<8x1xf32>
    %52 = vector.broadcast %51 : vector<8x1xf32> to vector<8x8xf32>
    %53 = arith.subf %49, %52 : vector<8x8xf32>
    %54 = math.exp %53 : vector<8x8xf32>
    %cst_35 = arith.constant dense<0.000000e+00> : vector<8xf32>
    %55 = vector.multi_reduction <add>, %54, %cst_35 [1] : vector<8x8xf32> to vector<8xf32>
    %56 = vector.shape_cast %55 : vector<8xf32> to vector<8x1xf32>
    %57 = tpu.reciprocal %56 {approx = true} : vector<8x1xf32> -> vector<8x1xf32>
    %58 = vector.broadcast %57 : vector<8x1xf32> to vector<8x8xf32>
    %59 = arith.mulf %54, %58 : vector<8x8xf32>
    %cst_36 = arith.constant dense<0.000000e+00> : vector<8x4xf32>
    %60 = tpu.matmul %59, %46, %cst_36 {dimension_numbers = #tpu.dot_dimension_numbers<[1], [0], [0], [1], [0, 0, 1, 1], [], []>} : vector<8x8xf32>, vector<8x4xf32>, vector<8x4xf32> -> vector<8x4xf32>
    %c0_37 = arith.constant 0 : index
    %c8_38 = arith.constant 8 : index
    %61 = vector.load %arg8[%c0_37, %c8_38] : memref<16x32xf32, #tpu.memory_space<vmem>>, vector<8x4xf32>
    tpu.vector_store %arg8[%c0_37, %c8_38], %60 {strides = array<i32>} : memref<16x32xf32, #tpu.memory_space<vmem>>, vector<8x4xf32>,
    %c0_39 = arith.constant 0 : index
    %c12 = arith.constant 12 : index
    %62 = vector.load %arg7[%c0_39, %c12] : memref<16x96xf32, #tpu.memory_space<vmem>>, vector<8x4xf32>
    %c0_40 = arith.constant 0 : index
    %c44 = arith.constant 44 : index
    %63 = vector.load %arg7[%c0_40, %c44] : memref<16x96xf32, #tpu.memory_space<vmem>>, vector<8x4xf32>
    %c0_41 = arith.constant 0 : index
    %c76 = arith.constant 76 : index
    %64 = vector.load %arg7[%c0_41, %c76] : memref<16x96xf32, #tpu.memory_space<vmem>>, vector<8x4xf32>
    %cst_42 = arith.constant dense<0.000000e+00> : vector<8x8xf32>
    %65 = tpu.matmul %62, %63, %cst_42 {dimension_numbers = #tpu.dot_dimension_numbers<[1], [1], [0], [0], [0, 0, 1, 0], [], []>} : vector<8x4xf32>, vector<8x4xf32>, vector<8x8xf32> -> vector<8x8xf32>
    %cst_43 = arith.constant 5.000000e-01 : f32
    %66 = vector.broadcast %cst_43 : f32 to vector<8x8xf32>
    %67 = arith.addf %65, %66 : vector<8x8xf32>
    %cst_44 = arith.constant dense<0xFF800000> : vector<8xf32>
    %68 = vector.multi_reduction <maximumf>, %67, %cst_44 [1] : vector<8x8xf32> to vector<8xf32>
    %69 = vector.shape_cast %68 : vector<8xf32> to vector<8x1xf32>
    %70 = vector.broadcast %69 : vector<8x1xf32> to vector<8x8xf32>
    %71 = arith.subf %67, %70 : vector<8x8xf32>
    %72 = math.exp %71 : vector<8x8xf32>
    %cst_45 = arith.constant dense<0.000000e+00> : vector<8xf32>
    %73 = vector.multi_reduction <add>, %72, %cst_45 [1] : vector<8x8xf32> to vector<8xf32>
    %74 = vector.shape_cast %73 : vector<8xf32> to vector<8x1xf32>
    %75 = tpu.reciprocal %74 {approx = true} : vector<8x1xf32> -> vector<8x1xf32>
    %76 = vector.broadcast %75 : vector<8x1xf32> to vector<8x8xf32>
    %77 = arith.mulf %72, %76 : vector<8x8xf32>
    %cst_46 = arith.constant dense<0.000000e+00> : vector<8x4xf32>
    %78 = tpu.matmul %77, %64, %cst_46 {dimension_numbers = #tpu.dot_dimension_numbers<[1], [0], [0], [1], [0, 0, 1, 1], [], []>} : vector<8x8xf32>, vector<8x4xf32>, vector<8x4xf32> -> vector<8x4xf32>
    %c0_47 = arith.constant 0 : index
    %c12_48 = arith.constant 12 : index
    %79 = vector.load %arg8[%c0_47, %c12_48] : memref<16x32xf32, #tpu.memory_space<vmem>>, vector<8x4xf32>
    tpu.vector_store %arg8[%c0_47, %c12_48], %78 {strides = array<i32>} : memref<16x32xf32, #tpu.memory_space<vmem>>, vector<8x4xf32>,
    %c0_49 = arith.constant 0 : index
    %c16 = arith.constant 16 : index
    %80 = vector.load %arg7[%c0_49, %c16] : memref<16x96xf32, #tpu.memory_space<vmem>>, vector<8x4xf32>
    %c0_50 = arith.constant 0 : index
    %c48 = arith.constant 48 : index
    %81 = vector.load %arg7[%c0_50, %c48] : memref<16x96xf32, #tpu.memory_space<vmem>>, vector<8x4xf32>
    %c0_51 = arith.constant 0 : index
    %c80 = arith.constant 80 : index
    %82 = vector.load %arg7[%c0_51, %c80] : memref<16x96xf32, #tpu.memory_space<vmem>>, vector<8x4xf32>
    %cst_52 = arith.constant dense<0.000000e+00> : vector<8x8xf32>
    %83 = tpu.matmul %80, %81, %cst_52 {dimension_numbers = #tpu.dot_dimension_numbers<[1], [1], [0], [0], [0, 0, 1, 0], [], []>} : vector<8x4xf32>, vector<8x4xf32>, vector<8x8xf32> -> vector<8x8xf32>
    %cst_53 = arith.constant 5.000000e-01 : f32
    %84 = vector.broadcast %cst_53 : f32 to vector<8x8xf32>
    %85 = arith.addf %83, %84 : vector<8x8xf32>
    %cst_54 = arith.constant dense<0xFF800000> : vector<8xf32>
    %86 = vector.multi_reduction <maximumf>, %85, %cst_54 [1] : vector<8x8xf32> to vector<8xf32>
    %87 = vector.shape_cast %86 : vector<8xf32> to vector<8x1xf32>
    %88 = vector.broadcast %87 : vector<8x1xf32> to vector<8x8xf32>
    %89 = arith.subf %85, %88 : vector<8x8xf32>
    %90 = math.exp %89 : vector<8x8xf32>
    %cst_55 = arith.constant dense<0.000000e+00> : vector<8xf32>
    %91 = vector.multi_reduction <add>, %90, %cst_55 [1] : vector<8x8xf32> to vector<8xf32>
    %92 = vector.shape_cast %91 : vector<8xf32> to vector<8x1xf32>
    %93 = tpu.reciprocal %92 {approx = true} : vector<8x1xf32> -> vector<8x1xf32>
    %94 = vector.broadcast %93 : vector<8x1xf32> to vector<8x8xf32>
    %95 = arith.mulf %90, %94 : vector<8x8xf32>
    %cst_56 = arith.constant dense<0.000000e+00> : vector<8x4xf32>
    %96 = tpu.matmul %95, %82, %cst_56 {dimension_numbers = #tpu.dot_dimension_numbers<[1], [0], [0], [1], [0, 0, 1, 1], [], []>} : vector<8x8xf32>, vector<8x4xf32>, vector<8x4xf32> -> vector<8x4xf32>
    %c0_57 = arith.constant 0 : index
    %c16_58 = arith.constant 16 : index
    %97 = vector.load %arg8[%c0_57, %c16_58] : memref<16x32xf32, #tpu.memory_space<vmem>>, vector<8x4xf32>
    tpu.vector_store %arg8[%c0_57, %c16_58], %96 {strides = array<i32>} : memref<16x32xf32, #tpu.memory_space<vmem>>, vector<8x4xf32>,
    %c0_59 = arith.constant 0 : index
    %c20 = arith.constant 20 : index
    %98 = vector.load %arg7[%c0_59, %c20] : memref<16x96xf32, #tpu.memory_space<vmem>>, vector<8x4xf32>
    %c0_60 = arith.constant 0 : index
    %c52 = arith.constant 52 : index
    %99 = vector.load %arg7[%c0_60, %c52] : memref<16x96xf32, #tpu.memory_space<vmem>>, vector<8x4xf32>
    %c0_61 = arith.constant 0 : index
    %c84 = arith.constant 84 : index
    %100 = vector.load %arg7[%c0_61, %c84] : memref<16x96xf32, #tpu.memory_space<vmem>>, vector<8x4xf32>
    %cst_62 = arith.constant dense<0.000000e+00> : vector<8x8xf32>
    %101 = tpu.matmul %98, %99, %cst_62 {dimension_numbers = #tpu.dot_dimension_numbers<[1], [1], [0], [0], [0, 0, 1, 0], [], []>} : vector<8x4xf32>, vector<8x4xf32>, vector<8x8xf32> -> vector<8x8xf32>
    %cst_63 = arith.constant 5.000000e-01 : f32
    %102 = vector.broadcast %cst_63 : f32 to vector<8x8xf32>
    %103 = arith.addf %101, %102 : vector<8x8xf32>
    %cst_64 = arith.constant dense<0xFF800000> : vector<8xf32>
    %104 = vector.multi_reduction <maximumf>, %103, %cst_64 [1] : vector<8x8xf32> to vector<8xf32>
    %105 = vector.shape_cast %104 : vector<8xf32> to vector<8x1xf32>
    %106 = vector.broadcast %105 : vector<8x1xf32> to vector<8x8xf32>
    %107 = arith.subf %103, %106 : vector<8x8xf32>
    %108 = math.exp %107 : vector<8x8xf32>
    %cst_65 = arith.constant dense<0.000000e+00> : vector<8xf32>
    %109 = vector.multi_reduction <add>, %108, %cst_65 [1] : vector<8x8xf32> to vector<8xf32>
    %110 = vector.shape_cast %109 : vector<8xf32> to vector<8x1xf32>
    %111 = tpu.reciprocal %110 {approx = true} : vector<8x1xf32> -> vector<8x1xf32>
    %112 = vector.broadcast %111 : vector<8x1xf32> to vector<8x8xf32>
    %113 = arith.mulf %108, %112 : vector<8x8xf32>
    %cst_66 = arith.constant dense<0.000000e+00> : vector<8x4xf32>
    %114 = tpu.matmul %113, %100, %cst_66 {dimension_numbers = #tpu.dot_dimension_numbers<[1], [0], [0], [1], [0, 0, 1, 1], [], []>} : vector<8x8xf32>, vector<8x4xf32>, vector<8x4xf32> -> vector<8x4xf32>
    %c0_67 = arith.constant 0 : index
    %c20_68 = arith.constant 20 : index
    %115 = vector.load %arg8[%c0_67, %c20_68] : memref<16x32xf32, #tpu.memory_space<vmem>>, vector<8x4xf32>
    tpu.vector_store %arg8[%c0_67, %c20_68], %114 {strides = array<i32>} : memref<16x32xf32, #tpu.memory_space<vmem>>, vector<8x4xf32>,
    %c0_69 = arith.constant 0 : index
    %c24 = arith.constant 24 : index
    %116 = vector.load %arg7[%c0_69, %c24] : memref<16x96xf32, #tpu.memory_space<vmem>>, vector<8x4xf32>
    %c0_70 = arith.constant 0 : index
    %c56 = arith.constant 56 : index
    %117 = vector.load %arg7[%c0_70, %c56] : memref<16x96xf32, #tpu.memory_space<vmem>>, vector<8x4xf32>
    %c0_71 = arith.constant 0 : index
    %c88 = arith.constant 88 : index
    %118 = vector.load %arg7[%c0_71, %c88] : memref<16x96xf32, #tpu.memory_space<vmem>>, vector<8x4xf32>
    %cst_72 = arith.constant dense<0.000000e+00> : vector<8x8xf32>
    %119 = tpu.matmul %116, %117, %cst_72 {dimension_numbers = #tpu.dot_dimension_numbers<[1], [1], [0], [0], [0, 0, 1, 0], [], []>} : vector<8x4xf32>, vector<8x4xf32>, vector<8x8xf32> -> vector<8x8xf32>
    %cst_73 = arith.constant 5.000000e-01 : f32
    %120 = vector.broadcast %cst_73 : f32 to vector<8x8xf32>
    %121 = arith.addf %119, %120 : vector<8x8xf32>
    %cst_74 = arith.constant dense<0xFF800000> : vector<8xf32>
    %122 = vector.multi_reduction <maximumf>, %121, %cst_74 [1] : vector<8x8xf32> to vector<8xf32>
    %123 = vector.shape_cast %122 : vector<8xf32> to vector<8x1xf32>
    %124 = vector.broadcast %123 : vector<8x1xf32> to vector<8x8xf32>
    %125 = arith.subf %121, %124 : vector<8x8xf32>
    %126 = math.exp %125 : vector<8x8xf32>
    %cst_75 = arith.constant dense<0.000000e+00> : vector<8xf32>
    %127 = vector.multi_reduction <add>, %126, %cst_75 [1] : vector<8x8xf32> to vector<8xf32>
    %128 = vector.shape_cast %127 : vector<8xf32> to vector<8x1xf32>
    %129 = tpu.reciprocal %128 {approx = true} : vector<8x1xf32> -> vector<8x1xf32>
    %130 = vector.broadcast %129 : vector<8x1xf32> to vector<8x8xf32>
    %131 = arith.mulf %126, %130 : vector<8x8xf32>
    %cst_76 = arith.constant dense<0.000000e+00> : vector<8x4xf32>
    %132 = tpu.matmul %131, %118, %cst_76 {dimension_numbers = #tpu.dot_dimension_numbers<[1], [0], [0], [1], [0, 0, 1, 1], [], []>} : vector<8x8xf32>, vector<8x4xf32>, vector<8x4xf32> -> vector<8x4xf32>
    %c0_77 = arith.constant 0 : index
    %c24_78 = arith.constant 24 : index
    %133 = vector.load %arg8[%c0_77, %c24_78] : memref<16x32xf32, #tpu.memory_space<vmem>>, vector<8x4xf32>
    tpu.vector_store %arg8[%c0_77, %c24_78], %132 {strides = array<i32>} : memref<16x32xf32, #tpu.memory_space<vmem>>, vector<8x4xf32>,
    %c0_79 = arith.constant 0 : index
    %c28 = arith.constant 28 : index
    %134 = vector.load %arg7[%c0_79, %c28] : memref<16x96xf32, #tpu.memory_space<vmem>>, vector<8x4xf32>
    %c0_80 = arith.constant 0 : index
    %c60 = arith.constant 60 : index
    %135 = vector.load %arg7[%c0_80, %c60] : memref<16x96xf32, #tpu.memory_space<vmem>>, vector<8x4xf32>
    %c0_81 = arith.constant 0 : index
    %c92 = arith.constant 92 : index
    %136 = vector.load %arg7[%c0_81, %c92] : memref<16x96xf32, #tpu.memory_space<vmem>>, vector<8x4xf32>
    %cst_82 = arith.constant dense<0.000000e+00> : vector<8x8xf32>
    %137 = tpu.matmul %134, %135, %cst_82 {dimension_numbers = #tpu.dot_dimension_numbers<[1], [1], [0], [0], [0, 0, 1, 0], [], []>} : vector<8x4xf32>, vector<8x4xf32>, vector<8x8xf32> -> vector<8x8xf32>
    %cst_83 = arith.constant 5.000000e-01 : f32
    %138 = vector.broadcast %cst_83 : f32 to vector<8x8xf32>
    %139 = arith.addf %137, %138 : vector<8x8xf32>
    %cst_84 = arith.constant dense<0xFF800000> : vector<8xf32>
    %140 = vector.multi_reduction <maximumf>, %139, %cst_84 [1] : vector<8x8xf32> to vector<8xf32>
    %141 = vector.shape_cast %140 : vector<8xf32> to vector<8x1xf32>
    %142 = vector.broadcast %141 : vector<8x1xf32> to vector<8x8xf32>
    %143 = arith.subf %139, %142 : vector<8x8xf32>
    %144 = math.exp %143 : vector<8x8xf32>
    %cst_85 = arith.constant dense<0.000000e+00> : vector<8xf32>
    %145 = vector.multi_reduction <add>, %144, %cst_85 [1] : vector<8x8xf32> to vector<8xf32>
    %146 = vector.shape_cast %145 : vector<8xf32> to vector<8x1xf32>
    %147 = tpu.reciprocal %146 {approx = true} : vector<8x1xf32> -> vector<8x1xf32>
    %148 = vector.broadcast %147 : vector<8x1xf32> to vector<8x8xf32>
    %149 = arith.mulf %144, %148 : vector<8x8xf32>
    %cst_86 = arith.constant dense<0.000000e+00> : vector<8x4xf32>
    %150 = tpu.matmul %149, %136, %cst_86 {dimension_numbers = #tpu.dot_dimension_numbers<[1], [0], [0], [1], [0, 0, 1, 1], [], []>} : vector<8x8xf32>, vector<8x4xf32>, vector<8x4xf32> -> vector<8x4xf32>
    %c0_87 = arith.constant 0 : index
    %c28_88 = arith.constant 28 : index
    %151 = vector.load %arg8[%c0_87, %c28_88] : memref<16x32xf32, #tpu.memory_space<vmem>>, vector<8x4xf32>
    tpu.vector_store %arg8[%c0_87, %c28_88], %150 {strides = array<i32>} : memref<16x32xf32, #tpu.memory_space<vmem>>, vector<8x4xf32>,
    %c8_89 = arith.constant 8 : index
    %c0_90 = arith.constant 0 : index
    %152 = vector.load %arg7[%c8_89, %c0_90] : memref<16x96xf32, #tpu.memory_space<vmem>>, vector<8x4xf32>
    %c8_91 = arith.constant 8 : index
    %c32_92 = arith.constant 32 : index
    %153 = vector.load %arg7[%c8_91, %c32_92] : memref<16x96xf32, #tpu.memory_space<vmem>>, vector<8x4xf32>
    %c8_93 = arith.constant 8 : index
    %c64_94 = arith.constant 64 : index
    %154 = vector.load %arg7[%c8_93, %c64_94] : memref<16x96xf32, #tpu.memory_space<vmem>>, vector<8x4xf32>
    %cst_95 = arith.constant dense<0.000000e+00> : vector<8x8xf32>
    %155 = tpu.matmul %152, %153, %cst_95 {dimension_numbers = #tpu.dot_dimension_numbers<[1], [1], [0], [0], [0, 0, 1, 0], [], []>} : vector<8x4xf32>, vector<8x4xf32>, vector<8x8xf32> -> vector<8x8xf32>
    %cst_96 = arith.constant 5.000000e-01 : f32
    %156 = vector.broadcast %cst_96 : f32 to vector<8x8xf32>
    %157 = arith.addf %155, %156 : vector<8x8xf32>
    %cst_97 = arith.constant dense<0xFF800000> : vector<8xf32>
    %158 = vector.multi_reduction <maximumf>, %157, %cst_97 [1] : vector<8x8xf32> to vector<8xf32>
    %159 = vector.shape_cast %158 : vector<8xf32> to vector<8x1xf32>
    %160 = vector.broadcast %159 : vector<8x1xf32> to vector<8x8xf32>
    %161 = arith.subf %157, %160 : vector<8x8xf32>
    %162 = math.exp %161 : vector<8x8xf32>
    %cst_98 = arith.constant dense<0.000000e+00> : vector<8xf32>
    %163 = vector.multi_reduction <add>, %162, %cst_98 [1] : vector<8x8xf32> to vector<8xf32>
    %164 = vector.shape_cast %163 : vector<8xf32> to vector<8x1xf32>
    %165 = tpu.reciprocal %164 {approx = true} : vector<8x1xf32> -> vector<8x1xf32>
    %166 = vector.broadcast %165 : vector<8x1xf32> to vector<8x8xf32>
    %167 = arith.mulf %162, %166 : vector<8x8xf32>
    %cst_99 = arith.constant dense<0.000000e+00> : vector<8x4xf32>
    %168 = tpu.matmul %167, %154, %cst_99 {dimension_numbers = #tpu.dot_dimension_numbers<[1], [0], [0], [1], [0, 0, 1, 1], [], []>} : vector<8x8xf32>, vector<8x4xf32>, vector<8x4xf32> -> vector<8x4xf32>
    %c8_100 = arith.constant 8 : index
    %c0_101 = arith.constant 0 : index
    %169 = vector.load %arg8[%c8_100, %c0_101] : memref<16x32xf32, #tpu.memory_space<vmem>>, vector<8x4xf32>
    tpu.vector_store %arg8[%c8_100, %c0_101], %168 {strides = array<i32>} : memref<16x32xf32, #tpu.memory_space<vmem>>, vector<8x4xf32>,
    %c8_102 = arith.constant 8 : index
    %c4_103 = arith.constant 4 : index
    %170 = vector.load %arg7[%c8_102, %c4_103] : memref<16x96xf32, #tpu.memory_space<vmem>>, vector<8x4xf32>
    %c8_104 = arith.constant 8 : index
    %c36_105 = arith.constant 36 : index
    %171 = vector.load %arg7[%c8_104, %c36_105] : memref<16x96xf32, #tpu.memory_space<vmem>>, vector<8x4xf32>
    %c8_106 = arith.constant 8 : index
    %c68_107 = arith.constant 68 : index
    %172 = vector.load %arg7[%c8_106, %c68_107] : memref<16x96xf32, #tpu.memory_space<vmem>>, vector<8x4xf32>
    %cst_108 = arith.constant dense<0.000000e+00> : vector<8x8xf32>
    %173 = tpu.matmul %170, %171, %cst_108 {dimension_numbers = #tpu.dot_dimension_numbers<[1], [1], [0], [0], [0, 0, 1, 0], [], []>} : vector<8x4xf32>, vector<8x4xf32>, vector<8x8xf32> -> vector<8x8xf32>
    %cst_109 = arith.constant 5.000000e-01 : f32
    %174 = vector.broadcast %cst_109 : f32 to vector<8x8xf32>
    %175 = arith.addf %173, %174 : vector<8x8xf32>
    %cst_110 = arith.constant dense<0xFF800000> : vector<8xf32>
    %176 = vector.multi_reduction <maximumf>, %175, %cst_110 [1] : vector<8x8xf32> to vector<8xf32>
    %177 = vector.shape_cast %176 : vector<8xf32> to vector<8x1xf32>
    %178 = vector.broadcast %177 : vector<8x1xf32> to vector<8x8xf32>
    %179 = arith.subf %175, %178 : vector<8x8xf32>
    %180 = math.exp %179 : vector<8x8xf32>
    %cst_111 = arith.constant dense<0.000000e+00> : vector<8xf32>
    %181 = vector.multi_reduction <add>, %180, %cst_111 [1] : vector<8x8xf32> to vector<8xf32>
    %182 = vector.shape_cast %181 : vector<8xf32> to vector<8x1xf32>
    %183 = tpu.reciprocal %182 {approx = true} : vector<8x1xf32> -> vector<8x1xf32>
    %184 = vector.broadcast %183 : vector<8x1xf32> to vector<8x8xf32>
    %185 = arith.mulf %180, %184 : vector<8x8xf32>
    %cst_112 = arith.constant dense<0.000000e+00> : vector<8x4xf32>
    %186 = tpu.matmul %185, %172, %cst_112 {dimension_numbers = #tpu.dot_dimension_numbers<[1], [0], [0], [1], [0, 0, 1, 1], [], []>} : vector<8x8xf32>, vector<8x4xf32>, vector<8x4xf32> -> vector<8x4xf32>
    %c8_113 = arith.constant 8 : index
    %c4_114 = arith.constant 4 : index
    %187 = vector.load %arg8[%c8_113, %c4_114] : memref<16x32xf32, #tpu.memory_space<vmem>>, vector<8x4xf32>
    tpu.vector_store %arg8[%c8_113, %c4_114], %186 {strides = array<i32>} : memref<16x32xf32, #tpu.memory_space<vmem>>, vector<8x4xf32>,
    %c8_115 = arith.constant 8 : index
    %c8_116 = arith.constant 8 : index
    %188 = vector.load %arg7[%c8_115, %c8_116] : memref<16x96xf32, #tpu.memory_space<vmem>>, vector<8x4xf32>
    %c8_117 = arith.constant 8 : index
    %c40_118 = arith.constant 40 : index
    %189 = vector.load %arg7[%c8_117, %c40_118] : memref<16x96xf32, #tpu.memory_space<vmem>>, vector<8x4xf32>
    %c8_119 = arith.constant 8 : index
    %c72_120 = arith.constant 72 : index
    %190 = vector.load %arg7[%c8_119, %c72_120] : memref<16x96xf32, #tpu.memory_space<vmem>>, vector<8x4xf32>
    %cst_121 = arith.constant dense<0.000000e+00> : vector<8x8xf32>
    %191 = tpu.matmul %188, %189, %cst_121 {dimension_numbers = #tpu.dot_dimension_numbers<[1], [1], [0], [0], [0, 0, 1, 0], [], []>} : vector<8x4xf32>, vector<8x4xf32>, vector<8x8xf32> -> vector<8x8xf32>
    %cst_122 = arith.constant 5.000000e-01 : f32
    %192 = vector.broadcast %cst_122 : f32 to vector<8x8xf32>
    %193 = arith.addf %191, %192 : vector<8x8xf32>
    %cst_123 = arith.constant dense<0xFF800000> : vector<8xf32>
    %194 = vector.multi_reduction <maximumf>, %193, %cst_123 [1] : vector<8x8xf32> to vector<8xf32>
    %195 = vector.shape_cast %194 : vector<8xf32> to vector<8x1xf32>
    %196 = vector.broadcast %195 : vector<8x1xf32> to vector<8x8xf32>
    %197 = arith.subf %193, %196 : vector<8x8xf32>
    %198 = math.exp %197 : vector<8x8xf32>
    %cst_124 = arith.constant dense<0.000000e+00> : vector<8xf32>
    %199 = vector.multi_reduction <add>, %198, %cst_124 [1] : vector<8x8xf32> to vector<8xf32>
    %200 = vector.shape_cast %199 : vector<8xf32> to vector<8x1xf32>
    %201 = tpu.reciprocal %200 {approx = true} : vector<8x1xf32> -> vector<8x1xf32>
    %202 = vector.broadcast %201 : vector<8x1xf32> to vector<8x8xf32>
    %203 = arith.mulf %198, %202 : vector<8x8xf32>
    %cst_125 = arith.constant dense<0.000000e+00> : vector<8x4xf32>
    %204 = tpu.matmul %203, %190, %cst_125 {dimension_numbers = #tpu.dot_dimension_numbers<[1], [0], [0], [1], [0, 0, 1, 1], [], []>} : vector<8x8xf32>, vector<8x4xf32>, vector<8x4xf32> -> vector<8x4xf32>
    %c8_126 = arith.constant 8 : index
    %c8_127 = arith.constant 8 : index
    %205 = vector.load %arg8[%c8_126, %c8_127] : memref<16x32xf32, #tpu.memory_space<vmem>>, vector<8x4xf32>
    tpu.vector_store %arg8[%c8_126, %c8_127], %204 {strides = array<i32>} : memref<16x32xf32, #tpu.memory_space<vmem>>, vector<8x4xf32>,
    %c8_128 = arith.constant 8 : index
    %c12_129 = arith.constant 12 : index
    %206 = vector.load %arg7[%c8_128, %c12_129] : memref<16x96xf32, #tpu.memory_space<vmem>>, vector<8x4xf32>
    %c8_130 = arith.constant 8 : index
    %c44_131 = arith.constant 44 : index
    %207 = vector.load %arg7[%c8_130, %c44_131] : memref<16x96xf32, #tpu.memory_space<vmem>>, vector<8x4xf32>
    %c8_132 = arith.constant 8 : index
    %c76_133 = arith.constant 76 : index
    %208 = vector.load %arg7[%c8_132, %c76_133] : memref<16x96xf32, #tpu.memory_space<vmem>>, vector<8x4xf32>
    %cst_134 = arith.constant dense<0.000000e+00> : vector<8x8xf32>
    %209 = tpu.matmul %206, %207, %cst_134 {dimension_numbers = #tpu.dot_dimension_numbers<[1], [1], [0], [0], [0, 0, 1, 0], [], []>} : vector<8x4xf32>, vector<8x4xf32>, vector<8x8xf32> -> vector<8x8xf32>
    %cst_135 = arith.constant 5.000000e-01 : f32
    %210 = vector.broadcast %cst_135 : f32 to vector<8x8xf32>
    %211 = arith.addf %209, %210 : vector<8x8xf32>
    %cst_136 = arith.constant dense<0xFF800000> : vector<8xf32>
    %212 = vector.multi_reduction <maximumf>, %211, %cst_136 [1] : vector<8x8xf32> to vector<8xf32>
    %213 = vector.shape_cast %212 : vector<8xf32> to vector<8x1xf32>
    %214 = vector.broadcast %213 : vector<8x1xf32> to vector<8x8xf32>
    %215 = arith.subf %211, %214 : vector<8x8xf32>
    %216 = math.exp %215 : vector<8x8xf32>
    %cst_137 = arith.constant dense<0.000000e+00> : vector<8xf32>
    %217 = vector.multi_reduction <add>, %216, %cst_137 [1] : vector<8x8xf32> to vector<8xf32>
    %218 = vector.shape_cast %217 : vector<8xf32> to vector<8x1xf32>
    %219 = tpu.reciprocal %218 {approx = true} : vector<8x1xf32> -> vector<8x1xf32>
    %220 = vector.broadcast %219 : vector<8x1xf32> to vector<8x8xf32>
    %221 = arith.mulf %216, %220 : vector<8x8xf32>
    %cst_138 = arith.constant dense<0.000000e+00> : vector<8x4xf32>
    %222 = tpu.matmul %221, %208, %cst_138 {dimension_numbers = #tpu.dot_dimension_numbers<[1], [0], [0], [1], [0, 0, 1, 1], [], []>} : vector<8x8xf32>, vector<8x4xf32>, vector<8x4xf32> -> vector<8x4xf32>
    %c8_139 = arith.constant 8 : index
    %c12_140 = arith.constant 12 : index
    %223 = vector.load %arg8[%c8_139, %c12_140] : memref<16x32xf32, #tpu.memory_space<vmem>>, vector<8x4xf32>
    tpu.vector_store %arg8[%c8_139, %c12_140], %222 {strides = array<i32>} : memref<16x32xf32, #tpu.memory_space<vmem>>, vector<8x4xf32>,
    %c8_141 = arith.constant 8 : index
    %c16_142 = arith.constant 16 : index
    %224 = vector.load %arg7[%c8_141, %c16_142] : memref<16x96xf32, #tpu.memory_space<vmem>>, vector<8x4xf32>
    %c8_143 = arith.constant 8 : index
    %c48_144 = arith.constant 48 : index
    %225 = vector.load %arg7[%c8_143, %c48_144] : memref<16x96xf32, #tpu.memory_space<vmem>>, vector<8x4xf32>
    %c8_145 = arith.constant 8 : index
    %c80_146 = arith.constant 80 : index
    %226 = vector.load %arg7[%c8_145, %c80_146] : memref<16x96xf32, #tpu.memory_space<vmem>>, vector<8x4xf32>
    %cst_147 = arith.constant dense<0.000000e+00> : vector<8x8xf32>
    %227 = tpu.matmul %224, %225, %cst_147 {dimension_numbers = #tpu.dot_dimension_numbers<[1], [1], [0], [0], [0, 0, 1, 0], [], []>} : vector<8x4xf32>, vector<8x4xf32>, vector<8x8xf32> -> vector<8x8xf32>
    %cst_148 = arith.constant 5.000000e-01 : f32
    %228 = vector.broadcast %cst_148 : f32 to vector<8x8xf32>
    %229 = arith.addf %227, %228 : vector<8x8xf32>
    %cst_149 = arith.constant dense<0xFF800000> : vector<8xf32>
    %230 = vector.multi_reduction <maximumf>, %229, %cst_149 [1] : vector<8x8xf32> to vector<8xf32>
    %231 = vector.shape_cast %230 : vector<8xf32> to vector<8x1xf32>
    %232 = vector.broadcast %231 : vector<8x1xf32> to vector<8x8xf32>
    %233 = arith.subf %229, %232 : vector<8x8xf32>
    %234 = math.exp %233 : vector<8x8xf32>
    %cst_150 = arith.constant dense<0.000000e+00> : vector<8xf32>
    %235 = vector.multi_reduction <add>, %234, %cst_150 [1] : vector<8x8xf32> to vector<8xf32>
    %236 = vector.shape_cast %235 : vector<8xf32> to vector<8x1xf32>
    %237 = tpu.reciprocal %236 {approx = true} : vector<8x1xf32> -> vector<8x1xf32>
    %238 = vector.broadcast %237 : vector<8x1xf32> to vector<8x8xf32>
    %239 = arith.mulf %234, %238 : vector<8x8xf32>
    %cst_151 = arith.constant dense<0.000000e+00> : vector<8x4xf32>
    %240 = tpu.matmul %239, %226, %cst_151 {dimension_numbers = #tpu.dot_dimension_numbers<[1], [0], [0], [1], [0, 0, 1, 1], [], []>} : vector<8x8xf32>, vector<8x4xf32>, vector<8x4xf32> -> vector<8x4xf32>
    %c8_152 = arith.constant 8 : index
    %c16_153 = arith.constant 16 : index
    %241 = vector.load %arg8[%c8_152, %c16_153] : memref<16x32xf32, #tpu.memory_space<vmem>>, vector<8x4xf32>
    tpu.vector_store %arg8[%c8_152, %c16_153], %240 {strides = array<i32>} : memref<16x32xf32, #tpu.memory_space<vmem>>, vector<8x4xf32>,
    %c8_154 = arith.constant 8 : index
    %c20_155 = arith.constant 20 : index
    %242 = vector.load %arg7[%c8_154, %c20_155] : memref<16x96xf32, #tpu.memory_space<vmem>>, vector<8x4xf32>
    %c8_156 = arith.constant 8 : index
    %c52_157 = arith.constant 52 : index
    %243 = vector.load %arg7[%c8_156, %c52_157] : memref<16x96xf32, #tpu.memory_space<vmem>>, vector<8x4xf32>
    %c8_158 = arith.constant 8 : index
    %c84_159 = arith.constant 84 : index
    %244 = vector.load %arg7[%c8_158, %c84_159] : memref<16x96xf32, #tpu.memory_space<vmem>>, vector<8x4xf32>
    %cst_160 = arith.constant dense<0.000000e+00> : vector<8x8xf32>
    %245 = tpu.matmul %242, %243, %cst_160 {dimension_numbers = #tpu.dot_dimension_numbers<[1], [1], [0], [0], [0, 0, 1, 0], [], []>} : vector<8x4xf32>, vector<8x4xf32>, vector<8x8xf32> -> vector<8x8xf32>
    %cst_161 = arith.constant 5.000000e-01 : f32
    %246 = vector.broadcast %cst_161 : f32 to vector<8x8xf32>
    %247 = arith.addf %245, %246 : vector<8x8xf32>
    %cst_162 = arith.constant dense<0xFF800000> : vector<8xf32>
    %248 = vector.multi_reduction <maximumf>, %247, %cst_162 [1] : vector<8x8xf32> to vector<8xf32>
    %249 = vector.shape_cast %248 : vector<8xf32> to vector<8x1xf32>
    %250 = vector.broadcast %249 : vector<8x1xf32> to vector<8x8xf32>
    %251 = arith.subf %247, %250 : vector<8x8xf32>
    %252 = math.exp %251 : vector<8x8xf32>
    %cst_163 = arith.constant dense<0.000000e+00> : vector<8xf32>
    %253 = vector.multi_reduction <add>, %252, %cst_163 [1] : vector<8x8xf32> to vector<8xf32>
    %254 = vector.shape_cast %253 : vector<8xf32> to vector<8x1xf32>
    %255 = tpu.reciprocal %254 {approx = true} : vector<8x1xf32> -> vector<8x1xf32>
    %256 = vector.broadcast %255 : vector<8x1xf32> to vector<8x8xf32>
    %257 = arith.mulf %252, %256 : vector<8x8xf32>
    %cst_164 = arith.constant dense<0.000000e+00> : vector<8x4xf32>
    %258 = tpu.matmul %257, %244, %cst_164 {dimension_numbers = #tpu.dot_dimension_numbers<[1], [0], [0], [1], [0, 0, 1, 1], [], []>} : vector<8x8xf32>, vector<8x4xf32>, vector<8x4xf32> -> vector<8x4xf32>
    %c8_165 = arith.constant 8 : index
    %c20_166 = arith.constant 20 : index
    %259 = vector.load %arg8[%c8_165, %c20_166] : memref<16x32xf32, #tpu.memory_space<vmem>>, vector<8x4xf32>
    tpu.vector_store %arg8[%c8_165, %c20_166], %258 {strides = array<i32>} : memref<16x32xf32, #tpu.memory_space<vmem>>, vector<8x4xf32>,
    %c8_167 = arith.constant 8 : index
    %c24_168 = arith.constant 24 : index
    %260 = vector.load %arg7[%c8_167, %c24_168] : memref<16x96xf32, #tpu.memory_space<vmem>>, vector<8x4xf32>
    %c8_169 = arith.constant 8 : index
    %c56_170 = arith.constant 56 : index
    %261 = vector.load %arg7[%c8_169, %c56_170] : memref<16x96xf32, #tpu.memory_space<vmem>>, vector<8x4xf32>
    %c8_171 = arith.constant 8 : index
    %c88_172 = arith.constant 88 : index
    %262 = vector.load %arg7[%c8_171, %c88_172] : memref<16x96xf32, #tpu.memory_space<vmem>>, vector<8x4xf32>
    %cst_173 = arith.constant dense<0.000000e+00> : vector<8x8xf32>
    %263 = tpu.matmul %260, %261, %cst_173 {dimension_numbers = #tpu.dot_dimension_numbers<[1], [1], [0], [0], [0, 0, 1, 0], [], []>} : vector<8x4xf32>, vector<8x4xf32>, vector<8x8xf32> -> vector<8x8xf32>
    %cst_174 = arith.constant 5.000000e-01 : f32
    %264 = vector.broadcast %cst_174 : f32 to vector<8x8xf32>
    %265 = arith.addf %263, %264 : vector<8x8xf32>
    %cst_175 = arith.constant dense<0xFF800000> : vector<8xf32>
    %266 = vector.multi_reduction <maximumf>, %265, %cst_175 [1] : vector<8x8xf32> to vector<8xf32>
    %267 = vector.shape_cast %266 : vector<8xf32> to vector<8x1xf32>
    %268 = vector.broadcast %267 : vector<8x1xf32> to vector<8x8xf32>
    %269 = arith.subf %265, %268 : vector<8x8xf32>
    %270 = math.exp %269 : vector<8x8xf32>
    %cst_176 = arith.constant dense<0.000000e+00> : vector<8xf32>
    %271 = vector.multi_reduction <add>, %270, %cst_176 [1] : vector<8x8xf32> to vector<8xf32>
    %272 = vector.shape_cast %271 : vector<8xf32> to vector<8x1xf32>
    %273 = tpu.reciprocal %272 {approx = true} : vector<8x1xf32> -> vector<8x1xf32>
    %274 = vector.broadcast %273 : vector<8x1xf32> to vector<8x8xf32>
    %275 = arith.mulf %270, %274 : vector<8x8xf32>
    %cst_177 = arith.constant dense<0.000000e+00> : vector<8x4xf32>
    %276 = tpu.matmul %275, %262, %cst_177 {dimension_numbers = #tpu.dot_dimension_numbers<[1], [0], [0], [1], [0, 0, 1, 1], [], []>} : vector<8x8xf32>, vector<8x4xf32>, vector<8x4xf32> -> vector<8x4xf32>
    %c8_178 = arith.constant 8 : index
    %c24_179 = arith.constant 24 : index
    %277 = vector.load %arg8[%c8_178, %c24_179] : memref<16x32xf32, #tpu.memory_space<vmem>>, vector<8x4xf32>
    tpu.vector_store %arg8[%c8_178, %c24_179], %276 {strides = array<i32>} : memref<16x32xf32, #tpu.memory_space<vmem>>, vector<8x4xf32>,
    %c8_180 = arith.constant 8 : index
    %c28_181 = arith.constant 28 : index
    %278 = vector.load %arg7[%c8_180, %c28_181] : memref<16x96xf32, #tpu.memory_space<vmem>>, vector<8x4xf32>
    %c8_182 = arith.constant 8 : index
    %c60_183 = arith.constant 60 : index
    %279 = vector.load %arg7[%c8_182, %c60_183] : memref<16x96xf32, #tpu.memory_space<vmem>>, vector<8x4xf32>
    %c8_184 = arith.constant 8 : index
    %c92_185 = arith.constant 92 : index
    %280 = vector.load %arg7[%c8_184, %c92_185] : memref<16x96xf32, #tpu.memory_space<vmem>>, vector<8x4xf32>
    %cst_186 = arith.constant dense<0.000000e+00> : vector<8x8xf32>
    %281 = tpu.matmul %278, %279, %cst_186 {dimension_numbers = #tpu.dot_dimension_numbers<[1], [1], [0], [0], [0, 0, 1, 0], [], []>} : vector<8x4xf32>, vector<8x4xf32>, vector<8x8xf32> -> vector<8x8xf32>
    %cst_187 = arith.constant 5.000000e-01 : f32
    %282 = vector.broadcast %cst_187 : f32 to vector<8x8xf32>
    %283 = arith.addf %281, %282 : vector<8x8xf32>
    %cst_188 = arith.constant dense<0xFF800000> : vector<8xf32>
    %284 = vector.multi_reduction <maximumf>, %283, %cst_188 [1] : vector<8x8xf32> to vector<8xf32>
    %285 = vector.shape_cast %284 : vector<8xf32> to vector<8x1xf32>
    %286 = vector.broadcast %285 : vector<8x1xf32> to vector<8x8xf32>
    %287 = arith.subf %283, %286 : vector<8x8xf32>
    %288 = math.exp %287 : vector<8x8xf32>
    %cst_189 = arith.constant dense<0.000000e+00> : vector<8xf32>
    %289 = vector.multi_reduction <add>, %288, %cst_189 [1] : vector<8x8xf32> to vector<8xf32>
    %290 = vector.shape_cast %289 : vector<8xf32> to vector<8x1xf32>
    %291 = tpu.reciprocal %290 {approx = true} : vector<8x1xf32> -> vector<8x1xf32>
    %292 = vector.broadcast %291 : vector<8x1xf32> to vector<8x8xf32>
    %293 = arith.mulf %288, %292 : vector<8x8xf32>
    %cst_190 = arith.constant dense<0.000000e+00> : vector<8x4xf32>
    %294 = tpu.matmul %293, %280, %cst_190 {dimension_numbers = #tpu.dot_dimension_numbers<[1], [0], [0], [1], [0, 0, 1, 1], [], []>} : vector<8x8xf32>, vector<8x4xf32>, vector<8x4xf32> -> vector<8x4xf32>
    %c8_191 = arith.constant 8 : index
    %c28_192 = arith.constant 28 : index
    %295 = vector.load %arg8[%c8_191, %c28_192] : memref<16x32xf32, #tpu.memory_space<vmem>>, vector<8x4xf32>
    tpu.vector_store %arg8[%c8_191, %c28_192], %294 {strides = array<i32>} : memref<16x32xf32, #tpu.memory_space<vmem>>, vector<8x4xf32>,
    %c0_193 = arith.constant 0 : index
    %c0_194 = arith.constant 0 : index
    %296 = vector.load %arg8[%c0_193, %c0_194] : memref<16x32xf32, #tpu.memory_space<vmem>>, vector<16x32xf32>
    %c0_195 = arith.constant 0 : index
    %c0_196 = arith.constant 0 : index
    %297 = vector.load %arg4[%c0_195, %c0_196] : memref<32x32xf32, #tpu.memory_space<vmem>>, vector<32x32xf32>
    %cst_197 = arith.constant dense<0.000000e+00> : vector<16x32xf32>
    %298 = tpu.matmul %296, %297, %cst_197 {dimension_numbers = #tpu.dot_dimension_numbers<[1], [0], [0], [1], [0, 0, 1, 1], [], []>} : vector<16x32xf32>, vector<32x32xf32>, vector<16x32xf32> -> vector<16x32xf32>
    %c0_198 = arith.constant 0 : index
    %c0_199 = arith.constant 0 : index
    %299 = vector.load %arg5[%c0_198, %c0_199] : memref<1x32xf32, #tpu.memory_space<vmem>>, vector<1x32xf32>
    %300 = vector.broadcast %299 : vector<1x32xf32> to vector<16x32xf32>
    %301 = arith.addf %298, %300 : vector<16x32xf32>
    %302 = vector.shape_cast %301 : vector<16x32xf32> to vector<2x8x32xf32>
    %c0_200 = arith.constant 0 : index
    %c0_201 = arith.constant 0 : index
    %c0_202 = arith.constant 0 : index
    %303 = vector.load %arg6[%c0_200, %c0_201, %c0_202] : memref<2x8x32xf32, #tpu.memory_space<vmem>>, vector<2x8x32xf32>
    tpu.vector_store %arg6[%c0_200, %c0_201, %c0_202], %302 {strides = array<i32>} : memref<2x8x32xf32, #tpu.memory_space<vmem>>, vector<2x8x32xf32>,
    return
  }
  func.func @transform_0(%arg0: i32) -> (i32, i32, i32) {
    %c0_i32 = arith.constant 0 : i32
    %c0_i32_0 = arith.constant 0 : i32
    %c0_i32_1 = arith.constant 0 : i32
    return %arg0, %c0_i32, %c0_i32_0 : i32, i32, i32
  }
  func.func @transform_1(%arg0: i32) -> (i32, i32) {
    %c0_i32 = arith.constant 0 : i32
    %c0_i32_0 = arith.constant 0 : i32
    %c0_i32_1 = arith.constant 0 : i32
    return %c0_i32, %c0_i32_0 : i32, i32
  }
  func.func @transform_2(%arg0: i32) -> (i32, i32) {
    %c0_i32 = arith.constant 0 : i32
    %c0_i32_0 = arith.constant 0 : i32
    %c0_i32_1 = arith.constant 0 : i32
    return %c0_i32, %c0_i32_0 : i32, i32
  }
  func.func @transform_3(%arg0: i32) -> (i32, i32) {
    %c0_i32 = arith.constant 0 : i32
    %c0_i32_0 = arith.constant 0 : i32
    %c0_i32_1 = arith.constant 0 : i32
    return %c0_i32, %c0_i32_0 : i32, i32
  }
  func.func @transform_4(%arg0: i32) -> (i32, i32) {
    %c0_i32 = arith.constant 0 : i32
    %c0_i32_0 = arith.constant 0 : i32
    %c0_i32_1 = arith.constant 0 : i32
    return %c0_i32, %c0_i32_0 : i32, i32
  }
  func.func @transform_5(%arg0: i32) -> (i32, i32, i32) {
    %c0_i32 = arith.constant 0 : i32
    %c0_i32_0 = arith.constant 0 : i32
    %c0_i32_1 = arith.constant 0 : i32
    return %arg0, %c0_i32, %c0_i32_0 : i32, i32, i32
  }
}

</mosaic_0001>

<llo_original>
// kernel: tpu_custom_call.1
$region0: #{tpu_custom_call.1}
  #allocation0 [shape = 'u32[]', space=smem, size = 0x4, offset = 0x4, fixed_abs, tag = 'smem constant byte address 0x4 - core index']
  #allocation1 [shape = 'u32[144,128]{1,0:T(1,128)}', space=vmem, size = 0x12000, scoped, tag = 'internal scratch']
  #allocation2 [shape = 'f32[16,96]{1,0:T(8,128)}', space=vmem, size = 0x2000, scoped, tag = 'scratch operand']
  #allocation3 [shape = 'f32[16,32]{1,0:T(8,128)}', space=vmem, size = 0x2000, scoped, tag = 'scratch operand']
  %s0 = inlined_call_operand.hbm [shape: f32[2,8,32], index: 0, kind: input, shape index: {}]
  %s1 = inlined_call_operand.hbm [shape: f32[32,96], index: 1, kind: input, shape index: {}]
  %s2 = inlined_call_operand.vmem [shape: f32[1,96], index: 2, kind: input, shape index: {}]
  %s3 = inlined_call_operand.hbm [shape: f32[32,32], index: 3, kind: input, shape index: {}]
  %s4 = inlined_call_operand.vmem [shape: f32[1,32], index: 4, kind: input, shape index: {}]
  %s5 = inlined_call_operand.hbm [shape: f32[2,8,32], index: 5, kind: output, shape index: {}]
  %s6 = sld [smem:[#allocation0]]
  $region42: #{tpu_custom_call.1} parent=0
    _
  %s8 = ssub.s32 1, %s6
  %s9 = scalar_select 0, %s8, %s6
  $region1: #{tpu_custom_call.1} parent=0
    #allocation4 [shape = 'u8[8192]{0}', space=vmem, size = 0x2000, scoped, tag = 'input window, operand 0, single buffered']
    #allocation5 [shape = 's32[1]{0}', space=sflag, size = 0x4, scoped, tag = 'scoped memory for tpu_custom_call.1']
    #allocation6 [shape = 's32[1]{0}', space=sflag, size = 0x4, scoped, tag = 'scoped memory for tpu_custom_call.1']
    #allocation7 [shape = 'u8[16384]{0}', space=vmem, size = 0x4000, scoped, tag = 'input window, operand 1, single buffered']
    #allocation8 [shape = 's32[1]{0}', space=sflag, size = 0x4, scoped, tag = 'scoped memory for tpu_custom_call.1']
    #allocation9 [shape = 'u8[16384]{0}', space=vmem, size = 0x4000, scoped, tag = 'input window, operand 3, single buffered']
    #allocation10 [shape = 'u8[8192]{0}', space=vmem, size = 0x2000, scoped, tag = 'output window, operand 0, single buffered']
    %10 = vsyncpa [#allocation5], 0
    %11 = vsyncpa [#allocation8], 0
    %12 = vsyncpa [#allocation6], 0
    // Predicated region
    $region2: #{tpu_custom_call.1} parent=1 // pred_check
      _
    $region3: #{tpu_custom_call.1} parent=1 // pred_check_branch
      %14 = sbr.rel (0) target = $region5
    $region4: #{tpu_custom_call.1} parent=1 // pred_region
      %s16 = ssub.s32 256, 256
      %17 = vsyncadd [#allocation5], %s16
      %s18 = sshll.u32 [#allocation4], 4
      %s19 = int_to_ptr.vmem [resolvable:$true] %s18
      %24 = dma.hbm_to_vmem [thread:$0]  %s0, 256, %s19, [#allocation5], 128, 128, 8
    $region5: #{tpu_custom_call.1} parent=1 // pred_fallthru
      _
    // Predicated region
    $region6: #{tpu_custom_call.1} parent=1 // pred_check
      _
    $region7: #{tpu_custom_call.1} parent=1 // pred_check_branch
      %26 = sbr.rel (0) target = $region9
    $region8: #{tpu_custom_call.1} parent=1 // pred_region
      %s28 = ssub.s32 512, 512
      %29 = vsyncadd [#allocation8], %s28
      %s30 = sshll.u32 [#allocation7], 4
      %s31 = int_to_ptr.vmem [resolvable:$true] %s30
      %36 = dma.hbm_to_vmem [thread:$0]  %s1, 512, %s31, [#allocation8], 128, 128, 8
    $region9: #{tpu_custom_call.1} parent=1 // pred_fallthru
      _
    // Predicated region
    $region10: #{tpu_custom_call.1} parent=1 // pred_check
      _
    $region11: #{tpu_custom_call.1} parent=1 // pred_check_branch
      %38 = sbr.rel (0) target = $region13
    $region12: #{tpu_custom_call.1} parent=1 // pred_region
      _
    $region13: #{tpu_custom_call.1} parent=1 // pred_fallthru
      _
    // Predicated region
    $region14: #{tpu_custom_call.1} parent=1 // pred_check
      _
    $region15: #{tpu_custom_call.1} parent=1 // pred_check_branch
      %40 = sbr.rel (0) target = $region17
    $region16: #{tpu_custom_call.1} parent=1 // pred_region
      %s42 = ssub.s32 512, 512
      %43 = vsyncadd [#allocation8], %s42
      %s44 = sshll.u32 [#allocation9], 4
      %s45 = int_to_ptr.vmem [resolvable:$true] %s44
      %50 = dma.hbm_to_vmem [thread:$0]  %s3, 512, %s45, [#allocation8], 128, 128, 8
    $region17: #{tpu_custom_call.1} parent=1 // pred_fallthru
      _
    // Predicated region
    $region18: #{tpu_custom_call.1} parent=1 // pred_check
      _
    $region19: #{tpu_custom_call.1} parent=1 // pred_check_branch
      %52 = sbr.rel (0) target = $region21
    $region20: #{tpu_custom_call.1} parent=1 // pred_region
      _
    $region21: #{tpu_custom_call.1} parent=1 // pred_fallthru
      _
    // Predicated region
    $region22: #{tpu_custom_call.1} parent=1 // pred_check
      _
    $region23: #{tpu_custom_call.1} parent=1 // pred_check_branch
      %54 = sbr.rel (0) target = $region25
    $region24: #{tpu_custom_call.1} parent=1 // pred_region
      %55 = dma.done [#allocation5], 256
    $region25: #{tpu_custom_call.1} parent=1 // pred_fallthru
      _
    // Predicated region
    $region26: #{tpu_custom_call.1} parent=1 // pred_check
      _
    $region27: #{tpu_custom_call.1} parent=1 // pred_check_branch
      %57 = sbr.rel (0) target = $region29
    $region28: #{tpu_custom_call.1} parent=1 // pred_region
      %58 = dma.done [#allocation8], 512
    $region29: #{tpu_custom_call.1} parent=1 // pred_fallthru
      _
    // Predicated region
    $region30: #{tpu_custom_call.1} parent=1 // pred_check
      _
    $region31: #{tpu_custom_call.1} parent=1 // pred_check_branch
      %60 = sbr.rel (0) target = $region33
    $region32: #{tpu_custom_call.1} parent=1 // pred_region
      %61 = dma.done [#allocation8], 512
    $region33: #{tpu_custom_call.1} parent=1 // pred_fallthru
      _
    %v62 = vld [vmem:[#allocation4] sm:$0xff]
    %v63 = vld [vmem:[#allocation4 + $0x8] sm:$0xff]
    %v64 = vld [vmem:[#allocation7] sm:$0xff]
    %v65 = vld [vmem:[#allocation7 + $0x8] sm:$0xff]
    %v66 = vld [vmem:[#allocation7 + $0x10] sm:$0xff]
    %v67 = vld [vmem:[#allocation7 + $0x18] sm:$0xff]
    %v68 = vld [vmem:[%s2] sm:$0x1]
    %v70 = vlaneseq
    %v71 = vshrl.u32 %v70, 7
    %v72 = vsub.s32 0, %v71
    %v73 = vrot.slane %v68, %v72
    %vm75 = vcmask 261120
    %v77 = vsel %vm75, %v62, 0
    %v80 = vsel %vm75, %v63, 0
    %82 = vmatprep.subr.mxu0 0.0
    %83 = vmatpush1.msra.mxu0 %v64
    %84 = vmatprep.subr.mxu0 0.0
    %85 = vmatpush1.msra.mxu0 %v65
    %86 = vmatprep.subr.mxu0 0.0
    %87 = vmatpush1.msra.mxu0 %v66
    %88 = vmatprep.subr.mxu0 0.0
    %89 = vmatpush1.msra.mxu0 %v67
    %90 = vmatprep.subr.mxu0 0.0
    %91 = vmatpush1.msra.mxu0 0.0
    %92 = vmatprep.subr.mxu0 0.0
    %93 = vmatpush1.msra.mxu0 0.0
    %94 = vmatprep.subr.mxu0 0.0
    %95 = vmatpush1.msra.mxu0 0.0
    %96 = vmatprep.subr.mxu0 0.0
    %97 = vmatpush1.msra.mxu0 0.0
    %98 = vmatprep.subr.mxu0 0.0
    %99 = vmatpush1.msra.mxu0 0.0
    %100 = vmatprep.subr.mxu0 0.0
    %101 = vmatpush1.msra.mxu0 0.0
    %102 = vmatprep.subr.mxu0 0.0
    %103 = vmatpush1.msra.mxu0 0.0
    %104 = vmatprep.subr.mxu0 0.0
    %105 = vmatpush1.msra.mxu0 0.0
    %106 = vmatprep.subr.mxu0 0.0
    %107 = vmatpush1.msra.mxu0 0.0
    %108 = vmatprep.subr.mxu0 0.0
    %109 = vmatpush1.msra.mxu0 0.0
    %110 = vmatprep.subr.mxu0 0.0
    %111 = vmatpush1.msra.mxu0 0.0
    %112 = vmatprep.subr.mxu0 0.0
    %113 = vmatpush1.msra.mxu0 0.0
    %114 = vmatprep.subr.mxu0 0.0
    %115 = vmatpush1.msra.mxu0 0.0
    %116 = vmatprep.subr.mxu0 0.0
    %117 = vmatpush1.msra.mxu0 0.0
    %118 = vmatprep.subr.mxu0 0.0
    %119 = vmatpush1.msra.mxu0 0.0
    %120 = vmatprep.subr.mxu0 0.0
    %121 = vmatpush1.msra.mxu0 0.0
    %122 = vmatprep.subr.mxu0 0.0
    %123 = vmatpush1.msra.mxu0 0.0
    %124 = vmatprep.subr.mxu0 0.0
    %125 = vmatpush1.msra.mxu0 0.0
    %126 = vmatprep.subr.mxu0 0.0
    %127 = vmatpush1.msra.mxu0 0.0
    %128 = vmatprep.subr.mxu0 0.0
    %129 = vmatpush1.msra.mxu0 0.0
    %130 = vmatprep.subr.mxu0 0.0
    %131 = vmatpush1.msra.mxu0 0.0
    %132 = vmatprep.subr.mxu0 0.0
    %133 = vmatpush1.msra.mxu0 0.0
    %134 = vmatprep.subr.mxu0 0.0
    %135 = vmatpush1.msra.mxu0 0.0
    %136 = vmatprep.subr.mxu0 0.0
    %137 = vmatpush1.msra.mxu0 0.0
    %138 = vmatprep.subr.mxu0 0.0
    %139 = vmatpush1.msra.mxu0 0.0
    %140 = vmatprep.subr.mxu0 0.0
    %141 = vmatpush1.msra.mxu0 0.0
    %142 = vmatprep.subr.mxu0 0.0
    %143 = vmatpush1.msra.mxu0 0.0
    %144 = vmatprep.subr.mxu0 0.0
    %145 = vmatpush1.msra.mxu0 0.0
    %146 = vmatprep.mubr.f32.mxu0 0.0
    %147 = vmatmul.mubr.f32.gmra.mrb[0].mxu0 %v77
    %v148 = vpop.f32.mrb[0].mxu0
    %v149 = vadd.f32 %v73, %v148
    %v150 = vpop.f32.mrb[0].mxu0
    %151 = vmatprep.mubr.f32.mxu0 0.0
    %152 = vmatmul.mubr.f32.gmra.mrb[0].mxu0 %v80
    %v153 = vpop.f32.mrb[0].mxu0
    %v154 = vadd.f32 %v73, %v153
    %v155 = vpop.f32.mrb[0].mxu0
    %156 = vdwg.mxu0
    %vm157 = vcmask 785408
    %158 = vst.msk [vmem:[#allocation2] sm:$0xff] %vm157, %v149
    %159 = vst.msk [vmem:[#allocation2 + $0x8] sm:$0xff] %vm157, %v154
    %v160 = vld [vmem:[#allocation2] sm:$0xff]
    %162 = vrot.lane.b32.xlu0 %v160, 96
    %v163 = vpop.permute.xlu0 %162
    %vm164 = vcmask 31744
    %v165 = vsel %vm164, %v160, 0
    %v167 = vsel %vm164, %v163, 0
    %169 = vmatprep.subr.mxu0 0.0
    %170 = vmatpush1.xpose.msra.mxu0 %v167
    %171 = vmatprep.subr.mxu0 0.0
    %172 = vmatpush1.xpose.msra.mxu0 0.0
    %173 = vmatprep.subr.mxu0 0.0
    %174 = vmatpush1.xpose.msra.mxu0 0.0
    %175 = vmatprep.subr.mxu0 0.0
    %176 = vmatpush1.xpose.msra.mxu0 0.0
    %177 = vmatprep.subr.mxu0 0.0
    %178 = vmatpush1.xpose.msra.mxu0 0.0
    %179 = vmatprep.subr.mxu0 0.0
    %180 = vmatpush1.xpose.msra.mxu0 0.0
    %181 = vmatprep.subr.mxu0 0.0
    %182 = vmatpush1.xpose.msra.mxu0 0.0
    %183 = vmatprep.subr.mxu0 0.0
    %184 = vmatpush1.xpose.msra.mxu0 0.0
    %185 = vmatprep.subr.mxu0 0.0
    %186 = vmatpush1.xpose.msra.mxu0 0.0
    %187 = vmatprep.subr.mxu0 0.0
    %188 = vmatpush1.xpose.msra.mxu0 0.0
    %189 = vmatprep.subr.mxu0 0.0
    %190 = vmatpush1.xpose.msra.mxu0 0.0
    %191 = vmatprep.subr.mxu0 0.0
    %192 = vmatpush1.xpose.msra.mxu0 0.0
    %193 = vmatprep.subr.mxu0 0.0
    %194 = vmatpush1.xpose.msra.mxu0 0.0
    %195 = vmatprep.subr.mxu0 0.0
    %196 = vmatpush1.xpose.msra.mxu0 0.0
    %197 = vmatprep.subr.mxu0 0.0
    %198 = vmatpush1.xpose.msra.mxu0 0.0
    %199 = vmatprep.subr.mxu0 0.0
    %200 = vmatpush1.xpose.msra.mxu0 0.0
    %201 = vmatprep.subr.mxu0 0.0
    %202 = vmatpush1.xpose.msra.mxu0 0.0
    %203 = vmatprep.subr.mxu0 0.0
    %204 = vmatpush1.xpose.msra.mxu0 0.0
    %205 = vmatprep.subr.mxu0 0.0
    %206 = vmatpush1.xpose.msra.mxu0 0.0
    %207 = vmatprep.subr.mxu0 0.0
    %208 = vmatpush1.xpose.msra.mxu0 0.0
    %209 = vmatprep.subr.mxu0 0.0
    %210 = vmatpush1.xpose.msra.mxu0 0.0
    %211 = vmatprep.subr.mxu0 0.0
    %212 = vmatpush1.xpose.msra.mxu0 0.0
    %213 = vmatprep.subr.mxu0 0.0
    %214 = vmatpush1.xpose.msra.mxu0 0.0
    %215 = vmatprep.subr.mxu0 0.0
    %216 = vmatpush1.xpose.msra.mxu0 0.0
    %217 = vmatprep.subr.mxu0 0.0
    %218 = vmatpush1.xpose.msra.mxu0 0.0
    %219 = vmatprep.subr.mxu0 0.0
    %220 = vmatpush1.xpose.msra.mxu0 0.0
    %221 = vmatprep.subr.mxu0 0.0
    %222 = vmatpush1.xpose.msra.mxu0 0.0
    %223 = vmatprep.subr.mxu0 0.0
    %224 = vmatpush1.xpose.msra.mxu0 0.0
    %225 = vmatprep.subr.mxu0 0.0
    %226 = vmatpush1.xpose.msra.mxu0 0.0
    %227 = vmatprep.subr.mxu0 0.0
    %228 = vmatpush1.xpose.msra.mxu0 0.0
    %229 = vmatprep.subr.mxu0 0.0
    %230 = vmatpush1.xpose.msra.mxu0 0.0
    %231 = vmatprep.subr.mxu0 0.0
    %232 = vmatpush1.xpose.msra.mxu0 0.0
    %233 = vmatprep.mubr.f32.mxu0 0.0
    %234 = vmatmul.mubr.f32.gmra.mrb[0].mxu0 %v165
    %v235 = vpop.f32.mrb[0].mxu0
    %v236 = vadd.f32 0.5, %v235
    %v237 = vpop.f32.mrb[0].mxu0
    %238 = vdwg.mxu0
    %vm239 = vcmask 64512
    %v240 = vsel %vm239, %v236, -inf
    %241 = vmax.xlane.f32.xlu0 %v240
    %v242 = vpop.xlane.xlu0 %241
    %v243 = vsub.f32 %v236, %v242
    %v244 = vmul.f32 %v243, 1.442695
    %v245 = vpow.pop %v244
    %v246 = vsel %vm239, %v245, 0.0
    %247 = vadd.xlane.f32.xlu0 %v246
    %v248 = vpop.xlane.xlu0 %247
    %v249 = vrcp.pop %v248
    %v250 = vmul.f32 %v245, %v249
    %251 = vrot.lane.b32.xlu0 %v160, 64
    %v252 = vpop.permute.xlu0 %251
    %v255 = vsel %vm239, %v250, 0
    %257 = vmatprep.subr.mxu0 0.0
    %258 = vmatpush1.msra.mxu0 %v252
    %259 = vmatprep.subr.mxu0 0.0
    %260 = vmatpush1.msra.mxu0 0.0
    %261 = vmatprep.subr.mxu0 0.0
    %262 = vmatpush1.msra.mxu0 0.0
    %263 = vmatprep.subr.mxu0 0.0
    %264 = vmatpush1.msra.mxu0 0.0
    %265 = vmatprep.subr.mxu0 0.0
    %266 = vmatpush1.msra.mxu0 0.0
    %267 = vmatprep.subr.mxu0 0.0
    %268 = vmatpush1.msra.mxu0 0.0
    %269 = vmatprep.subr.mxu0 0.0
    %270 = vmatpush1.msra.mxu0 0.0
    %271 = vmatprep.subr.mxu0 0.0
    %272 = vmatpush1.msra.mxu0 0.0
    %273 = vmatprep.subr.mxu0 0.0
    %274 = vmatpush1.msra.mxu0 0.0
    %275 = vmatprep.subr.mxu0 0.0
    %276 = vmatpush1.msra.mxu0 0.0
    %277 = vmatprep.subr.mxu0 0.0
    %278 = vmatpush1.msra.mxu0 0.0
    %279 = vmatprep.subr.mxu0 0.0
    %280 = vmatpush1.msra.mxu0 0.0
    %281 = vmatprep.subr.mxu0 0.0
    %282 = vmatpush1.msra.mxu0 0.0
    %283 = vmatprep.subr.mxu0 0.0
    %284 = vmatpush1.msra.mxu0 0.0
    %285 = vmatprep.subr.mxu0 0.0
    %286 = vmatpush1.msra.mxu0 0.0
    %287 = vmatprep.subr.mxu0 0.0
    %288 = vmatpush1.msra.mxu0 0.0
    %289 = vmatprep.subr.mxu0 0.0
    %290 = vmatpush1.msra.mxu0 0.0
    %291 = vmatprep.subr.mxu0 0.0
    %292 = vmatpush1.msra.mxu0 0.0
    %293 = vmatprep.subr.mxu0 0.0
    %294 = vmatpush1.msra.mxu0 0.0
    %295 = vmatprep.subr.mxu0 0.0
    %296 = vmatpush1.msra.mxu0 0.0
    %297 = vmatprep.subr.mxu0 0.0
    %298 = vmatpush1.msra.mxu0 0.0
    %299 = vmatprep.subr.mxu0 0.0
    %300 = vmatpush1.msra.mxu0 0.0
    %301 = vmatprep.subr.mxu0 0.0
    %302 = vmatpush1.msra.mxu0 0.0
    %303 = vmatprep.subr.mxu0 0.0
    %304 = vmatpush1.msra.mxu0 0.0
    %305 = vmatprep.subr.mxu0 0.0
    %306 = vmatpush1.msra.mxu0 0.0
    %307 = vmatprep.subr.mxu0 0.0
    %308 = vmatpush1.msra.mxu0 0.0
    %309 = vmatprep.subr.mxu0 0.0
    %310 = vmatpush1.msra.mxu0 0.0
    %311 = vmatprep.subr.mxu0 0.0
    %312 = vmatpush1.msra.mxu0 0.0
    %313 = vmatprep.subr.mxu0 0.0
    %314 = vmatpush1.msra.mxu0 0.0
    %315 = vmatprep.subr.mxu0 0.0
    %316 = vmatpush1.msra.mxu0 0.0
    %317 = vmatprep.subr.mxu0 0.0
    %318 = vmatpush1.msra.mxu0 0.0
    %319 = vmatprep.subr.mxu0 0.0
    %320 = vmatpush1.msra.mxu0 0.0
    %321 = vmatprep.mubr.f32.mxu0 0.0
    %322 = vmatmul.mubr.f32.gmra.mrb[0].mxu0 %v255
    %v323 = vpop.f32.mrb[0].mxu0
    %v324 = vadd.f32 0.0, %v323
    %v325 = vpop.f32.mrb[0].mxu0
    %326 = vdwg.mxu0
    %327 = vst.msk [vmem:[#allocation3] sm:$0xff] %vm164, %v324
    %v328 = vld [vmem:[#allocation2] sm:$0xff]
    %330 = vrot.lane.b32.xlu0 %v328, 124
    %v331 = vpop.permute.xlu0 %330
    %332 = vrot.lane.b32.xlu0 %v328, 92
    %v333 = vpop.permute.xlu0 %332
    %v334 = vsel %vm164, %v331, 0
    %v336 = vsel %vm164, %v333, 0
    %338 = vmatprep.subr.mxu0 0.0
    %339 = vmatpush1.xpose.msra.mxu0 %v336
    %340 = vmatprep.subr.mxu0 0.0
    %341 = vmatpush1.xpose.msra.mxu0 0.0
    %342 = vmatprep.subr.mxu0 0.0
    %343 = vmatpush1.xpose.msra.mxu0 0.0
    %344 = vmatprep.subr.mxu0 0.0
    %345 = vmatpush1.xpose.msra.mxu0 0.0
    %346 = vmatprep.subr.mxu0 0.0
    %347 = vmatpush1.xpose.msra.mxu0 0.0
    %348 = vmatprep.subr.mxu0 0.0
    %349 = vmatpush1.xpose.msra.mxu0 0.0
    %350 = vmatprep.subr.mxu0 0.0
    %351 = vmatpush1.xpose.msra.mxu0 0.0
    %352 = vmatprep.subr.mxu0 0.0
    %353 = vmatpush1.xpose.msra.mxu0 0.0
    %354 = vmatprep.subr.mxu0 0.0
    %355 = vmatpush1.xpose.msra.mxu0 0.0
    %356 = vmatprep.subr.mxu0 0.0
    %357 = vmatpush1.xpose.msra.mxu0 0.0
    %358 = vmatprep.subr.mxu0 0.0
    %359 = vmatpush1.xpose.msra.mxu0 0.0
    %360 = vmatprep.subr.mxu0 0.0
    %361 = vmatpush1.xpose.msra.mxu0 0.0
    %362 = vmatprep.subr.mxu0 0.0
    %363 = vmatpush1.xpose.msra.mxu0 0.0
    %364 = vmatprep.subr.mxu0 0.0
    %365 = vmatpush1.xpose.msra.mxu0 0.0
    %366 = vmatprep.subr.mxu0 0.0
    %367 = vmatpush1.xpose.msra.mxu0 0.0
    %368 = vmatprep.subr.mxu0 0.0
    %369 = vmatpush1.xpose.msra.mxu0 0.0
    %370 = vmatprep.subr.mxu0 0.0
    %371 = vmatpush1.xpose.msra.mxu0 0.0
    %372 = vmatprep.subr.mxu0 0.0
    %373 = vmatpush1.xpose.msra.mxu0 0.0
    %374 = vmatprep.subr.mxu0 0.0
    %375 = vmatpush1.xpose.msra.mxu0 0.0
    %376 = vmatprep.subr.mxu0 0.0
    %377 = vmatpush1.xpose.msra.mxu0 0.0
    %378 = vmatprep.subr.mxu0 0.0
    %379 = vmatpush1.xpose.msra.mxu0 0.0
    %380 = vmatprep.subr.mxu0 0.0
    %381 = vmatpush1.xpose.msra.mxu0 0.0
    %382 = vmatprep.subr.mxu0 0.0
    %383 = vmatpush1.xpose.msra.mxu0 0.0
    %384 = vmatprep.subr.mxu0 0.0
    %385 = vmatpush1.xpose.msra.mxu0 0.0
    %386 = vmatprep.subr.mxu0 0.0
    %387 = vmatpush1.xpose.msra.mxu0 0.0
    %388 = vmatprep.subr.mxu0 0.0
    %389 = vmatpush1.xpose.msra.mxu0 0.0
    %390 = vmatprep.subr.mxu0 0.0
    %391 = vmatpush1.xpose.msra.mxu0 0.0
    %392 = vmatprep.subr.mxu0 0.0
    %393 = vmatpush1.xpose.msra.mxu0 0.0
    %394 = vmatprep.subr.mxu0 0.0
    %395 = vmatpush1.xpose.msra.mxu0 0.0
    %396 = vmatprep.subr.mxu0 0.0
    %397 = vmatpush1.xpose.msra.mxu0 0.0
    %398 = vmatprep.subr.mxu0 0.0
    %399 = vmatpush1.xpose.msra.mxu0 0.0
    %400 = vmatprep.subr.mxu0 0.0
    %401 = vmatpush1.xpose.msra.mxu0 0.0
    %402 = vmatprep.mubr.f32.mxu0 0.0
    %403 = vmatmul.mubr.f32.gmra.mrb[0].mxu0 %v334
    %v404 = vpop.f32.mrb[0].mxu0
    %v405 = vadd.f32 0.5, %v404
    %v406 = vpop.f32.mrb[0].mxu0
    %407 = vdwg.mxu0
    %v408 = vsel %vm239, %v405, -inf
    %409 = vmax.xlane.f32.xlu0 %v408
    %v410 = vpop.xlane.xlu0 %409
    %v411 = vsub.f32 %v405, %v410
    %v412 = vmul.f32 %v411, 1.442695
    %v413 = vpow.pop %v412
    %v414 = vsel %vm239, %v413, 0.0
    %415 = vadd.xlane.f32.xlu0 %v414
    %v416 = vpop.xlane.xlu0 %415
    %v417 = vrcp.pop %v416
    %v418 = vmul.f32 %v413, %v417
    %419 = vrot.lane.b32.xlu0 %v328, 60
    %v420 = vpop.permute.xlu0 %419
    %v423 = vsel %vm239, %v418, 0
    %425 = vmatprep.subr.mxu0 0.0
    %426 = vmatpush1.msra.mxu0 %v420
    %427 = vmatprep.subr.mxu0 0.0
    %428 = vmatpush1.msra.mxu0 0.0
    %429 = vmatprep.subr.mxu0 0.0
    %430 = vmatpush1.msra.mxu0 0.0
    %431 = vmatprep.subr.mxu0 0.0
    %432 = vmatpush1.msra.mxu0 0.0
    %433 = vmatprep.subr.mxu0 0.0
    %434 = vmatpush1.msra.mxu0 0.0
    %435 = vmatprep.subr.mxu0 0.0
    %436 = vmatpush1.msra.mxu0 0.0
    %437 = vmatprep.subr.mxu0 0.0
    %438 = vmatpush1.msra.mxu0 0.0
    %439 = vmatprep.subr.mxu0 0.0
    %440 = vmatpush1.msra.mxu0 0.0
    %441 = vmatprep.subr.mxu0 0.0
    %442 = vmatpush1.msra.mxu0 0.0
    %443 = vmatprep.subr.mxu0 0.0
    %444 = vmatpush1.msra.mxu0 0.0
    %445 = vmatprep.subr.mxu0 0.0
    %446 = vmatpush1.msra.mxu0 0.0
    %447 = vmatprep.subr.mxu0 0.0
    %448 = vmatpush1.msra.mxu0 0.0
    %449 = vmatprep.subr.mxu0 0.0
    %450 = vmatpush1.msra.mxu0 0.0
    %451 = vmatprep.subr.mxu0 0.0
    %452 = vmatpush1.msra.mxu0 0.0
    %453 = vmatprep.subr.mxu0 0.0
    %454 = vmatpush1.msra.mxu0 0.0
    %455 = vmatprep.subr.mxu0 0.0
    %456 = vmatpush1.msra.mxu0 0.0
    %457 = vmatprep.subr.mxu0 0.0
    %458 = vmatpush1.msra.mxu0 0.0
    %459 = vmatprep.subr.mxu0 0.0
    %460 = vmatpush1.msra.mxu0 0.0
    %461 = vmatprep.subr.mxu0 0.0
    %462 = vmatpush1.msra.mxu0 0.0
    %463 = vmatprep.subr.mxu0 0.0
    %464 = vmatpush1.msra.mxu0 0.0
    %465 = vmatprep.subr.mxu0 0.0
    %466 = vmatpush1.msra.mxu0 0.0
    %467 = vmatprep.subr.mxu0 0.0
    %468 = vmatpush1.msra.mxu0 0.0
    %469 = vmatprep.subr.mxu0 0.0
    %470 = vmatpush1.msra.mxu0 0.0
    %471 = vmatprep.subr.mxu0 0.0
    %472 = vmatpush1.msra.mxu0 0.0
    %473 = vmatprep.subr.mxu0 0.0
    %474 = vmatpush1.msra.mxu0 0.0
    %475 = vmatprep.subr.mxu0 0.0
    %476 = vmatpush1.msra.mxu0 0.0
    %477 = vmatprep.subr.mxu0 0.0
    %478 = vmatpush1.msra.mxu0 0.0
    %479 = vmatprep.subr.mxu0 0.0
    %480 = vmatpush1.msra.mxu0 0.0
    %481 = vmatprep.subr.mxu0 0.0
    %482 = vmatpush1.msra.mxu0 0.0
    %483 = vmatprep.subr.mxu0 0.0
    %484 = vmatpush1.msra.mxu0 0.0
    %485 = vmatprep.subr.mxu0 0.0
    %486 = vmatpush1.msra.mxu0 0.0
    %487 = vmatprep.subr.mxu0 0.0
    %488 = vmatpush1.msra.mxu0 0.0
    %489 = vmatprep.mubr.f32.mxu0 0.0
    %490 = vmatmul.mubr.f32.gmra.mrb[0].mxu0 %v423
    %v491 = vpop.f32.mrb[0].mxu0
    %v492 = vadd.f32 0.0, %v491
    %v493 = vpop.f32.mrb[0].mxu0
    %494 = vdwg.mxu0
    %496 = vrot.lane.b32.xlu0 %v492, 4
    %v497 = vpop.permute.xlu0 %496
    %vm499 = vcmask 64544
    %500 = vst.msk [vmem:[#allocation3] sm:$0xff] %vm499, %v497
    %v501 = vld [vmem:[#allocation2] sm:$0xff]
    %503 = vrot.lane.b32.xlu0 %v501, 120
    %v504 = vpop.permute.xlu0 %503
    %505 = vrot.lane.b32.xlu0 %v501, 88
    %v506 = vpop.permute.xlu0 %505
    %v507 = vsel %vm164, %v504, 0
    %v509 = vsel %vm164, %v506, 0
    %511 = vmatprep.subr.mxu0 0.0
    %512 = vmatpush1.xpose.msra.mxu0 %v509
    %513 = vmatprep.subr.mxu0 0.0
    %514 = vmatpush1.xpose.msra.mxu0 0.0
    %515 = vmatprep.subr.mxu0 0.0
    %516 = vmatpush1.xpose.msra.mxu0 0.0
    %517 = vmatprep.subr.mxu0 0.0
    %518 = vmatpush1.xpose.msra.mxu0 0.0
    %519 = vmatprep.subr.mxu0 0.0
    %520 = vmatpush1.xpose.msra.mxu0 0.0
    %521 = vmatprep.subr.mxu0 0.0
    %522 = vmatpush1.xpose.msra.mxu0 0.0
    %523 = vmatprep.subr.mxu0 0.0
    %524 = vmatpush1.xpose.msra.mxu0 0.0
    %525 = vmatprep.subr.mxu0 0.0
    %526 = vmatpush1.xpose.msra.mxu0 0.0
    %527 = vmatprep.subr.mxu0 0.0
    %528 = vmatpush1.xpose.msra.mxu0 0.0
    %529 = vmatprep.subr.mxu0 0.0
    %530 = vmatpush1.xpose.msra.mxu0 0.0
    %531 = vmatprep.subr.mxu0 0.0
    %532 = vmatpush1.xpose.msra.mxu0 0.0
    %533 = vmatprep.subr.mxu0 0.0
    %534 = vmatpush1.xpose.msra.mxu0 0.0
    %535 = vmatprep.subr.mxu0 0.0
    %536 = vmatpush1.xpose.msra.mxu0 0.0
    %537 = vmatprep.subr.mxu0 0.0
    %538 = vmatpush1.xpose.msra.mxu0 0.0
    %539 = vmatprep.subr.mxu0 0.0
    %540 = vmatpush1.xpose.msra.mxu0 0.0
    %541 = vmatprep.subr.mxu0 0.0
    %542 = vmatpush1.xpose.msra.mxu0 0.0
    %543 = vmatprep.subr.mxu0 0.0
    %544 = vmatpush1.xpose.msra.mxu0 0.0
    %545 = vmatprep.subr.mxu0 0.0
    %546 = vmatpush1.xpose.msra.mxu0 0.0
    %547 = vmatprep.subr.mxu0 0.0
    %548 = vmatpush1.xpose.msra.mxu0 0.0
    %549 = vmatprep.subr.mxu0 0.0
    %550 = vmatpush1.xpose.msra.mxu0 0.0
    %551 = vmatprep.subr.mxu0 0.0
    %552 = vmatpush1.xpose.msra.mxu0 0.0
    %553 = vmatprep.subr.mxu0 0.0
    %554 = vmatpush1.xpose.msra.mxu0 0.0
    %555 = vmatprep.subr.mxu0 0.0
    %556 = vmatpush1.xpose.msra.mxu0 0.0
    %557 = vmatprep.subr.mxu0 0.0
    %558 = vmatpush1.xpose.msra.mxu0 0.0
    %559 = vmatprep.subr.mxu0 0.0
    %560 = vmatpush1.xpose.msra.mxu0 0.0
    %561 = vmatprep.subr.mxu0 0.0
    %562 = vmatpush1.xpose.msra.mxu0 0.0
    %563 = vmatprep.subr.mxu0 0.0
    %564 = vmatpush1.xpose.msra.mxu0 0.0
    %565 = vmatprep.subr.mxu0 0.0
    %566 = vmatpush1.xpose.msra.mxu0 0.0
    %567 = vmatprep.subr.mxu0 0.0
    %568 = vmatpush1.xpose.msra.mxu0 0.0
    %569 = vmatprep.subr.mxu0 0.0
    %570 = vmatpush1.xpose.msra.mxu0 0.0
    %571 = vmatprep.subr.mxu0 0.0
    %572 = vmatpush1.xpose.msra.mxu0 0.0
    %573 = vmatprep.subr.mxu0 0.0
    %574 = vmatpush1.xpose.msra.mxu0 0.0
    %575 = vmatprep.mubr.f32.mxu0 0.0
    %576 = vmatmul.mubr.f32.gmra.mrb[0].mxu0 %v507
    %v577 = vpop.f32.mrb[0].mxu0
    %v578 = vadd.f32 0.5, %v577
    %v579 = vpop.f32.mrb[0].mxu0
    %580 = vdwg.mxu0
    %v581 = vsel %vm239, %v578, -inf
    %582 = vmax.xlane.f32.xlu0 %v581
    %v583 = vpop.xlane.xlu0 %582
    %v584 = vsub.f32 %v578, %v583
    %v585 = vmul.f32 %v584, 1.442695
    %v586 = vpow.pop %v585
    %v587 = vsel %vm239, %v586, 0.0
    %588 = vadd.xlane.f32.xlu0 %v587
    %v589 = vpop.xlane.xlu0 %588
    %v590 = vrcp.pop %v589
    %v591 = vmul.f32 %v586, %v590
    %592 = vrot.lane.b32.xlu0 %v501, 56
    %v593 = vpop.permute.xlu0 %592
    %v596 = vsel %vm239, %v591, 0
    %598 = vmatprep.subr.mxu0 0.0
    %599 = vmatpush1.msra.mxu0 %v593
    %600 = vmatprep.subr.mxu0 0.0
    %601 = vmatpush1.msra.mxu0 0.0
    %602 = vmatprep.subr.mxu0 0.0
    %603 = vmatpush1.msra.mxu0 0.0
    %604 = vmatprep.subr.mxu0 0.0
    %605 = vmatpush1.msra.mxu0 0.0
    %606 = vmatprep.subr.mxu0 0.0
    %607 = vmatpush1.msra.mxu0 0.0
    %608 = vmatprep.subr.mxu0 0.0
    %609 = vmatpush1.msra.mxu0 0.0
    %610 = vmatprep.subr.mxu0 0.0
    %611 = vmatpush1.msra.mxu0 0.0
    %612 = vmatprep.subr.mxu0 0.0
    %613 = vmatpush1.msra.mxu0 0.0
    %614 = vmatprep.subr.mxu0 0.0
    %615 = vmatpush1.msra.mxu0 0.0
    %616 = vmatprep.subr.mxu0 0.0
    %617 = vmatpush1.msra.mxu0 0.0
    %618 = vmatprep.subr.mxu0 0.0
    %619 = vmatpush1.msra.mxu0 0.0
    %620 = vmatprep.subr.mxu0 0.0
    %621 = vmatpush1.msra.mxu0 0.0
    %622 = vmatprep.subr.mxu0 0.0
    %623 = vmatpush1.msra.mxu0 0.0
    %624 = vmatprep.subr.mxu0 0.0
    %625 = vmatpush1.msra.mxu0 0.0
    %626 = vmatprep.subr.mxu0 0.0
    %627 = vmatpush1.msra.mxu0 0.0
    %628 = vmatprep.subr.mxu0 0.0
    %629 = vmatpush1.msra.mxu0 0.0
    %630 = vmatprep.subr.mxu0 0.0
    %631 = vmatpush1.msra.mxu0 0.0
    %632 = vmatprep.subr.mxu0 0.0
    %633 = vmatpush1.msra.mxu0 0.0
    %634 = vmatprep.subr.mxu0 0.0
    %635 = vmatpush1.msra.mxu0 0.0
    %636 = vmatprep.subr.mxu0 0.0
    %637 = vmatpush1.msra.mxu0 0.0
    %638 = vmatprep.subr.mxu0 0.0
    %639 = vmatpush1.msra.mxu0 0.0
    %640 = vmatprep.subr.mxu0 0.0
    %641 = vmatpush1.msra.mxu0 0.0
    %642 = vmatprep.subr.mxu0 0.0
    %643 = vmatpush1.msra.mxu0 0.0
    %644 = vmatprep.subr.mxu0 0.0
    %645 = vmatpush1.msra.mxu0 0.0
    %646 = vmatprep.subr.mxu0 0.0
    %647 = vmatpush1.msra.mxu0 0.0
    %648 = vmatprep.subr.mxu0 0.0
    %649 = vmatpush1.msra.mxu0 0.0
    %650 = vmatprep.subr.mxu0 0.0
    %651 = vmatpush1.msra.mxu0 0.0
    %652 = vmatprep.subr.mxu0 0.0
    %653 = vmatpush1.msra.mxu0 0.0
    %654 = vmatprep.subr.mxu0 0.0
    %655 = vmatpush1.msra.mxu0 0.0
    %656 = vmatprep.subr.mxu0 0.0
    %657 = vmatpush1.msra.mxu0 0.0
    %658 = vmatprep.subr.mxu0 0.0
    %659 = vmatpush1.msra.mxu0 0.0
    %660 = vmatprep.subr.mxu0 0.0
    %661 = vmatpush1.msra.mxu0 0.0
    %662 = vmatprep.mubr.f32.mxu0 0.0
    %663 = vmatmul.mubr.f32.gmra.mrb[0].mxu0 %v596
    %v664 = vpop.f32.mrb[0].mxu0
    %v665 = vadd.f32 0.0, %v664
    %v666 = vpop.f32.mrb[0].mxu0
    %667 = vdwg.mxu0
    %669 = vrot.lane.b32.xlu0 %v665, 8
    %v670 = vpop.permute.xlu0 %669
    %vm672 = vcmask 97344
    %673 = vst.msk [vmem:[#allocation3] sm:$0xff] %vm672, %v670
    %v674 = vld [vmem:[#allocation2] sm:$0xff]
    %676 = vrot.lane.b32.xlu0 %v674, 116
    %v677 = vpop.permute.xlu0 %676
    %678 = vrot.lane.b32.xlu0 %v674, 84
    %v679 = vpop.permute.xlu0 %678
    %v680 = vsel %vm164, %v677, 0
    %v682 = vsel %vm164, %v679, 0
    %684 = vmatprep.subr.mxu0 0.0
    %685 = vmatpush1.xpose.msra.mxu0 %v682
    %686 = vmatprep.subr.mxu0 0.0
    %687 = vmatpush1.xpose.msra.mxu0 0.0
    %688 = vmatprep.subr.mxu0 0.0
    %689 = vmatpush1.xpose.msra.mxu0 0.0
    %690 = vmatprep.subr.mxu0 0.0
    %691 = vmatpush1.xpose.msra.mxu0 0.0
    %692 = vmatprep.subr.mxu0 0.0
    %693 = vmatpush1.xpose.msra.mxu0 0.0
    %694 = vmatprep.subr.mxu0 0.0
    %695 = vmatpush1.xpose.msra.mxu0 0.0
    %696 = vmatprep.subr.mxu0 0.0
    %697 = vmatpush1.xpose.msra.mxu0 0.0
    %698 = vmatprep.subr.mxu0 0.0
    %699 = vmatpush1.xpose.msra.mxu0 0.0
    %700 = vmatprep.subr.mxu0 0.0
    %701 = vmatpush1.xpose.msra.mxu0 0.0
    %702 = vmatprep.subr.mxu0 0.0
    %703 = vmatpush1.xpose.msra.mxu0 0.0
    %704 = vmatprep.subr.mxu0 0.0
    %705 = vmatpush1.xpose.msra.mxu0 0.0
    %706 = vmatprep.subr.mxu0 0.0
    %707 = vmatpush1.xpose.msra.mxu0 0.0
    %708 = vmatprep.subr.mxu0 0.0
    %709 = vmatpush1.xpose.msra.mxu0 0.0
    %710 = vmatprep.subr.mxu0 0.0
    %711 = vmatpush1.xpose.msra.mxu0 0.0
    %712 = vmatprep.subr.mxu0 0.0
    %713 = vmatpush1.xpose.msra.mxu0 0.0
    %714 = vmatprep.subr.mxu0 0.0
    %715 = vmatpush1.xpose.msra.mxu0 0.0
    %716 = vmatprep.subr.mxu0 0.0
    %717 = vmatpush1.xpose.msra.mxu0 0.0
    %718 = vmatprep.subr.mxu0 0.0
    %719 = vmatpush1.xpose.msra.mxu0 0.0
    %720 = vmatprep.subr.mxu0 0.0
    %721 = vmatpush1.xpose.msra.mxu0 0.0
    %722 = vmatprep.subr.mxu0 0.0
    %723 = vmatpush1.xpose.msra.mxu0 0.0
    %724 = vmatprep.subr.mxu0 0.0
    %725 = vmatpush1.xpose.msra.mxu0 0.0
    %726 = vmatprep.subr.mxu0 0.0
    %727 = vmatpush1.xpose.msra.mxu0 0.0
    %728 = vmatprep.subr.mxu0 0.0
    %729 = vmatpush1.xpose.msra.mxu0 0.0
    %730 = vmatprep.subr.mxu0 0.0
    %731 = vmatpush1.xpose.msra.mxu0 0.0
    %732 = vmatprep.subr.mxu0 0.0
    %733 = vmatpush1.xpose.msra.mxu0 0.0
    %734 = vmatprep.subr.mxu0 0.0
    %735 = vmatpush1.xpose.msra.mxu0 0.0
    %736 = vmatprep.subr.mxu0 0.0
    %737 = vmatpush1.xpose.msra.mxu0 0.0
    %738 = vmatprep.subr.mxu0 0.0
    %739 = vmatpush1.xpose.msra.mxu0 0.0
    %740 = vmatprep.subr.mxu0 0.0
    %741 = vmatpush1.xpose.msra.mxu0 0.0
    %742 = vmatprep.subr.mxu0 0.0
    %743 = vmatpush1.xpose.msra.mxu0 0.0
    %744 = vmatprep.subr.mxu0 0.0
    %745 = vmatpush1.xpose.msra.mxu0 0.0
    %746 = vmatprep.subr.mxu0 0.0
    %747 = vmatpush1.xpose.msra.mxu0 0.0
    %748 = vmatprep.mubr.f32.mxu0 0.0
    %749 = vmatmul.mubr.f32.gmra.mrb[0].mxu0 %v680
    %v750 = vpop.f32.mrb[0].mxu0
    %v751 = vadd.f32 0.5, %v750
    %v752 = vpop.f32.mrb[0].mxu0
    %753 = vdwg.mxu0
    %v754 = vsel %vm239, %v751, -inf
    %755 = vmax.xlane.f32.xlu0 %v754
    %v756 = vpop.xlane.xlu0 %755
    %v757 = vsub.f32 %v751, %v756
    %v758 = vmul.f32 %v757, 1.442695
    %v759 = vpow.pop %v758
    %v760 = vsel %vm239, %v759, 0.0
    %761 = vadd.xlane.f32.xlu0 %v760
    %v762 = vpop.xlane.xlu0 %761
    %v763 = vrcp.pop %v762
    %v764 = vmul.f32 %v759, %v763
    %765 = vrot.lane.b32.xlu0 %v674, 52
    %v766 = vpop.permute.xlu0 %765
    %v769 = vsel %vm239, %v764, 0
    %771 = vmatprep.subr.mxu0 0.0
    %772 = vmatpush1.msra.mxu0 %v766
    %773 = vmatprep.subr.mxu0 0.0
    %774 = vmatpush1.msra.mxu0 0.0
    %775 = vmatprep.subr.mxu0 0.0
    %776 = vmatpush1.msra.mxu0 0.0
    %777 = vmatprep.subr.mxu0 0.0
    %778 = vmatpush1.msra.mxu0 0.0
    %779 = vmatprep.subr.mxu0 0.0
    %780 = vmatpush1.msra.mxu0 0.0
    %781 = vmatprep.subr.mxu0 0.0
    %782 = vmatpush1.msra.mxu0 0.0
    %783 = vmatprep.subr.mxu0 0.0
    %784 = vmatpush1.msra.mxu0 0.0
    %785 = vmatprep.subr.mxu0 0.0
    %786 = vmatpush1.msra.mxu0 0.0
    %787 = vmatprep.subr.mxu0 0.0
    %788 = vmatpush1.msra.mxu0 0.0
    %789 = vmatprep.subr.mxu0 0.0
    %790 = vmatpush1.msra.mxu0 0.0
    %791 = vmatprep.subr.mxu0 0.0
    %792 = vmatpush1.msra.mxu0 0.0
    %793 = vmatprep.subr.mxu0 0.0
    %794 = vmatpush1.msra.mxu0 0.0
    %795 = vmatprep.subr.mxu0 0.0
    %796 = vmatpush1.msra.mxu0 0.0
    %797 = vmatprep.subr.mxu0 0.0
    %798 = vmatpush1.msra.mxu0 0.0
    %799 = vmatprep.subr.mxu0 0.0
    %800 = vmatpush1.msra.mxu0 0.0
    %801 = vmatprep.subr.mxu0 0.0
    %802 = vmatpush1.msra.mxu0 0.0
    %803 = vmatprep.subr.mxu0 0.0
    %804 = vmatpush1.msra.mxu0 0.0
    %805 = vmatprep.subr.mxu0 0.0
    %806 = vmatpush1.msra.mxu0 0.0
    %807 = vmatprep.subr.mxu0 0.0
    %808 = vmatpush1.msra.mxu0 0.0
    %809 = vmatprep.subr.mxu0 0.0
    %810 = vmatpush1.msra.mxu0 0.0
    %811 = vmatprep.subr.mxu0 0.0
    %812 = vmatpush1.msra.mxu0 0.0
    %813 = vmatprep.subr.mxu0 0.0
    %814 = vmatpush1.msra.mxu0 0.0
    %815 = vmatprep.subr.mxu0 0.0
    %816 = vmatpush1.msra.mxu0 0.0
    %817 = vmatprep.subr.mxu0 0.0
    %818 = vmatpush1.msra.mxu0 0.0
    %819 = vmatprep.subr.mxu0 0.0
    %820 = vmatpush1.msra.mxu0 0.0
    %821 = vmatprep.subr.mxu0 0.0
    %822 = vmatpush1.msra.mxu0 0.0
    %823 = vmatprep.subr.mxu0 0.0
    %824 = vmatpush1.msra.mxu0 0.0
    %825 = vmatprep.subr.mxu0 0.0
    %826 = vmatpush1.msra.mxu0 0.0
    %827 = vmatprep.subr.mxu0 0.0
    %828 = vmatpush1.msra.mxu0 0.0
    %829 = vmatprep.subr.mxu0 0.0
    %830 = vmatpush1.msra.mxu0 0.0
    %831 = vmatprep.subr.mxu0 0.0
    %832 = vmatpush1.msra.mxu0 0.0
    %833 = vmatprep.subr.mxu0 0.0
    %834 = vmatpush1.msra.mxu0 0.0
    %835 = vmatprep.mubr.f32.mxu0 0.0
    %836 = vmatmul.mubr.f32.gmra.mrb[0].mxu0 %v769
    %v837 = vpop.f32.mrb[0].mxu0
    %v838 = vadd.f32 0.0, %v837
    %v839 = vpop.f32.mrb[0].mxu0
    %840 = vdwg.mxu0
    %842 = vrot.lane.b32.xlu0 %v838, 12
    %v843 = vpop.permute.xlu0 %842
    %vm845 = vcmask 130144
    %846 = vst.msk [vmem:[#allocation3] sm:$0xff] %vm845, %v843
    %v847 = vld [vmem:[#allocation2] sm:$0xff]
    %849 = vrot.lane.b32.xlu0 %v847, 112
    %v850 = vpop.permute.xlu0 %849
    %851 = vrot.lane.b32.xlu0 %v847, 80
    %v852 = vpop.permute.xlu0 %851
    %v853 = vsel %vm164, %v850, 0
    %v855 = vsel %vm164, %v852, 0
    %857 = vmatprep.subr.mxu0 0.0
    %858 = vmatpush1.xpose.msra.mxu0 %v855
    %859 = vmatprep.subr.mxu0 0.0
    %860 = vmatpush1.xpose.msra.mxu0 0.0
    %861 = vmatprep.subr.mxu0 0.0
    %862 = vmatpush1.xpose.msra.mxu0 0.0
    %863 = vmatprep.subr.mxu0 0.0
    %864 = vmatpush1.xpose.msra.mxu0 0.0
    %865 = vmatprep.subr.mxu0 0.0
    %866 = vmatpush1.xpose.msra.mxu0 0.0
    %867 = vmatprep.subr.mxu0 0.0
    %868 = vmatpush1.xpose.msra.mxu0 0.0
    %869 = vmatprep.subr.mxu0 0.0
    %870 = vmatpush1.xpose.msra.mxu0 0.0
    %871 = vmatprep.subr.mxu0 0.0
    %872 = vmatpush1.xpose.msra.mxu0 0.0
    %873 = vmatprep.subr.mxu0 0.0
    %874 = vmatpush1.xpose.msra.mxu0 0.0
    %875 = vmatprep.subr.mxu0 0.0
    %876 = vmatpush1.xpose.msra.mxu0 0.0
    %877 = vmatprep.subr.mxu0 0.0
    %878 = vmatpush1.xpose.msra.mxu0 0.0
    %879 = vmatprep.subr.mxu0 0.0
    %880 = vmatpush1.xpose.msra.mxu0 0.0
    %881 = vmatprep.subr.mxu0 0.0
    %882 = vmatpush1.xpose.msra.mxu0 0.0
    %883 = vmatprep.subr.mxu0 0.0
    %884 = vmatpush1.xpose.msra.mxu0 0.0
    %885 = vmatprep.subr.mxu0 0.0
    %886 = vmatpush1.xpose.msra.mxu0 0.0
    %887 = vmatprep.subr.mxu0 0.0
    %888 = vmatpush1.xpose.msra.mxu0 0.0
    %889 = vmatprep.subr.mxu0 0.0
    %890 = vmatpush1.xpose.msra.mxu0 0.0
    %891 = vmatprep.subr.mxu0 0.0
    %892 = vmatpush1.xpose.msra.mxu0 0.0
    %893 = vmatprep.subr.mxu0 0.0
    %894 = vmatpush1.xpose.msra.mxu0 0.0
    %895 = vmatprep.subr.mxu0 0.0
    %896 = vmatpush1.xpose.msra.mxu0 0.0
    %897 = vmatprep.subr.mxu0 0.0
    %898 = vmatpush1.xpose.msra.mxu0 0.0
    %899 = vmatprep.subr.mxu0 0.0
    %900 = vmatpush1.xpose.msra.mxu0 0.0
    %901 = vmatprep.subr.mxu0 0.0
    %902 = vmatpush1.xpose.msra.mxu0 0.0
    %903 = vmatprep.subr.mxu0 0.0
    %904 = vmatpush1.xpose.msra.mxu0 0.0
    %905 = vmatprep.subr.mxu0 0.0
    %906 = vmatpush1.xpose.msra.mxu0 0.0
    %907 = vmatprep.subr.mxu0 0.0
    %908 = vmatpush1.xpose.msra.mxu0 0.0
    %909 = vmatprep.subr.mxu0 0.0
    %910 = vmatpush1.xpose.msra.mxu0 0.0
    %911 = vmatprep.subr.mxu0 0.0
    %912 = vmatpush1.xpose.msra.mxu0 0.0
    %913 = vmatprep.subr.mxu0 0.0
    %914 = vmatpush1.xpose.msra.mxu0 0.0
    %915 = vmatprep.subr.mxu0 0.0
    %916 = vmatpush1.xpose.msra.mxu0 0.0
    %917 = vmatprep.subr.mxu0 0.0
    %918 = vmatpush1.xpose.msra.mxu0 0.0
    %919 = vmatprep.subr.mxu0 0.0
    %920 = vmatpush1.xpose.msra.mxu0 0.0
    %921 = vmatprep.mubr.f32.mxu0 0.0
    %922 = vmatmul.mubr.f32.gmra.mrb[0].mxu0 %v853
    %v923 = vpop.f32.mrb[0].mxu0
    %v924 = vadd.f32 0.5, %v923
    %v925 = vpop.f32.mrb[0].mxu0
    %926 = vdwg.mxu0
    %v927 = vsel %vm239, %v924, -inf
    %928 = vmax.xlane.f32.xlu0 %v927
    %v929 = vpop.xlane.xlu0 %928
    %v930 = vsub.f32 %v924, %v929
    %v931 = vmul.f32 %v930, 1.442695
    %v932 = vpow.pop %v931
    %v933 = vsel %vm239, %v932, 0.0
    %934 = vadd.xlane.f32.xlu0 %v933
    %v935 = vpop.xlane.xlu0 %934
    %v936 = vrcp.pop %v935
    %v937 = vmul.f32 %v932, %v936
    %938 = vrot.lane.b32.xlu0 %v847, 48
    %v939 = vpop.permute.xlu0 %938
    %v942 = vsel %vm239, %v937, 0
    %944 = vmatprep.subr.mxu0 0.0
    %945 = vmatpush1.msra.mxu0 %v939
    %946 = vmatprep.subr.mxu0 0.0
    %947 = vmatpush1.msra.mxu0 0.0
    %948 = vmatprep.subr.mxu0 0.0
    %949 = vmatpush1.msra.mxu0 0.0
    %950 = vmatprep.subr.mxu0 0.0
    %951 = vmatpush1.msra.mxu0 0.0
    %952 = vmatprep.subr.mxu0 0.0
    %953 = vmatpush1.msra.mxu0 0.0
    %954 = vmatprep.subr.mxu0 0.0
    %955 = vmatpush1.msra.mxu0 0.0
    %956 = vmatprep.subr.mxu0 0.0
    %957 = vmatpush1.msra.mxu0 0.0
    %958 = vmatprep.subr.mxu0 0.0
    %959 = vmatpush1.msra.mxu0 0.0
    %960 = vmatprep.subr.mxu0 0.0
    %961 = vmatpush1.msra.mxu0 0.0
    %962 = vmatprep.subr.mxu0 0.0
    %963 = vmatpush1.msra.mxu0 0.0
    %964 = vmatprep.subr.mxu0 0.0
    %965 = vmatpush1.msra.mxu0 0.0
    %966 = vmatprep.subr.mxu0 0.0
    %967 = vmatpush1.msra.mxu0 0.0
    %968 = vmatprep.subr.mxu0 0.0
    %969 = vmatpush1.msra.mxu0 0.0
    %970 = vmatprep.subr.mxu0 0.0
    %971 = vmatpush1.msra.mxu0 0.0
    %972 = vmatprep.subr.mxu0 0.0
    %973 = vmatpush1.msra.mxu0 0.0
    %974 = vmatprep.subr.mxu0 0.0
    %975 = vmatpush1.msra.mxu0 0.0
    %976 = vmatprep.subr.mxu0 0.0
    %977 = vmatpush1.msra.mxu0 0.0
    %978 = vmatprep.subr.mxu0 0.0
    %979 = vmatpush1.msra.mxu0 0.0
    %980 = vmatprep.subr.mxu0 0.0
    %981 = vmatpush1.msra.mxu0 0.0
    %982 = vmatprep.subr.mxu0 0.0
    %983 = vmatpush1.msra.mxu0 0.0
    %984 = vmatprep.subr.mxu0 0.0
    %985 = vmatpush1.msra.mxu0 0.0
    %986 = vmatprep.subr.mxu0 0.0
    %987 = vmatpush1.msra.mxu0 0.0
    %988 = vmatprep.subr.mxu0 0.0
    %989 = vmatpush1.msra.mxu0 0.0
    %990 = vmatprep.subr.mxu0 0.0
    %991 = vmatpush1.msra.mxu0 0.0
    %992 = vmatprep.subr.mxu0 0.0
    %993 = vmatpush1.msra.mxu0 0.0
    %994 = vmatprep.subr.mxu0 0.0
    %995 = vmatpush1.msra.mxu0 0.0
    %996 = vmatprep.subr.mxu0 0.0
    %997 = vmatpush1.msra.mxu0 0.0
    %998 = vmatprep.subr.mxu0 0.0
    %999 = vmatpush1.msra.mxu0 0.0
    %1000 = vmatprep.subr.mxu0 0.0
    %1001 = vmatpush1.msra.mxu0 0.0
    %1002 = vmatprep.subr.mxu0 0.0
    %1003 = vmatpush1.msra.mxu0 0.0
    %1004 = vmatprep.subr.mxu0 0.0
    %1005 = vmatpush1.msra.mxu0 0.0
    %1006 = vmatprep.subr.mxu0 0.0
    %1007 = vmatpush1.msra.mxu0 0.0
    %1008 = vmatprep.mubr.f32.mxu0 0.0
    %1009 = vmatmul.mubr.f32.gmra.mrb[0].mxu0 %v942
    %v1010 = vpop.f32.mrb[0].mxu0
    %v1011 = vadd.f32 0.0, %v1010
    %v1012 = vpop.f32.mrb[0].mxu0
    %1013 = vdwg.mxu0
    %1015 = vrot.lane.b32.xlu0 %v1011, 16
    %v1016 = vpop.permute.xlu0 %1015
    %vm1018 = vcmask 162944
    %1019 = vst.msk [vmem:[#allocation3] sm:$0xff] %vm1018, %v1016
    %v1020 = vld [vmem:[#allocation2] sm:$0xff]
    %1022 = vrot.lane.b32.xlu0 %v1020, 108
    %v1023 = vpop.permute.xlu0 %1022
    %1024 = vrot.lane.b32.xlu0 %v1020, 76
    %v1025 = vpop.permute.xlu0 %1024
    %v1026 = vsel %vm164, %v1023, 0
    %v1028 = vsel %vm164, %v1025, 0
    %1030 = vmatprep.subr.mxu0 0.0
    %1031 = vmatpush1.xpose.msra.mxu0 %v1028
    %1032 = vmatprep.subr.mxu0 0.0
    %1033 = vmatpush1.xpose.msra.mxu0 0.0
    %1034 = vmatprep.subr.mxu0 0.0
    %1035 = vmatpush1.xpose.msra.mxu0 0.0
    %1036 = vmatprep.subr.mxu0 0.0
    %1037 = vmatpush1.xpose.msra.mxu0 0.0
    %1038 = vmatprep.subr.mxu0 0.0
    %1039 = vmatpush1.xpose.msra.mxu0 0.0
    %1040 = vmatprep.subr.mxu0 0.0
    %1041 = vmatpush1.xpose.msra.mxu0 0.0
    %1042 = vmatprep.subr.mxu0 0.0
    %1043 = vmatpush1.xpose.msra.mxu0 0.0
    %1044 = vmatprep.subr.mxu0 0.0
    %1045 = vmatpush1.xpose.msra.mxu0 0.0
    %1046 = vmatprep.subr.mxu0 0.0
    %1047 = vmatpush1.xpose.msra.mxu0 0.0
    %1048 = vmatprep.subr.mxu0 0.0
    %1049 = vmatpush1.xpose.msra.mxu0 0.0
    %1050 = vmatprep.subr.mxu0 0.0
    %1051 = vmatpush1.xpose.msra.mxu0 0.0
    %1052 = vmatprep.subr.mxu0 0.0
    %1053 = vmatpush1.xpose.msra.mxu0 0.0
    %1054 = vmatprep.subr.mxu0 0.0
    %1055 = vmatpush1.xpose.msra.mxu0 0.0
    %1056 = vmatprep.subr.mxu0 0.0
    %1057 = vmatpush1.xpose.msra.mxu0 0.0
    %1058 = vmatprep.subr.mxu0 0.0
    %1059 = vmatpush1.xpose.msra.mxu0 0.0
    %1060 = vmatprep.subr.mxu0 0.0
    %1061 = vmatpush1.xpose.msra.mxu0 0.0
    %1062 = vmatprep.subr.mxu0 0.0
    %1063 = vmatpush1.xpose.msra.mxu0 0.0
    %1064 = vmatprep.subr.mxu0 0.0
    %1065 = vmatpush1.xpose.msra.mxu0 0.0
    %1066 = vmatprep.subr.mxu0 0.0
    %1067 = vmatpush1.xpose.msra.mxu0 0.0
    %1068 = vmatprep.subr.mxu0 0.0
    %1069 = vmatpush1.xpose.msra.mxu0 0.0
    %1070 = vmatprep.subr.mxu0 0.0
    %1071 = vmatpush1.xpose.msra.mxu0 0.0
    %1072 = vmatprep.subr.mxu0 0.0
    %1073 = vmatpush1.xpose.msra.mxu0 0.0
    %1074 = vmatprep.subr.mxu0 0.0
    %1075 = vmatpush1.xpose.msra.mxu0 0.0
    %1076 = vmatprep.subr.mxu0 0.0
    %1077 = vmatpush1.xpose.msra.mxu0 0.0
    %1078 = vmatprep.subr.mxu0 0.0
    %1079 = vmatpush1.xpose.msra.mxu0 0.0
    %1080 = vmatprep.subr.mxu0 0.0
    %1081 = vmatpush1.xpose.msra.mxu0 0.0
    %1082 = vmatprep.subr.mxu0 0.0
    %1083 = vmatpush1.xpose.msra.mxu0 0.0
    %1084 = vmatprep.subr.mxu0 0.0
    %1085 = vmatpush1.xpose.msra.mxu0 0.0
    %1086 = vmatprep.subr.mxu0 0.0
    %1087 = vmatpush1.xpose.msra.mxu0 0.0
    %1088 = vmatprep.subr.mxu0 0.0
    %1089 = vmatpush1.xpose.msra.mxu0 0.0
    %1090 = vmatprep.subr.mxu0 0.0
    %1091 = vmatpush1.xpose.msra.mxu0 0.0
    %1092 = vmatprep.subr.mxu0 0.0
    %1093 = vmatpush1.xpose.msra.mxu0 0.0
    %1094 = vmatprep.mubr.f32.mxu0 0.0
    %1095 = vmatmul.mubr.f32.gmra.mrb[0].mxu0 %v1026
    %v1096 = vpop.f32.mrb[0].mxu0
    %v1097 = vadd.f32 0.5, %v1096
    %v1098 = vpop.f32.mrb[0].mxu0
    %1099 = vdwg.mxu0
    %v1100 = vsel %vm239, %v1097, -inf
    %1101 = vmax.xlane.f32.xlu0 %v1100
    %v1102 = vpop.xlane.xlu0 %1101
    %v1103 = vsub.f32 %v1097, %v1102
    %v1104 = vmul.f32 %v1103, 1.442695
    %v1105 = vpow.pop %v1104
    %v1106 = vsel %vm239, %v1105, 0.0
    %1107 = vadd.xlane.f32.xlu0 %v1106
    %v1108 = vpop.xlane.xlu0 %1107
    %v1109 = vrcp.pop %v1108
    %v1110 = vmul.f32 %v1105, %v1109
    %1111 = vrot.lane.b32.xlu0 %v1020, 44
    %v1112 = vpop.permute.xlu0 %1111
    %v1115 = vsel %vm239, %v1110, 0
    %1117 = vmatprep.subr.mxu0 0.0
    %1118 = vmatpush1.msra.mxu0 %v1112
    %1119 = vmatprep.subr.mxu0 0.0
    %1120 = vmatpush1.msra.mxu0 0.0
    %1121 = vmatprep.subr.mxu0 0.0
    %1122 = vmatpush1.msra.mxu0 0.0
    %1123 = vmatprep.subr.mxu0 0.0
    %1124 = vmatpush1.msra.mxu0 0.0
    %1125 = vmatprep.subr.mxu0 0.0
    %1126 = vmatpush1.msra.mxu0 0.0
    %1127 = vmatprep.subr.mxu0 0.0
    %1128 = vmatpush1.msra.mxu0 0.0
    %1129 = vmatprep.subr.mxu0 0.0
    %1130 = vmatpush1.msra.mxu0 0.0
    %1131 = vmatprep.subr.mxu0 0.0
    %1132 = vmatpush1.msra.mxu0 0.0
    %1133 = vmatprep.subr.mxu0 0.0
    %1134 = vmatpush1.msra.mxu0 0.0
    %1135 = vmatprep.subr.mxu0 0.0
    %1136 = vmatpush1.msra.mxu0 0.0
    %1137 = vmatprep.subr.mxu0 0.0
    %1138 = vmatpush1.msra.mxu0 0.0
    %1139 = vmatprep.subr.mxu0 0.0
    %1140 = vmatpush1.msra.mxu0 0.0
    %1141 = vmatprep.subr.mxu0 0.0
    %1142 = vmatpush1.msra.mxu0 0.0
    %1143 = vmatprep.subr.mxu0 0.0
    %1144 = vmatpush1.msra.mxu0 0.0
    %1145 = vmatprep.subr.mxu0 0.0
    %1146 = vmatpush1.msra.mxu0 0.0
    %1147 = vmatprep.subr.mxu0 0.0
    %1148 = vmatpush1.msra.mxu0 0.0
    %1149 = vmatprep.subr.mxu0 0.0
    %1150 = vmatpush1.msra.mxu0 0.0
    %1151 = vmatprep.subr.mxu0 0.0
    %1152 = vmatpush1.msra.mxu0 0.0
    %1153 = vmatprep.subr.mxu0 0.0
    %1154 = vmatpush1.msra.mxu0 0.0
    %1155 = vmatprep.subr.mxu0 0.0
    %1156 = vmatpush1.msra.mxu0 0.0
    %1157 = vmatprep.subr.mxu0 0.0
    %1158 = vmatpush1.msra.mxu0 0.0
    %1159 = vmatprep.subr.mxu0 0.0
    %1160 = vmatpush1.msra.mxu0 0.0
    %1161 = vmatprep.subr.mxu0 0.0
    %1162 = vmatpush1.msra.mxu0 0.0
    %1163 = vmatprep.subr.mxu0 0.0
    %1164 = vmatpush1.msra.mxu0 0.0
    %1165 = vmatprep.subr.mxu0 0.0
    %1166 = vmatpush1.msra.mxu0 0.0
    %1167 = vmatprep.subr.mxu0 0.0
    %1168 = vmatpush1.msra.mxu0 0.0
    %1169 = vmatprep.subr.mxu0 0.0
    %1170 = vmatpush1.msra.mxu0 0.0
    %1171 = vmatprep.subr.mxu0 0.0
    %1172 = vmatpush1.msra.mxu0 0.0
    %1173 = vmatprep.subr.mxu0 0.0
    %1174 = vmatpush1.msra.mxu0 0.0
    %1175 = vmatprep.subr.mxu0 0.0
    %1176 = vmatpush1.msra.mxu0 0.0
    %1177 = vmatprep.subr.mxu0 0.0
    %1178 = vmatpush1.msra.mxu0 0.0
    %1179 = vmatprep.subr.mxu0 0.0
    %1180 = vmatpush1.msra.mxu0 0.0
    %1181 = vmatprep.mubr.f32.mxu0 0.0
    %1182 = vmatmul.mubr.f32.gmra.mrb[0].mxu0 %v1115
    %v1183 = vpop.f32.mrb[0].mxu0
    %v1184 = vadd.f32 0.0, %v1183
    %v1185 = vpop.f32.mrb[0].mxu0
    %1186 = vdwg.mxu0
    %1188 = vrot.lane.b32.xlu0 %v1184, 20
    %v1189 = vpop.permute.xlu0 %1188
    %vm1191 = vcmask 195744
    %1192 = vst.msk [vmem:[#allocation3] sm:$0xff] %vm1191, %v1189
    %v1193 = vld [vmem:[#allocation2] sm:$0xff]
    %1195 = vrot.lane.b32.xlu0 %v1193, 104
    %v1196 = vpop.permute.xlu0 %1195
    %1197 = vrot.lane.b32.xlu0 %v1193, 72
    %v1198 = vpop.permute.xlu0 %1197
    %v1199 = vsel %vm164, %v1196, 0
    %v1201 = vsel %vm164, %v1198, 0
    %1203 = vmatprep.subr.mxu0 0.0
    %1204 = vmatpush1.xpose.msra.mxu0 %v1201
    %1205 = vmatprep.subr.mxu0 0.0
    %1206 = vmatpush1.xpose.msra.mxu0 0.0
    %1207 = vmatprep.subr.mxu0 0.0
    %1208 = vmatpush1.xpose.msra.mxu0 0.0
    %1209 = vmatprep.subr.mxu0 0.0
    %1210 = vmatpush1.xpose.msra.mxu0 0.0
    %1211 = vmatprep.subr.mxu0 0.0
    %1212 = vmatpush1.xpose.msra.mxu0 0.0
    %1213 = vmatprep.subr.mxu0 0.0
    %1214 = vmatpush1.xpose.msra.mxu0 0.0
    %1215 = vmatprep.subr.mxu0 0.0
    %1216 = vmatpush1.xpose.msra.mxu0 0.0
    %1217 = vmatprep.subr.mxu0 0.0
    %1218 = vmatpush1.xpose.msra.mxu0 0.0
    %1219 = vmatprep.subr.mxu0 0.0
    %1220 = vmatpush1.xpose.msra.mxu0 0.0
    %1221 = vmatprep.subr.mxu0 0.0
    %1222 = vmatpush1.xpose.msra.mxu0 0.0
    %1223 = vmatprep.subr.mxu0 0.0
    %1224 = vmatpush1.xpose.msra.mxu0 0.0
    %1225 = vmatprep.subr.mxu0 0.0
    %1226 = vmatpush1.xpose.msra.mxu0 0.0
    %1227 = vmatprep.subr.mxu0 0.0
    %1228 = vmatpush1.xpose.msra.mxu0 0.0
    %1229 = vmatprep.subr.mxu0 0.0
    %1230 = vmatpush1.xpose.msra.mxu0 0.0
    %1231 = vmatprep.subr.mxu0 0.0
    %1232 = vmatpush1.xpose.msra.mxu0 0.0
    %1233 = vmatprep.subr.mxu0 0.0
    %1234 = vmatpush1.xpose.msra.mxu0 0.0
    %1235 = vmatprep.subr.mxu0 0.0
    %1236 = vmatpush1.xpose.msra.mxu0 0.0
    %1237 = vmatprep.subr.mxu0 0.0
    %1238 = vmatpush1.xpose.msra.mxu0 0.0
    %1239 = vmatprep.subr.mxu0 0.0
    %1240 = vmatpush1.xpose.msra.mxu0 0.0
    %1241 = vmatprep.subr.mxu0 0.0
    %1242 = vmatpush1.xpose.msra.mxu0 0.0
    %1243 = vmatprep.subr.mxu0 0.0
    %1244 = vmatpush1.xpose.msra.mxu0 0.0
    %1245 = vmatprep.subr.mxu0 0.0
    %1246 = vmatpush1.xpose.msra.mxu0 0.0
    %1247 = vmatprep.subr.mxu0 0.0
    %1248 = vmatpush1.xpose.msra.mxu0 0.0
    %1249 = vmatprep.subr.mxu0 0.0
    %1250 = vmatpush1.xpose.msra.mxu0 0.0
    %1251 = vmatprep.subr.mxu0 0.0
    %1252 = vmatpush1.xpose.msra.mxu0 0.0
    %1253 = vmatprep.subr.mxu0 0.0
    %1254 = vmatpush1.xpose.msra.mxu0 0.0
    %1255 = vmatprep.subr.mxu0 0.0
    %1256 = vmatpush1.xpose.msra.mxu0 0.0
    %1257 = vmatprep.subr.mxu0 0.0
    %1258 = vmatpush1.xpose.msra.mxu0 0.0
    %1259 = vmatprep.subr.mxu0 0.0
    %1260 = vmatpush1.xpose.msra.mxu0 0.0
    %1261 = vmatprep.subr.mxu0 0.0
    %1262 = vmatpush1.xpose.msra.mxu0 0.0
    %1263 = vmatprep.subr.mxu0 0.0
    %1264 = vmatpush1.xpose.msra.mxu0 0.0
    %1265 = vmatprep.subr.mxu0 0.0
    %1266 = vmatpush1.xpose.msra.mxu0 0.0
    %1267 = vmatprep.mubr.f32.mxu0 0.0
    %1268 = vmatmul.mubr.f32.gmra.mrb[0].mxu0 %v1199
    %v1269 = vpop.f32.mrb[0].mxu0
    %v1270 = vadd.f32 0.5, %v1269
    %v1271 = vpop.f32.mrb[0].mxu0
    %1272 = vdwg.mxu0
    %v1273 = vsel %vm239, %v1270, -inf
    %1274 = vmax.xlane.f32.xlu0 %v1273
    %v1275 = vpop.xlane.xlu0 %1274
    %v1276 = vsub.f32 %v1270, %v1275
    %v1277 = vmul.f32 %v1276, 1.442695
    %v1278 = vpow.pop %v1277
    %v1279 = vsel %vm239, %v1278, 0.0
    %1280 = vadd.xlane.f32.xlu0 %v1279
    %v1281 = vpop.xlane.xlu0 %1280
    %v1282 = vrcp.pop %v1281
    %v1283 = vmul.f32 %v1278, %v1282
    %1284 = vrot.lane.b32.xlu0 %v1193, 40
    %v1285 = vpop.permute.xlu0 %1284
    %v1288 = vsel %vm239, %v1283, 0
    %1290 = vmatprep.subr.mxu0 0.0
    %1291 = vmatpush1.msra.mxu0 %v1285
    %1292 = vmatprep.subr.mxu0 0.0
    %1293 = vmatpush1.msra.mxu0 0.0
    %1294 = vmatprep.subr.mxu0 0.0
    %1295 = vmatpush1.msra.mxu0 0.0
    %1296 = vmatprep.subr.mxu0 0.0
    %1297 = vmatpush1.msra.mxu0 0.0
    %1298 = vmatprep.subr.mxu0 0.0
    %1299 = vmatpush1.msra.mxu0 0.0
    %1300 = vmatprep.subr.mxu0 0.0
    %1301 = vmatpush1.msra.mxu0 0.0
    %1302 = vmatprep.subr.mxu0 0.0
    %1303 = vmatpush1.msra.mxu0 0.0
    %1304 = vmatprep.subr.mxu0 0.0
    %1305 = vmatpush1.msra.mxu0 0.0
    %1306 = vmatprep.subr.mxu0 0.0
    %1307 = vmatpush1.msra.mxu0 0.0
    %1308 = vmatprep.subr.mxu0 0.0
    %1309 = vmatpush1.msra.mxu0 0.0
    %1310 = vmatprep.subr.mxu0 0.0
    %1311 = vmatpush1.msra.mxu0 0.0
    %1312 = vmatprep.subr.mxu0 0.0
    %1313 = vmatpush1.msra.mxu0 0.0
    %1314 = vmatprep.subr.mxu0 0.0
    %1315 = vmatpush1.msra.mxu0 0.0
    %1316 = vmatprep.subr.mxu0 0.0
    %1317 = vmatpush1.msra.mxu0 0.0
    %1318 = vmatprep.subr.mxu0 0.0
    %1319 = vmatpush1.msra.mxu0 0.0
    %1320 = vmatprep.subr.mxu0 0.0
    %1321 = vmatpush1.msra.mxu0 0.0
    %1322 = vmatprep.subr.mxu0 0.0
    %1323 = vmatpush1.msra.mxu0 0.0
    %1324 = vmatprep.subr.mxu0 0.0
    %1325 = vmatpush1.msra.mxu0 0.0
    %1326 = vmatprep.subr.mxu0 0.0
    %1327 = vmatpush1.msra.mxu0 0.0
    %1328 = vmatprep.subr.mxu0 0.0
    %1329 = vmatpush1.msra.mxu0 0.0
    %1330 = vmatprep.subr.mxu0 0.0
    %1331 = vmatpush1.msra.mxu0 0.0
    %1332 = vmatprep.subr.mxu0 0.0
    %1333 = vmatpush1.msra.mxu0 0.0
    %1334 = vmatprep.subr.mxu0 0.0
    %1335 = vmatpush1.msra.mxu0 0.0
    %1336 = vmatprep.subr.mxu0 0.0
    %1337 = vmatpush1.msra.mxu0 0.0
    %1338 = vmatprep.subr.mxu0 0.0
    %1339 = vmatpush1.msra.mxu0 0.0
    %1340 = vmatprep.subr.mxu0 0.0
    %1341 = vmatpush1.msra.mxu0 0.0
    %1342 = vmatprep.subr.mxu0 0.0
    %1343 = vmatpush1.msra.mxu0 0.0
    %1344 = vmatprep.subr.mxu0 0.0
    %1345 = vmatpush1.msra.mxu0 0.0
    %1346 = vmatprep.subr.mxu0 0.0
    %1347 = vmatpush1.msra.mxu0 0.0
    %1348 = vmatprep.subr.mxu0 0.0
    %1349 = vmatpush1.msra.mxu0 0.0
    %1350 = vmatprep.subr.mxu0 0.0
    %1351 = vmatpush1.msra.mxu0 0.0
    %1352 = vmatprep.subr.mxu0 0.0
    %1353 = vmatpush1.msra.mxu0 0.0
    %1354 = vmatprep.mubr.f32.mxu0 0.0
    %1355 = vmatmul.mubr.f32.gmra.mrb[0].mxu0 %v1288
    %v1356 = vpop.f32.mrb[0].mxu0
    %v1357 = vadd.f32 0.0, %v1356
    %v1358 = vpop.f32.mrb[0].mxu0
    %1359 = vdwg.mxu0
    %1361 = vrot.lane.b32.xlu0 %v1357, 24
    %v1362 = vpop.permute.xlu0 %1361
    %vm1364 = vcmask 228544
    %1365 = vst.msk [vmem:[#allocation3] sm:$0xff] %vm1364, %v1362
    %v1366 = vld [vmem:[#allocation2] sm:$0xff]
    %1368 = vrot.lane.b32.xlu0 %v1366, 100
    %v1369 = vpop.permute.xlu0 %1368
    %1370 = vrot.lane.b32.xlu0 %v1366, 68
    %v1371 = vpop.permute.xlu0 %1370
    %v1372 = vsel %vm164, %v1369, 0
    %v1374 = vsel %vm164, %v1371, 0
    %1376 = vmatprep.subr.mxu0 0.0
    %1377 = vmatpush1.xpose.msra.mxu0 %v1374
    %1378 = vmatprep.subr.mxu0 0.0
    %1379 = vmatpush1.xpose.msra.mxu0 0.0
    %1380 = vmatprep.subr.mxu0 0.0
    %1381 = vmatpush1.xpose.msra.mxu0 0.0
    %1382 = vmatprep.subr.mxu0 0.0
    %1383 = vmatpush1.xpose.msra.mxu0 0.0
    %1384 = vmatprep.subr.mxu0 0.0
    %1385 = vmatpush1.xpose.msra.mxu0 0.0
    %1386 = vmatprep.subr.mxu0 0.0
    %1387 = vmatpush1.xpose.msra.mxu0 0.0
    %1388 = vmatprep.subr.mxu0 0.0
    %1389 = vmatpush1.xpose.msra.mxu0 0.0
    %1390 = vmatprep.subr.mxu0 0.0
    %1391 = vmatpush1.xpose.msra.mxu0 0.0
    %1392 = vmatprep.subr.mxu0 0.0
    %1393 = vmatpush1.xpose.msra.mxu0 0.0
    %1394 = vmatprep.subr.mxu0 0.0
    %1395 = vmatpush1.xpose.msra.mxu0 0.0
    %1396 = vmatprep.subr.mxu0 0.0
    %1397 = vmatpush1.xpose.msra.mxu0 0.0
    %1398 = vmatprep.subr.mxu0 0.0
    %1399 = vmatpush1.xpose.msra.mxu0 0.0
    %1400 = vmatprep.subr.mxu0 0.0
    %1401 = vmatpush1.xpose.msra.mxu0 0.0
    %1402 = vmatprep.subr.mxu0 0.0
    %1403 = vmatpush1.xpose.msra.mxu0 0.0
    %1404 = vmatprep.subr.mxu0 0.0
    %1405 = vmatpush1.xpose.msra.mxu0 0.0
    %1406 = vmatprep.subr.mxu0 0.0
    %1407 = vmatpush1.xpose.msra.mxu0 0.0
    %1408 = vmatprep.subr.mxu0 0.0
    %1409 = vmatpush1.xpose.msra.mxu0 0.0
    %1410 = vmatprep.subr.mxu0 0.0
    %1411 = vmatpush1.xpose.msra.mxu0 0.0
    %1412 = vmatprep.subr.mxu0 0.0
    %1413 = vmatpush1.xpose.msra.mxu0 0.0
    %1414 = vmatprep.subr.mxu0 0.0
    %1415 = vmatpush1.xpose.msra.mxu0 0.0
    %1416 = vmatprep.subr.mxu0 0.0
    %1417 = vmatpush1.xpose.msra.mxu0 0.0
    %1418 = vmatprep.subr.mxu0 0.0
    %1419 = vmatpush1.xpose.msra.mxu0 0.0
    %1420 = vmatprep.subr.mxu0 0.0
    %1421 = vmatpush1.xpose.msra.mxu0 0.0
    %1422 = vmatprep.subr.mxu0 0.0
    %1423 = vmatpush1.xpose.msra.mxu0 0.0
    %1424 = vmatprep.subr.mxu0 0.0
    %1425 = vmatpush1.xpose.msra.mxu0 0.0
    %1426 = vmatprep.subr.mxu0 0.0
    %1427 = vmatpush1.xpose.msra.mxu0 0.0
    %1428 = vmatprep.subr.mxu0 0.0
    %1429 = vmatpush1.xpose.msra.mxu0 0.0
    %1430 = vmatprep.subr.mxu0 0.0
    %1431 = vmatpush1.xpose.msra.mxu0 0.0
    %1432 = vmatprep.subr.mxu0 0.0
    %1433 = vmatpush1.xpose.msra.mxu0 0.0
    %1434 = vmatprep.subr.mxu0 0.0
    %1435 = vmatpush1.xpose.msra.mxu0 0.0
    %1436 = vmatprep.subr.mxu0 0.0
    %1437 = vmatpush1.xpose.msra.mxu0 0.0
    %1438 = vmatprep.subr.mxu0 0.0
    %1439 = vmatpush1.xpose.msra.mxu0 0.0
    %1440 = vmatprep.mubr.f32.mxu0 0.0
    %1441 = vmatmul.mubr.f32.gmra.mrb[0].mxu0 %v1372
    %v1442 = vpop.f32.mrb[0].mxu0
    %v1443 = vadd.f32 0.5, %v1442
    %v1444 = vpop.f32.mrb[0].mxu0
    %1445 = vdwg.mxu0
    %v1446 = vsel %vm239, %v1443, -inf
    %1447 = vmax.xlane.f32.xlu0 %v1446
    %v1448 = vpop.xlane.xlu0 %1447
    %v1449 = vsub.f32 %v1443, %v1448
    %v1450 = vmul.f32 %v1449, 1.442695
    %v1451 = vpow.pop %v1450
    %v1452 = vsel %vm239, %v1451, 0.0
    %1453 = vadd.xlane.f32.xlu0 %v1452
    %v1454 = vpop.xlane.xlu0 %1453
    %v1455 = vrcp.pop %v1454
    %v1456 = vmul.f32 %v1451, %v1455
    %1457 = vrot.lane.b32.xlu0 %v1366, 36
    %v1458 = vpop.permute.xlu0 %1457
    %v1461 = vsel %vm239, %v1456, 0
    %1463 = vmatprep.subr.mxu0 0.0
    %1464 = vmatpush1.msra.mxu0 %v1458
    %1465 = vmatprep.subr.mxu0 0.0
    %1466 = vmatpush1.msra.mxu0 0.0
    %1467 = vmatprep.subr.mxu0 0.0
    %1468 = vmatpush1.msra.mxu0 0.0
    %1469 = vmatprep.subr.mxu0 0.0
    %1470 = vmatpush1.msra.mxu0 0.0
    %1471 = vmatprep.subr.mxu0 0.0
    %1472 = vmatpush1.msra.mxu0 0.0
    %1473 = vmatprep.subr.mxu0 0.0
    %1474 = vmatpush1.msra.mxu0 0.0
    %1475 = vmatprep.subr.mxu0 0.0
    %1476 = vmatpush1.msra.mxu0 0.0
    %1477 = vmatprep.subr.mxu0 0.0
    %1478 = vmatpush1.msra.mxu0 0.0
    %1479 = vmatprep.subr.mxu0 0.0
    %1480 = vmatpush1.msra.mxu0 0.0
    %1481 = vmatprep.subr.mxu0 0.0
    %1482 = vmatpush1.msra.mxu0 0.0
    %1483 = vmatprep.subr.mxu0 0.0
    %1484 = vmatpush1.msra.mxu0 0.0
    %1485 = vmatprep.subr.mxu0 0.0
    %1486 = vmatpush1.msra.mxu0 0.0
    %1487 = vmatprep.subr.mxu0 0.0
    %1488 = vmatpush1.msra.mxu0 0.0
    %1489 = vmatprep.subr.mxu0 0.0
    %1490 = vmatpush1.msra.mxu0 0.0
    %1491 = vmatprep.subr.mxu0 0.0
    %1492 = vmatpush1.msra.mxu0 0.0
    %1493 = vmatprep.subr.mxu0 0.0
    %1494 = vmatpush1.msra.mxu0 0.0
    %1495 = vmatprep.subr.mxu0 0.0
    %1496 = vmatpush1.msra.mxu0 0.0
    %1497 = vmatprep.subr.mxu0 0.0
    %1498 = vmatpush1.msra.mxu0 0.0
    %1499 = vmatprep.subr.mxu0 0.0
    %1500 = vmatpush1.msra.mxu0 0.0
    %1501 = vmatprep.subr.mxu0 0.0
    %1502 = vmatpush1.msra.mxu0 0.0
    %1503 = vmatprep.subr.mxu0 0.0
    %1504 = vmatpush1.msra.mxu0 0.0
    %1505 = vmatprep.subr.mxu0 0.0
    %1506 = vmatpush1.msra.mxu0 0.0
    %1507 = vmatprep.subr.mxu0 0.0
    %1508 = vmatpush1.msra.mxu0 0.0
    %1509 = vmatprep.subr.mxu0 0.0
    %1510 = vmatpush1.msra.mxu0 0.0
    %1511 = vmatprep.subr.mxu0 0.0
    %1512 = vmatpush1.msra.mxu0 0.0
    %1513 = vmatprep.subr.mxu0 0.0
    %1514 = vmatpush1.msra.mxu0 0.0
    %1515 = vmatprep.subr.mxu0 0.0
    %1516 = vmatpush1.msra.mxu0 0.0
    %1517 = vmatprep.subr.mxu0 0.0
    %1518 = vmatpush1.msra.mxu0 0.0
    %1519 = vmatprep.subr.mxu0 0.0
    %1520 = vmatpush1.msra.mxu0 0.0
    %1521 = vmatprep.subr.mxu0 0.0
    %1522 = vmatpush1.msra.mxu0 0.0
    %1523 = vmatprep.subr.mxu0 0.0
    %1524 = vmatpush1.msra.mxu0 0.0
    %1525 = vmatprep.subr.mxu0 0.0
    %1526 = vmatpush1.msra.mxu0 0.0
    %1527 = vmatprep.mubr.f32.mxu0 0.0
    %1528 = vmatmul.mubr.f32.gmra.mrb[0].mxu0 %v1461
    %v1529 = vpop.f32.mrb[0].mxu0
    %v1530 = vadd.f32 0.0, %v1529
    %v1531 = vpop.f32.mrb[0].mxu0
    %1532 = vdwg.mxu0
    %1534 = vrot.lane.b32.xlu0 %v1530, 28
    %v1535 = vpop.permute.xlu0 %1534
    %vm1537 = vcmask 261344
    %1538 = vst.msk [vmem:[#allocation3] sm:$0xff] %vm1537, %v1535
    %v1539 = vld [vmem:[#allocation2 + $0x8] sm:$0xff]
    %1541 = vrot.lane.b32.xlu0 %v1539, 96
    %v1542 = vpop.permute.xlu0 %1541
    %v1543 = vsel %vm164, %v1539, 0
    %v1545 = vsel %vm164, %v1542, 0
    %1547 = vmatprep.subr.mxu0 0.0
    %1548 = vmatpush1.xpose.msra.mxu0 %v1545
    %1549 = vmatprep.subr.mxu0 0.0
    %1550 = vmatpush1.xpose.msra.mxu0 0.0
    %1551 = vmatprep.subr.mxu0 0.0
    %1552 = vmatpush1.xpose.msra.mxu0 0.0
    %1553 = vmatprep.subr.mxu0 0.0
    %1554 = vmatpush1.xpose.msra.mxu0 0.0
    %1555 = vmatprep.subr.mxu0 0.0
    %1556 = vmatpush1.xpose.msra.mxu0 0.0
    %1557 = vmatprep.subr.mxu0 0.0
    %1558 = vmatpush1.xpose.msra.mxu0 0.0
    %1559 = vmatprep.subr.mxu0 0.0
    %1560 = vmatpush1.xpose.msra.mxu0 0.0
    %1561 = vmatprep.subr.mxu0 0.0
    %1562 = vmatpush1.xpose.msra.mxu0 0.0
    %1563 = vmatprep.subr.mxu0 0.0
    %1564 = vmatpush1.xpose.msra.mxu0 0.0
    %1565 = vmatprep.subr.mxu0 0.0
    %1566 = vmatpush1.xpose.msra.mxu0 0.0
    %1567 = vmatprep.subr.mxu0 0.0
    %1568 = vmatpush1.xpose.msra.mxu0 0.0
    %1569 = vmatprep.subr.mxu0 0.0
    %1570 = vmatpush1.xpose.msra.mxu0 0.0
    %1571 = vmatprep.subr.mxu0 0.0
    %1572 = vmatpush1.xpose.msra.mxu0 0.0
    %1573 = vmatprep.subr.mxu0 0.0
    %1574 = vmatpush1.xpose.msra.mxu0 0.0
    %1575 = vmatprep.subr.mxu0 0.0
    %1576 = vmatpush1.xpose.msra.mxu0 0.0
    %1577 = vmatprep.subr.mxu0 0.0
    %1578 = vmatpush1.xpose.msra.mxu0 0.0
    %1579 = vmatprep.subr.mxu0 0.0
    %1580 = vmatpush1.xpose.msra.mxu0 0.0
    %1581 = vmatprep.subr.mxu0 0.0
    %1582 = vmatpush1.xpose.msra.mxu0 0.0
    %1583 = vmatprep.subr.mxu0 0.0
    %1584 = vmatpush1.xpose.msra.mxu0 0.0
    %1585 = vmatprep.subr.mxu0 0.0
    %1586 = vmatpush1.xpose.msra.mxu0 0.0
    %1587 = vmatprep.subr.mxu0 0.0
    %1588 = vmatpush1.xpose.msra.mxu0 0.0
    %1589 = vmatprep.subr.mxu0 0.0
    %1590 = vmatpush1.xpose.msra.mxu0 0.0
    %1591 = vmatprep.subr.mxu0 0.0
    %1592 = vmatpush1.xpose.msra.mxu0 0.0
    %1593 = vmatprep.subr.mxu0 0.0
    %1594 = vmatpush1.xpose.msra.mxu0 0.0
    %1595 = vmatprep.subr.mxu0 0.0
    %1596 = vmatpush1.xpose.msra.mxu0 0.0
    %1597 = vmatprep.subr.mxu0 0.0
    %1598 = vmatpush1.xpose.msra.mxu0 0.0
    %1599 = vmatprep.subr.mxu0 0.0
    %1600 = vmatpush1.xpose.msra.mxu0 0.0
    %1601 = vmatprep.subr.mxu0 0.0
    %1602 = vmatpush1.xpose.msra.mxu0 0.0
    %1603 = vmatprep.subr.mxu0 0.0
    %1604 = vmatpush1.xpose.msra.mxu0 0.0
    %1605 = vmatprep.subr.mxu0 0.0
    %1606 = vmatpush1.xpose.msra.mxu0 0.0
    %1607 = vmatprep.subr.mxu0 0.0
    %1608 = vmatpush1.xpose.msra.mxu0 0.0
    %1609 = vmatprep.subr.mxu0 0.0
    %1610 = vmatpush1.xpose.msra.mxu0 0.0
    %1611 = vmatprep.mubr.f32.mxu0 0.0
    %1612 = vmatmul.mubr.f32.gmra.mrb[0].mxu0 %v1543
    %v1613 = vpop.f32.mrb[0].mxu0
    %v1614 = vadd.f32 0.5, %v1613
    %v1615 = vpop.f32.mrb[0].mxu0
    %1616 = vdwg.mxu0
    %v1617 = vsel %vm239, %v1614, -inf
    %1618 = vmax.xlane.f32.xlu0 %v1617
    %v1619 = vpop.xlane.xlu0 %1618
    %v1620 = vsub.f32 %v1614, %v1619
    %v1621 = vmul.f32 %v1620, 1.442695
    %v1622 = vpow.pop %v1621
    %v1623 = vsel %vm239, %v1622, 0.0
    %1624 = vadd.xlane.f32.xlu0 %v1623
    %v1625 = vpop.xlane.xlu0 %1624
    %v1626 = vrcp.pop %v1625
    %v1627 = vmul.f32 %v1622, %v1626
    %1628 = vrot.lane.b32.xlu0 %v1539, 64
    %v1629 = vpop.permute.xlu0 %1628
    %v1632 = vsel %vm239, %v1627, 0
    %1634 = vmatprep.subr.mxu0 0.0
    %1635 = vmatpush1.msra.mxu0 %v1629
    %1636 = vmatprep.subr.mxu0 0.0
    %1637 = vmatpush1.msra.mxu0 0.0
    %1638 = vmatprep.subr.mxu0 0.0
    %1639 = vmatpush1.msra.mxu0 0.0
    %1640 = vmatprep.subr.mxu0 0.0
    %1641 = vmatpush1.msra.mxu0 0.0
    %1642 = vmatprep.subr.mxu0 0.0
    %1643 = vmatpush1.msra.mxu0 0.0
    %1644 = vmatprep.subr.mxu0 0.0
    %1645 = vmatpush1.msra.mxu0 0.0
    %1646 = vmatprep.subr.mxu0 0.0
    %1647 = vmatpush1.msra.mxu0 0.0
    %1648 = vmatprep.subr.mxu0 0.0
    %1649 = vmatpush1.msra.mxu0 0.0
    %1650 = vmatprep.subr.mxu0 0.0
    %1651 = vmatpush1.msra.mxu0 0.0
    %1652 = vmatprep.subr.mxu0 0.0
    %1653 = vmatpush1.msra.mxu0 0.0
    %1654 = vmatprep.subr.mxu0 0.0
    %1655 = vmatpush1.msra.mxu0 0.0
    %1656 = vmatprep.subr.mxu0 0.0
    %1657 = vmatpush1.msra.mxu0 0.0
    %1658 = vmatprep.subr.mxu0 0.0
    %1659 = vmatpush1.msra.mxu0 0.0
    %1660 = vmatprep.subr.mxu0 0.0
    %1661 = vmatpush1.msra.mxu0 0.0
    %1662 = vmatprep.subr.mxu0 0.0
    %1663 = vmatpush1.msra.mxu0 0.0
    %1664 = vmatprep.subr.mxu0 0.0
    %1665 = vmatpush1.msra.mxu0 0.0
    %1666 = vmatprep.subr.mxu0 0.0
    %1667 = vmatpush1.msra.mxu0 0.0
    %1668 = vmatprep.subr.mxu0 0.0
    %1669 = vmatpush1.msra.mxu0 0.0
    %1670 = vmatprep.subr.mxu0 0.0
    %1671 = vmatpush1.msra.mxu0 0.0
    %1672 = vmatprep.subr.mxu0 0.0
    %1673 = vmatpush1.msra.mxu0 0.0
    %1674 = vmatprep.subr.mxu0 0.0
    %1675 = vmatpush1.msra.mxu0 0.0
    %1676 = vmatprep.subr.mxu0 0.0
    %1677 = vmatpush1.msra.mxu0 0.0
    %1678 = vmatprep.subr.mxu0 0.0
    %1679 = vmatpush1.msra.mxu0 0.0
    %1680 = vmatprep.subr.mxu0 0.0
    %1681 = vmatpush1.msra.mxu0 0.0
    %1682 = vmatprep.subr.mxu0 0.0
    %1683 = vmatpush1.msra.mxu0 0.0
    %1684 = vmatprep.subr.mxu0 0.0
    %1685 = vmatpush1.msra.mxu0 0.0
    %1686 = vmatprep.subr.mxu0 0.0
    %1687 = vmatpush1.msra.mxu0 0.0
    %1688 = vmatprep.subr.mxu0 0.0
    %1689 = vmatpush1.msra.mxu0 0.0
    %1690 = vmatprep.subr.mxu0 0.0
    %1691 = vmatpush1.msra.mxu0 0.0
    %1692 = vmatprep.subr.mxu0 0.0
    %1693 = vmatpush1.msra.mxu0 0.0
    %1694 = vmatprep.subr.mxu0 0.0
    %1695 = vmatpush1.msra.mxu0 0.0
    %1696 = vmatprep.subr.mxu0 0.0
    %1697 = vmatpush1.msra.mxu0 0.0
    %1698 = vmatprep.mubr.f32.mxu0 0.0
    %1699 = vmatmul.mubr.f32.gmra.mrb[0].mxu0 %v1632
    %v1700 = vpop.f32.mrb[0].mxu0
    %v1701 = vadd.f32 0.0, %v1700
    %v1702 = vpop.f32.mrb[0].mxu0
    %1703 = vdwg.mxu0
    %1704 = vst.msk [vmem:[#allocation3 + $0x8] sm:$0xff] %vm164, %v1701
    %v1705 = vld [vmem:[#allocation2 + $0x8] sm:$0xff]
    %1707 = vrot.lane.b32.xlu0 %v1705, 124
    %v1708 = vpop.permute.xlu0 %1707
    %1709 = vrot.lane.b32.xlu0 %v1705, 92
    %v1710 = vpop.permute.xlu0 %1709
    %v1711 = vsel %vm164, %v1708, 0
    %v1713 = vsel %vm164, %v1710, 0
    %1715 = vmatprep.subr.mxu0 0.0
    %1716 = vmatpush1.xpose.msra.mxu0 %v1713
    %1717 = vmatprep.subr.mxu0 0.0
    %1718 = vmatpush1.xpose.msra.mxu0 0.0
    %1719 = vmatprep.subr.mxu0 0.0
    %1720 = vmatpush1.xpose.msra.mxu0 0.0
    %1721 = vmatprep.subr.mxu0 0.0
    %1722 = vmatpush1.xpose.msra.mxu0 0.0
    %1723 = vmatprep.subr.mxu0 0.0
    %1724 = vmatpush1.xpose.msra.mxu0 0.0
    %1725 = vmatprep.subr.mxu0 0.0
    %1726 = vmatpush1.xpose.msra.mxu0 0.0
    %1727 = vmatprep.subr.mxu0 0.0
    %1728 = vmatpush1.xpose.msra.mxu0 0.0
    %1729 = vmatprep.subr.mxu0 0.0
    %1730 = vmatpush1.xpose.msra.mxu0 0.0
    %1731 = vmatprep.subr.mxu0 0.0
    %1732 = vmatpush1.xpose.msra.mxu0 0.0
    %1733 = vmatprep.subr.mxu0 0.0
    %1734 = vmatpush1.xpose.msra.mxu0 0.0
    %1735 = vmatprep.subr.mxu0 0.0
    %1736 = vmatpush1.xpose.msra.mxu0 0.0
    %1737 = vmatprep.subr.mxu0 0.0
    %1738 = vmatpush1.xpose.msra.mxu0 0.0
    %1739 = vmatprep.subr.mxu0 0.0
    %1740 = vmatpush1.xpose.msra.mxu0 0.0
    %1741 = vmatprep.subr.mxu0 0.0
    %1742 = vmatpush1.xpose.msra.mxu0 0.0
    %1743 = vmatprep.subr.mxu0 0.0
    %1744 = vmatpush1.xpose.msra.mxu0 0.0
    %1745 = vmatprep.subr.mxu0 0.0
    %1746 = vmatpush1.xpose.msra.mxu0 0.0
    %1747 = vmatprep.subr.mxu0 0.0
    %1748 = vmatpush1.xpose.msra.mxu0 0.0
    %1749 = vmatprep.subr.mxu0 0.0
    %1750 = vmatpush1.xpose.msra.mxu0 0.0
    %1751 = vmatprep.subr.mxu0 0.0
    %1752 = vmatpush1.xpose.msra.mxu0 0.0
    %1753 = vmatprep.subr.mxu0 0.0
    %1754 = vmatpush1.xpose.msra.mxu0 0.0
    %1755 = vmatprep.subr.mxu0 0.0
    %1756 = vmatpush1.xpose.msra.mxu0 0.0
    %1757 = vmatprep.subr.mxu0 0.0
    %1758 = vmatpush1.xpose.msra.mxu0 0.0
    %1759 = vmatprep.subr.mxu0 0.0
    %1760 = vmatpush1.xpose.msra.mxu0 0.0
    %1761 = vmatprep.subr.mxu0 0.0
    %1762 = vmatpush1.xpose.msra.mxu0 0.0
    %1763 = vmatprep.subr.mxu0 0.0
    %1764 = vmatpush1.xpose.msra.mxu0 0.0
    %1765 = vmatprep.subr.mxu0 0.0
    %1766 = vmatpush1.xpose.msra.mxu0 0.0
    %1767 = vmatprep.subr.mxu0 0.0
    %1768 = vmatpush1.xpose.msra.mxu0 0.0
    %1769 = vmatprep.subr.mxu0 0.0
    %1770 = vmatpush1.xpose.msra.mxu0 0.0
    %1771 = vmatprep.subr.mxu0 0.0
    %1772 = vmatpush1.xpose.msra.mxu0 0.0
    %1773 = vmatprep.subr.mxu0 0.0
    %1774 = vmatpush1.xpose.msra.mxu0 0.0
    %1775 = vmatprep.subr.mxu0 0.0
    %1776 = vmatpush1.xpose.msra.mxu0 0.0
    %1777 = vmatprep.subr.mxu0 0.0
    %1778 = vmatpush1.xpose.msra.mxu0 0.0
    %1779 = vmatprep.mubr.f32.mxu0 0.0
    %1780 = vmatmul.mubr.f32.gmra.mrb[0].mxu0 %v1711
    %v1781 = vpop.f32.mrb[0].mxu0
    %v1782 = vadd.f32 0.5, %v1781
    %v1783 = vpop.f32.mrb[0].mxu0
    %1784 = vdwg.mxu0
    %v1785 = vsel %vm239, %v1782, -inf
    %1786 = vmax.xlane.f32.xlu0 %v1785
    %v1787 = vpop.xlane.xlu0 %1786
    %v1788 = vsub.f32 %v1782, %v1787
    %v1789 = vmul.f32 %v1788, 1.442695
    %v1790 = vpow.pop %v1789
    %v1791 = vsel %vm239, %v1790, 0.0
    %1792 = vadd.xlane.f32.xlu0 %v1791
    %v1793 = vpop.xlane.xlu0 %1792
    %v1794 = vrcp.pop %v1793
    %v1795 = vmul.f32 %v1790, %v1794
    %1796 = vrot.lane.b32.xlu0 %v1705, 60
    %v1797 = vpop.permute.xlu0 %1796
    %v1800 = vsel %vm239, %v1795, 0
    %1802 = vmatprep.subr.mxu0 0.0
    %1803 = vmatpush1.msra.mxu0 %v1797
    %1804 = vmatprep.subr.mxu0 0.0
    %1805 = vmatpush1.msra.mxu0 0.0
    %1806 = vmatprep.subr.mxu0 0.0
    %1807 = vmatpush1.msra.mxu0 0.0
    %1808 = vmatprep.subr.mxu0 0.0
    %1809 = vmatpush1.msra.mxu0 0.0
    %1810 = vmatprep.subr.mxu0 0.0
    %1811 = vmatpush1.msra.mxu0 0.0
    %1812 = vmatprep.subr.mxu0 0.0
    %1813 = vmatpush1.msra.mxu0 0.0
    %1814 = vmatprep.subr.mxu0 0.0
    %1815 = vmatpush1.msra.mxu0 0.0
    %1816 = vmatprep.subr.mxu0 0.0
    %1817 = vmatpush1.msra.mxu0 0.0
    %1818 = vmatprep.subr.mxu0 0.0
    %1819 = vmatpush1.msra.mxu0 0.0
    %1820 = vmatprep.subr.mxu0 0.0
    %1821 = vmatpush1.msra.mxu0 0.0
    %1822 = vmatprep.subr.mxu0 0.0
    %1823 = vmatpush1.msra.mxu0 0.0
    %1824 = vmatprep.subr.mxu0 0.0
    %1825 = vmatpush1.msra.mxu0 0.0
    %1826 = vmatprep.subr.mxu0 0.0
    %1827 = vmatpush1.msra.mxu0 0.0
    %1828 = vmatprep.subr.mxu0 0.0
    %1829 = vmatpush1.msra.mxu0 0.0
    %1830 = vmatprep.subr.mxu0 0.0
    %1831 = vmatpush1.msra.mxu0 0.0
    %1832 = vmatprep.subr.mxu0 0.0
    %1833 = vmatpush1.msra.mxu0 0.0
    %1834 = vmatprep.subr.mxu0 0.0
    %1835 = vmatpush1.msra.mxu0 0.0
    %1836 = vmatprep.subr.mxu0 0.0
    %1837 = vmatpush1.msra.mxu0 0.0
    %1838 = vmatprep.subr.mxu0 0.0
    %1839 = vmatpush1.msra.mxu0 0.0
    %1840 = vmatprep.subr.mxu0 0.0
    %1841 = vmatpush1.msra.mxu0 0.0
    %1842 = vmatprep.subr.mxu0 0.0
    %1843 = vmatpush1.msra.mxu0 0.0
    %1844 = vmatprep.subr.mxu0 0.0
    %1845 = vmatpush1.msra.mxu0 0.0
    %1846 = vmatprep.subr.mxu0 0.0
    %1847 = vmatpush1.msra.mxu0 0.0
    %1848 = vmatprep.subr.mxu0 0.0
    %1849 = vmatpush1.msra.mxu0 0.0
    %1850 = vmatprep.subr.mxu0 0.0
    %1851 = vmatpush1.msra.mxu0 0.0
    %1852 = vmatprep.subr.mxu0 0.0
    %1853 = vmatpush1.msra.mxu0 0.0
    %1854 = vmatprep.subr.mxu0 0.0
    %1855 = vmatpush1.msra.mxu0 0.0
    %1856 = vmatprep.subr.mxu0 0.0
    %1857 = vmatpush1.msra.mxu0 0.0
    %1858 = vmatprep.subr.mxu0 0.0
    %1859 = vmatpush1.msra.mxu0 0.0
    %1860 = vmatprep.subr.mxu0 0.0
    %1861 = vmatpush1.msra.mxu0 0.0
    %1862 = vmatprep.subr.mxu0 0.0
    %1863 = vmatpush1.msra.mxu0 0.0
    %1864 = vmatprep.subr.mxu0 0.0
    %1865 = vmatpush1.msra.mxu0 0.0
    %1866 = vmatprep.mubr.f32.mxu0 0.0
    %1867 = vmatmul.mubr.f32.gmra.mrb[0].mxu0 %v1800
    %v1868 = vpop.f32.mrb[0].mxu0
    %v1869 = vadd.f32 0.0, %v1868
    %v1870 = vpop.f32.mrb[0].mxu0
    %1871 = vdwg.mxu0
    %1873 = vrot.lane.b32.xlu0 %v1869, 4
    %v1874 = vpop.permute.xlu0 %1873
    %1876 = vst.msk [vmem:[#allocation3 + $0x8] sm:$0xff] %vm499, %v1874
    %v1877 = vld [vmem:[#allocation2 + $0x8] sm:$0xff]
    %1879 = vrot.lane.b32.xlu0 %v1877, 120
    %v1880 = vpop.permute.xlu0 %1879
    %1881 = vrot.lane.b32.xlu0 %v1877, 88
    %v1882 = vpop.permute.xlu0 %1881
    %v1883 = vsel %vm164, %v1880, 0
    %v1885 = vsel %vm164, %v1882, 0
    %1887 = vmatprep.subr.mxu0 0.0
    %1888 = vmatpush1.xpose.msra.mxu0 %v1885
    %1889 = vmatprep.subr.mxu0 0.0
    %1890 = vmatpush1.xpose.msra.mxu0 0.0
    %1891 = vmatprep.subr.mxu0 0.0
    %1892 = vmatpush1.xpose.msra.mxu0 0.0
    %1893 = vmatprep.subr.mxu0 0.0
    %1894 = vmatpush1.xpose.msra.mxu0 0.0
    %1895 = vmatprep.subr.mxu0 0.0
    %1896 = vmatpush1.xpose.msra.mxu0 0.0
    %1897 = vmatprep.subr.mxu0 0.0
    %1898 = vmatpush1.xpose.msra.mxu0 0.0
    %1899 = vmatprep.subr.mxu0 0.0
    %1900 = vmatpush1.xpose.msra.mxu0 0.0
    %1901 = vmatprep.subr.mxu0 0.0
    %1902 = vmatpush1.xpose.msra.mxu0 0.0
    %1903 = vmatprep.subr.mxu0 0.0
    %1904 = vmatpush1.xpose.msra.mxu0 0.0
    %1905 = vmatprep.subr.mxu0 0.0
    %1906 = vmatpush1.xpose.msra.mxu0 0.0
    %1907 = vmatprep.subr.mxu0 0.0
    %1908 = vmatpush1.xpose.msra.mxu0 0.0
    %1909 = vmatprep.subr.mxu0 0.0
    %1910 = vmatpush1.xpose.msra.mxu0 0.0
    %1911 = vmatprep.subr.mxu0 0.0
    %1912 = vmatpush1.xpose.msra.mxu0 0.0
    %1913 = vmatprep.subr.mxu0 0.0
    %1914 = vmatpush1.xpose.msra.mxu0 0.0
    %1915 = vmatprep.subr.mxu0 0.0
    %1916 = vmatpush1.xpose.msra.mxu0 0.0
    %1917 = vmatprep.subr.mxu0 0.0
    %1918 = vmatpush1.xpose.msra.mxu0 0.0
    %1919 = vmatprep.subr.mxu0 0.0
    %1920 = vmatpush1.xpose.msra.mxu0 0.0
    %1921 = vmatprep.subr.mxu0 0.0
    %1922 = vmatpush1.xpose.msra.mxu0 0.0
    %1923 = vmatprep.subr.mxu0 0.0
    %1924 = vmatpush1.xpose.msra.mxu0 0.0
    %1925 = vmatprep.subr.mxu0 0.0
    %1926 = vmatpush1.xpose.msra.mxu0 0.0
    %1927 = vmatprep.subr.mxu0 0.0
    %1928 = vmatpush1.xpose.msra.mxu0 0.0
    %1929 = vmatprep.subr.mxu0 0.0
    %1930 = vmatpush1.xpose.msra.mxu0 0.0
    %1931 = vmatprep.subr.mxu0 0.0
    %1932 = vmatpush1.xpose.msra.mxu0 0.0
    %1933 = vmatprep.subr.mxu0 0.0
    %1934 = vmatpush1.xpose.msra.mxu0 0.0
    %1935 = vmatprep.subr.mxu0 0.0
    %1936 = vmatpush1.xpose.msra.mxu0 0.0
    %1937 = vmatprep.subr.mxu0 0.0
    %1938 = vmatpush1.xpose.msra.mxu0 0.0
    %1939 = vmatprep.subr.mxu0 0.0
    %1940 = vmatpush1.xpose.msra.mxu0 0.0
    %1941 = vmatprep.subr.mxu0 0.0
    %1942 = vmatpush1.xpose.msra.mxu0 0.0
    %1943 = vmatprep.subr.mxu0 0.0
    %1944 = vmatpush1.xpose.msra.mxu0 0.0
    %1945 = vmatprep.subr.mxu0 0.0
    %1946 = vmatpush1.xpose.msra.mxu0 0.0
    %1947 = vmatprep.subr.mxu0 0.0
    %1948 = vmatpush1.xpose.msra.mxu0 0.0
    %1949 = vmatprep.subr.mxu0 0.0
    %1950 = vmatpush1.xpose.msra.mxu0 0.0
    %1951 = vmatprep.mubr.f32.mxu0 0.0
    %1952 = vmatmul.mubr.f32.gmra.mrb[0].mxu0 %v1883
    %v1953 = vpop.f32.mrb[0].mxu0
    %v1954 = vadd.f32 0.5, %v1953
    %v1955 = vpop.f32.mrb[0].mxu0
    %1956 = vdwg.mxu0
    %v1957 = vsel %vm239, %v1954, -inf
    %1958 = vmax.xlane.f32.xlu0 %v1957
    %v1959 = vpop.xlane.xlu0 %1958
    %v1960 = vsub.f32 %v1954, %v1959
    %v1961 = vmul.f32 %v1960, 1.442695
    %v1962 = vpow.pop %v1961
    %v1963 = vsel %vm239, %v1962, 0.0
    %1964 = vadd.xlane.f32.xlu0 %v1963
    %v1965 = vpop.xlane.xlu0 %1964
    %v1966 = vrcp.pop %v1965
    %v1967 = vmul.f32 %v1962, %v1966
    %1968 = vrot.lane.b32.xlu0 %v1877, 56
    %v1969 = vpop.permute.xlu0 %1968
    %v1972 = vsel %vm239, %v1967, 0
    %1974 = vmatprep.subr.mxu0 0.0
    %1975 = vmatpush1.msra.mxu0 %v1969
    %1976 = vmatprep.subr.mxu0 0.0
    %1977 = vmatpush1.msra.mxu0 0.0
    %1978 = vmatprep.subr.mxu0 0.0
    %1979 = vmatpush1.msra.mxu0 0.0
    %1980 = vmatprep.subr.mxu0 0.0
    %1981 = vmatpush1.msra.mxu0 0.0
    %1982 = vmatprep.subr.mxu0 0.0
    %1983 = vmatpush1.msra.mxu0 0.0
    %1984 = vmatprep.subr.mxu0 0.0
    %1985 = vmatpush1.msra.mxu0 0.0
    %1986 = vmatprep.subr.mxu0 0.0
    %1987 = vmatpush1.msra.mxu0 0.0
    %1988 = vmatprep.subr.mxu0 0.0
    %1989 = vmatpush1.msra.mxu0 0.0
    %1990 = vmatprep.subr.mxu0 0.0
    %1991 = vmatpush1.msra.mxu0 0.0
    %1992 = vmatprep.subr.mxu0 0.0
    %1993 = vmatpush1.msra.mxu0 0.0
    %1994 = vmatprep.subr.mxu0 0.0
    %1995 = vmatpush1.msra.mxu0 0.0
    %1996 = vmatprep.subr.mxu0 0.0
    %1997 = vmatpush1.msra.mxu0 0.0
    %1998 = vmatprep.subr.mxu0 0.0
    %1999 = vmatpush1.msra.mxu0 0.0
    %2000 = vmatprep.subr.mxu0 0.0
    %2001 = vmatpush1.msra.mxu0 0.0
    %2002 = vmatprep.subr.mxu0 0.0
    %2003 = vmatpush1.msra.mxu0 0.0
    %2004 = vmatprep.subr.mxu0 0.0
    %2005 = vmatpush1.msra.mxu0 0.0
    %2006 = vmatprep.subr.mxu0 0.0
    %2007 = vmatpush1.msra.mxu0 0.0
    %2008 = vmatprep.subr.mxu0 0.0
    %2009 = vmatpush1.msra.mxu0 0.0
    %2010 = vmatprep.subr.mxu0 0.0
    %2011 = vmatpush1.msra.mxu0 0.0
    %2012 = vmatprep.subr.mxu0 0.0
    %2013 = vmatpush1.msra.mxu0 0.0
    %2014 = vmatprep.subr.mxu0 0.0
    %2015 = vmatpush1.msra.mxu0 0.0
    %2016 = vmatprep.subr.mxu0 0.0
    %2017 = vmatpush1.msra.mxu0 0.0
    %2018 = vmatprep.subr.mxu0 0.0
    %2019 = vmatpush1.msra.mxu0 0.0
    %2020 = vmatprep.subr.mxu0 0.0
    %2021 = vmatpush1.msra.mxu0 0.0
    %2022 = vmatprep.subr.mxu0 0.0
    %2023 = vmatpush1.msra.mxu0 0.0
    %2024 = vmatprep.subr.mxu0 0.0
    %2025 = vmatpush1.msra.mxu0 0.0
    %2026 = vmatprep.subr.mxu0 0.0
    %2027 = vmatpush1.msra.mxu0 0.0
    %2028 = vmatprep.subr.mxu0 0.0
    %2029 = vmatpush1.msra.mxu0 0.0
    %2030 = vmatprep.subr.mxu0 0.0
    %2031 = vmatpush1.msra.mxu0 0.0
    %2032 = vmatprep.subr.mxu0 0.0
    %2033 = vmatpush1.msra.mxu0 0.0
    %2034 = vmatprep.subr.mxu0 0.0
    %2035 = vmatpush1.msra.mxu0 0.0
    %2036 = vmatprep.subr.mxu0 0.0
    %2037 = vmatpush1.msra.mxu0 0.0
    %2038 = vmatprep.mubr.f32.mxu0 0.0
    %2039 = vmatmul.mubr.f32.gmra.mrb[0].mxu0 %v1972
    %v2040 = vpop.f32.mrb[0].mxu0
    %v2041 = vadd.f32 0.0, %v2040
    %v2042 = vpop.f32.mrb[0].mxu0
    %2043 = vdwg.mxu0
    %2045 = vrot.lane.b32.xlu0 %v2041, 8
    %v2046 = vpop.permute.xlu0 %2045
    %2048 = vst.msk [vmem:[#allocation3 + $0x8] sm:$0xff] %vm672, %v2046
    %v2049 = vld [vmem:[#allocation2 + $0x8] sm:$0xff]
    %2051 = vrot.lane.b32.xlu0 %v2049, 116
    %v2052 = vpop.permute.xlu0 %2051
    %2053 = vrot.lane.b32.xlu0 %v2049, 84
    %v2054 = vpop.permute.xlu0 %2053
    %v2055 = vsel %vm164, %v2052, 0
    %v2057 = vsel %vm164, %v2054, 0
    %2059 = vmatprep.subr.mxu0 0.0
    %2060 = vmatpush1.xpose.msra.mxu0 %v2057
    %2061 = vmatprep.subr.mxu0 0.0
    %2062 = vmatpush1.xpose.msra.mxu0 0.0
    %2063 = vmatprep.subr.mxu0 0.0
    %2064 = vmatpush1.xpose.msra.mxu0 0.0
    %2065 = vmatprep.subr.mxu0 0.0
    %2066 = vmatpush1.xpose.msra.mxu0 0.0
    %2067 = vmatprep.subr.mxu0 0.0
    %2068 = vmatpush1.xpose.msra.mxu0 0.0
    %2069 = vmatprep.subr.mxu0 0.0
    %2070 = vmatpush1.xpose.msra.mxu0 0.0
    %2071 = vmatprep.subr.mxu0 0.0
    %2072 = vmatpush1.xpose.msra.mxu0 0.0
    %2073 = vmatprep.subr.mxu0 0.0
    %2074 = vmatpush1.xpose.msra.mxu0 0.0
    %2075 = vmatprep.subr.mxu0 0.0
    %2076 = vmatpush1.xpose.msra.mxu0 0.0
    %2077 = vmatprep.subr.mxu0 0.0
    %2078 = vmatpush1.xpose.msra.mxu0 0.0
    %2079 = vmatprep.subr.mxu0 0.0
    %2080 = vmatpush1.xpose.msra.mxu0 0.0
    %2081 = vmatprep.subr.mxu0 0.0
    %2082 = vmatpush1.xpose.msra.mxu0 0.0
    %2083 = vmatprep.subr.mxu0 0.0
    %2084 = vmatpush1.xpose.msra.mxu0 0.0
    %2085 = vmatprep.subr.mxu0 0.0
    %2086 = vmatpush1.xpose.msra.mxu0 0.0
    %2087 = vmatprep.subr.mxu0 0.0
    %2088 = vmatpush1.xpose.msra.mxu0 0.0
    %2089 = vmatprep.subr.mxu0 0.0
    %2090 = vmatpush1.xpose.msra.mxu0 0.0
    %2091 = vmatprep.subr.mxu0 0.0
    %2092 = vmatpush1.xpose.msra.mxu0 0.0
    %2093 = vmatprep.subr.mxu0 0.0
    %2094 = vmatpush1.xpose.msra.mxu0 0.0
    %2095 = vmatprep.subr.mxu0 0.0
    %2096 = vmatpush1.xpose.msra.mxu0 0.0
    %2097 = vmatprep.subr.mxu0 0.0
    %2098 = vmatpush1.xpose.msra.mxu0 0.0
    %2099 = vmatprep.subr.mxu0 0.0
    %2100 = vmatpush1.xpose.msra.mxu0 0.0
    %2101 = vmatprep.subr.mxu0 0.0
    %2102 = vmatpush1.xpose.msra.mxu0 0.0
    %2103 = vmatprep.subr.mxu0 0.0
    %2104 = vmatpush1.xpose.msra.mxu0 0.0
    %2105 = vmatprep.subr.mxu0 0.0
    %2106 = vmatpush1.xpose.msra.mxu0 0.0
    %2107 = vmatprep.subr.mxu0 0.0
    %2108 = vmatpush1.xpose.msra.mxu0 0.0
    %2109 = vmatprep.subr.mxu0 0.0
    %2110 = vmatpush1.xpose.msra.mxu0 0.0
    %2111 = vmatprep.subr.mxu0 0.0
    %2112 = vmatpush1.xpose.msra.mxu0 0.0
    %2113 = vmatprep.subr.mxu0 0.0
    %2114 = vmatpush1.xpose.msra.mxu0 0.0
    %2115 = vmatprep.subr.mxu0 0.0
    %2116 = vmatpush1.xpose.msra.mxu0 0.0
    %2117 = vmatprep.subr.mxu0 0.0
    %2118 = vmatpush1.xpose.msra.mxu0 0.0
    %2119 = vmatprep.subr.mxu0 0.0
    %2120 = vmatpush1.xpose.msra.mxu0 0.0
    %2121 = vmatprep.subr.mxu0 0.0
    %2122 = vmatpush1.xpose.msra.mxu0 0.0
    %2123 = vmatprep.mubr.f32.mxu0 0.0
    %2124 = vmatmul.mubr.f32.gmra.mrb[0].mxu0 %v2055
    %v2125 = vpop.f32.mrb[0].mxu0
    %v2126 = vadd.f32 0.5, %v2125
    %v2127 = vpop.f32.mrb[0].mxu0
    %2128 = vdwg.mxu0
    %v2129 = vsel %vm239, %v2126, -inf
    %2130 = vmax.xlane.f32.xlu0 %v2129
    %v2131 = vpop.xlane.xlu0 %2130
    %v2132 = vsub.f32 %v2126, %v2131
    %v2133 = vmul.f32 %v2132, 1.442695
    %v2134 = vpow.pop %v2133
    %v2135 = vsel %vm239, %v2134, 0.0
    %2136 = vadd.xlane.f32.xlu0 %v2135
    %v2137 = vpop.xlane.xlu0 %2136
    %v2138 = vrcp.pop %v2137
    %v2139 = vmul.f32 %v2134, %v2138
    %2140 = vrot.lane.b32.xlu0 %v2049, 52
    %v2141 = vpop.permute.xlu0 %2140
    %v2144 = vsel %vm239, %v2139, 0
    %2146 = vmatprep.subr.mxu0 0.0
    %2147 = vmatpush1.msra.mxu0 %v2141
    %2148 = vmatprep.subr.mxu0 0.0
    %2149 = vmatpush1.msra.mxu0 0.0
    %2150 = vmatprep.subr.mxu0 0.0
    %2151 = vmatpush1.msra.mxu0 0.0
    %2152 = vmatprep.subr.mxu0 0.0
    %2153 = vmatpush1.msra.mxu0 0.0
    %2154 = vmatprep.subr.mxu0 0.0
    %2155 = vmatpush1.msra.mxu0 0.0
    %2156 = vmatprep.subr.mxu0 0.0
    %2157 = vmatpush1.msra.mxu0 0.0
    %2158 = vmatprep.subr.mxu0 0.0
    %2159 = vmatpush1.msra.mxu0 0.0
    %2160 = vmatprep.subr.mxu0 0.0
    %2161 = vmatpush1.msra.mxu0 0.0
    %2162 = vmatprep.subr.mxu0 0.0
    %2163 = vmatpush1.msra.mxu0 0.0
    %2164 = vmatprep.subr.mxu0 0.0
    %2165 = vmatpush1.msra.mxu0 0.0
    %2166 = vmatprep.subr.mxu0 0.0
    %2167 = vmatpush1.msra.mxu0 0.0
    %2168 = vmatprep.subr.mxu0 0.0
    %2169 = vmatpush1.msra.mxu0 0.0
    %2170 = vmatprep.subr.mxu0 0.0
    %2171 = vmatpush1.msra.mxu0 0.0
    %2172 = vmatprep.subr.mxu0 0.0
    %2173 = vmatpush1.msra.mxu0 0.0
    %2174 = vmatprep.subr.mxu0 0.0
    %2175 = vmatpush1.msra.mxu0 0.0
    %2176 = vmatprep.subr.mxu0 0.0
    %2177 = vmatpush1.msra.mxu0 0.0
    %2178 = vmatprep.subr.mxu0 0.0
    %2179 = vmatpush1.msra.mxu0 0.0
    %2180 = vmatprep.subr.mxu0 0.0
    %2181 = vmatpush1.msra.mxu0 0.0
    %2182 = vmatprep.subr.mxu0 0.0
    %2183 = vmatpush1.msra.mxu0 0.0
    %2184 = vmatprep.subr.mxu0 0.0
    %2185 = vmatpush1.msra.mxu0 0.0
    %2186 = vmatprep.subr.mxu0 0.0
    %2187 = vmatpush1.msra.mxu0 0.0
    %2188 = vmatprep.subr.mxu0 0.0
    %2189 = vmatpush1.msra.mxu0 0.0
    %2190 = vmatprep.subr.mxu0 0.0
    %2191 = vmatpush1.msra.mxu0 0.0
    %2192 = vmatprep.subr.mxu0 0.0
    %2193 = vmatpush1.msra.mxu0 0.0
    %2194 = vmatprep.subr.mxu0 0.0
    %2195 = vmatpush1.msra.mxu0 0.0
    %2196 = vmatprep.subr.mxu0 0.0
    %2197 = vmatpush1.msra.mxu0 0.0
    %2198 = vmatprep.subr.mxu0 0.0
    %2199 = vmatpush1.msra.mxu0 0.0
    %2200 = vmatprep.subr.mxu0 0.0
    %2201 = vmatpush1.msra.mxu0 0.0
    %2202 = vmatprep.subr.mxu0 0.0
    %2203 = vmatpush1.msra.mxu0 0.0
    %2204 = vmatprep.subr.mxu0 0.0
    %2205 = vmatpush1.msra.mxu0 0.0
    %2206 = vmatprep.subr.mxu0 0.0
    %2207 = vmatpush1.msra.mxu0 0.0
    %2208 = vmatprep.subr.mxu0 0.0
    %2209 = vmatpush1.msra.mxu0 0.0
    %2210 = vmatprep.mubr.f32.mxu0 0.0
    %2211 = vmatmul.mubr.f32.gmra.mrb[0].mxu0 %v2144
    %v2212 = vpop.f32.mrb[0].mxu0
    %v2213 = vadd.f32 0.0, %v2212
    %v2214 = vpop.f32.mrb[0].mxu0
    %2215 = vdwg.mxu0
    %2217 = vrot.lane.b32.xlu0 %v2213, 12
    %v2218 = vpop.permute.xlu0 %2217
    %2220 = vst.msk [vmem:[#allocation3 + $0x8] sm:$0xff] %vm845, %v2218
    %v2221 = vld [vmem:[#allocation2 + $0x8] sm:$0xff]
    %2223 = vrot.lane.b32.xlu0 %v2221, 112
    %v2224 = vpop.permute.xlu0 %2223
    %2225 = vrot.lane.b32.xlu0 %v2221, 80
    %v2226 = vpop.permute.xlu0 %2225
    %v2227 = vsel %vm164, %v2224, 0
    %v2229 = vsel %vm164, %v2226, 0
    %2231 = vmatprep.subr.mxu0 0.0
    %2232 = vmatpush1.xpose.msra.mxu0 %v2229
    %2233 = vmatprep.subr.mxu0 0.0
    %2234 = vmatpush1.xpose.msra.mxu0 0.0
    %2235 = vmatprep.subr.mxu0 0.0
    %2236 = vmatpush1.xpose.msra.mxu0 0.0
    %2237 = vmatprep.subr.mxu0 0.0
    %2238 = vmatpush1.xpose.msra.mxu0 0.0
    %2239 = vmatprep.subr.mxu0 0.0
    %2240 = vmatpush1.xpose.msra.mxu0 0.0
    %2241 = vmatprep.subr.mxu0 0.0
    %2242 = vmatpush1.xpose.msra.mxu0 0.0
    %2243 = vmatprep.subr.mxu0 0.0
    %2244 = vmatpush1.xpose.msra.mxu0 0.0
    %2245 = vmatprep.subr.mxu0 0.0
    %2246 = vmatpush1.xpose.msra.mxu0 0.0
    %2247 = vmatprep.subr.mxu0 0.0
    %2248 = vmatpush1.xpose.msra.mxu0 0.0
    %2249 = vmatprep.subr.mxu0 0.0
    %2250 = vmatpush1.xpose.msra.mxu0 0.0
    %2251 = vmatprep.subr.mxu0 0.0
    %2252 = vmatpush1.xpose.msra.mxu0 0.0
    %2253 = vmatprep.subr.mxu0 0.0
    %2254 = vmatpush1.xpose.msra.mxu0 0.0
    %2255 = vmatprep.subr.mxu0 0.0
    %2256 = vmatpush1.xpose.msra.mxu0 0.0
    %2257 = vmatprep.subr.mxu0 0.0
    %2258 = vmatpush1.xpose.msra.mxu0 0.0
    %2259 = vmatprep.subr.mxu0 0.0
    %2260 = vmatpush1.xpose.msra.mxu0 0.0
    %2261 = vmatprep.subr.mxu0 0.0
    %2262 = vmatpush1.xpose.msra.mxu0 0.0
    %2263 = vmatprep.subr.mxu0 0.0
    %2264 = vmatpush1.xpose.msra.mxu0 0.0
    %2265 = vmatprep.subr.mxu0 0.0
    %2266 = vmatpush1.xpose.msra.mxu0 0.0
    %2267 = vmatprep.subr.mxu0 0.0
    %2268 = vmatpush1.xpose.msra.mxu0 0.0
    %2269 = vmatprep.subr.mxu0 0.0
    %2270 = vmatpush1.xpose.msra.mxu0 0.0
    %2271 = vmatprep.subr.mxu0 0.0
    %2272 = vmatpush1.xpose.msra.mxu0 0.0
    %2273 = vmatprep.subr.mxu0 0.0
    %2274 = vmatpush1.xpose.msra.mxu0 0.0
    %2275 = vmatprep.subr.mxu0 0.0
    %2276 = vmatpush1.xpose.msra.mxu0 0.0
    %2277 = vmatprep.subr.mxu0 0.0
    %2278 = vmatpush1.xpose.msra.mxu0 0.0
    %2279 = vmatprep.subr.mxu0 0.0
    %2280 = vmatpush1.xpose.msra.mxu0 0.0
    %2281 = vmatprep.subr.mxu0 0.0
    %2282 = vmatpush1.xpose.msra.mxu0 0.0
    %2283 = vmatprep.subr.mxu0 0.0
    %2284 = vmatpush1.xpose.msra.mxu0 0.0
    %2285 = vmatprep.subr.mxu0 0.0
    %2286 = vmatpush1.xpose.msra.mxu0 0.0
    %2287 = vmatprep.subr.mxu0 0.0
    %2288 = vmatpush1.xpose.msra.mxu0 0.0
    %2289 = vmatprep.subr.mxu0 0.0
    %2290 = vmatpush1.xpose.msra.mxu0 0.0
    %2291 = vmatprep.subr.mxu0 0.0
    %2292 = vmatpush1.xpose.msra.mxu0 0.0
    %2293 = vmatprep.subr.mxu0 0.0
    %2294 = vmatpush1.xpose.msra.mxu0 0.0
    %2295 = vmatprep.mubr.f32.mxu0 0.0
    %2296 = vmatmul.mubr.f32.gmra.mrb[0].mxu0 %v2227
    %v2297 = vpop.f32.mrb[0].mxu0
    %v2298 = vadd.f32 0.5, %v2297
    %v2299 = vpop.f32.mrb[0].mxu0
    %2300 = vdwg.mxu0
    %v2301 = vsel %vm239, %v2298, -inf
    %2302 = vmax.xlane.f32.xlu0 %v2301
    %v2303 = vpop.xlane.xlu0 %2302
    %v2304 = vsub.f32 %v2298, %v2303
    %v2305 = vmul.f32 %v2304, 1.442695
    %v2306 = vpow.pop %v2305
    %v2307 = vsel %vm239, %v2306, 0.0
    %2308 = vadd.xlane.f32.xlu0 %v2307
    %v2309 = vpop.xlane.xlu0 %2308
    %v2310 = vrcp.pop %v2309
    %v2311 = vmul.f32 %v2306, %v2310
    %2312 = vrot.lane.b32.xlu0 %v2221, 48
    %v2313 = vpop.permute.xlu0 %2312
    %v2316 = vsel %vm239, %v2311, 0
    %2318 = vmatprep.subr.mxu0 0.0
    %2319 = vmatpush1.msra.mxu0 %v2313
    %2320 = vmatprep.subr.mxu0 0.0
    %2321 = vmatpush1.msra.mxu0 0.0
    %2322 = vmatprep.subr.mxu0 0.0
    %2323 = vmatpush1.msra.mxu0 0.0
    %2324 = vmatprep.subr.mxu0 0.0
    %2325 = vmatpush1.msra.mxu0 0.0
    %2326 = vmatprep.subr.mxu0 0.0
    %2327 = vmatpush1.msra.mxu0 0.0
    %2328 = vmatprep.subr.mxu0 0.0
    %2329 = vmatpush1.msra.mxu0 0.0
    %2330 = vmatprep.subr.mxu0 0.0
    %2331 = vmatpush1.msra.mxu0 0.0
    %2332 = vmatprep.subr.mxu0 0.0
    %2333 = vmatpush1.msra.mxu0 0.0
    %2334 = vmatprep.subr.mxu0 0.0
    %2335 = vmatpush1.msra.mxu0 0.0
    %2336 = vmatprep.subr.mxu0 0.0
    %2337 = vmatpush1.msra.mxu0 0.0
    %2338 = vmatprep.subr.mxu0 0.0
    %2339 = vmatpush1.msra.mxu0 0.0
    %2340 = vmatprep.subr.mxu0 0.0
    %2341 = vmatpush1.msra.mxu0 0.0
    %2342 = vmatprep.subr.mxu0 0.0
    %2343 = vmatpush1.msra.mxu0 0.0
    %2344 = vmatprep.subr.mxu0 0.0
    %2345 = vmatpush1.msra.mxu0 0.0
    %2346 = vmatprep.subr.mxu0 0.0
    %2347 = vmatpush1.msra.mxu0 0.0
    %2348 = vmatprep.subr.mxu0 0.0
    %2349 = vmatpush1.msra.mxu0 0.0
    %2350 = vmatprep.subr.mxu0 0.0
    %2351 = vmatpush1.msra.mxu0 0.0
    %2352 = vmatprep.subr.mxu0 0.0
    %2353 = vmatpush1.msra.mxu0 0.0
    %2354 = vmatprep.subr.mxu0 0.0
    %2355 = vmatpush1.msra.mxu0 0.0
    %2356 = vmatprep.subr.mxu0 0.0
    %2357 = vmatpush1.msra.mxu0 0.0
    %2358 = vmatprep.subr.mxu0 0.0
    %2359 = vmatpush1.msra.mxu0 0.0
    %2360 = vmatprep.subr.mxu0 0.0
    %2361 = vmatpush1.msra.mxu0 0.0
    %2362 = vmatprep.subr.mxu0 0.0
    %2363 = vmatpush1.msra.mxu0 0.0
    %2364 = vmatprep.subr.mxu0 0.0
    %2365 = vmatpush1.msra.mxu0 0.0
    %2366 = vmatprep.subr.mxu0 0.0
    %2367 = vmatpush1.msra.mxu0 0.0
    %2368 = vmatprep.subr.mxu0 0.0
    %2369 = vmatpush1.msra.mxu0 0.0
    %2370 = vmatprep.subr.mxu0 0.0
    %2371 = vmatpush1.msra.mxu0 0.0
    %2372 = vmatprep.subr.mxu0 0.0
    %2373 = vmatpush1.msra.mxu0 0.0
    %2374 = vmatprep.subr.mxu0 0.0
    %2375 = vmatpush1.msra.mxu0 0.0
    %2376 = vmatprep.subr.mxu0 0.0
    %2377 = vmatpush1.msra.mxu0 0.0
    %2378 = vmatprep.subr.mxu0 0.0
    %2379 = vmatpush1.msra.mxu0 0.0
    %2380 = vmatprep.subr.mxu0 0.0
    %2381 = vmatpush1.msra.mxu0 0.0
    %2382 = vmatprep.mubr.f32.mxu0 0.0
    %2383 = vmatmul.mubr.f32.gmra.mrb[0].mxu0 %v2316
    %v2384 = vpop.f32.mrb[0].mxu0
    %v2385 = vadd.f32 0.0, %v2384
    %v2386 = vpop.f32.mrb[0].mxu0
    %2387 = vdwg.mxu0
    %2389 = vrot.lane.b32.xlu0 %v2385, 16
    %v2390 = vpop.permute.xlu0 %2389
    %2392 = vst.msk [vmem:[#allocation3 + $0x8] sm:$0xff] %vm1018, %v2390
    %v2393 = vld [vmem:[#allocation2 + $0x8] sm:$0xff]
    %2395 = vrot.lane.b32.xlu0 %v2393, 108
    %v2396 = vpop.permute.xlu0 %2395
    %2397 = vrot.lane.b32.xlu0 %v2393, 76
    %v2398 = vpop.permute.xlu0 %2397
    %v2399 = vsel %vm164, %v2396, 0
    %v2401 = vsel %vm164, %v2398, 0
    %2403 = vmatprep.subr.mxu0 0.0
    %2404 = vmatpush1.xpose.msra.mxu0 %v2401
    %2405 = vmatprep.subr.mxu0 0.0
    %2406 = vmatpush1.xpose.msra.mxu0 0.0
    %2407 = vmatprep.subr.mxu0 0.0
    %2408 = vmatpush1.xpose.msra.mxu0 0.0
    %2409 = vmatprep.subr.mxu0 0.0
    %2410 = vmatpush1.xpose.msra.mxu0 0.0
    %2411 = vmatprep.subr.mxu0 0.0
    %2412 = vmatpush1.xpose.msra.mxu0 0.0
    %2413 = vmatprep.subr.mxu0 0.0
    %2414 = vmatpush1.xpose.msra.mxu0 0.0
    %2415 = vmatprep.subr.mxu0 0.0
    %2416 = vmatpush1.xpose.msra.mxu0 0.0
    %2417 = vmatprep.subr.mxu0 0.0
    %2418 = vmatpush1.xpose.msra.mxu0 0.0
    %2419 = vmatprep.subr.mxu0 0.0
    %2420 = vmatpush1.xpose.msra.mxu0 0.0
    %2421 = vmatprep.subr.mxu0 0.0
    %2422 = vmatpush1.xpose.msra.mxu0 0.0
    %2423 = vmatprep.subr.mxu0 0.0
    %2424 = vmatpush1.xpose.msra.mxu0 0.0
    %2425 = vmatprep.subr.mxu0 0.0
    %2426 = vmatpush1.xpose.msra.mxu0 0.0
    %2427 = vmatprep.subr.mxu0 0.0
    %2428 = vmatpush1.xpose.msra.mxu0 0.0
    %2429 = vmatprep.subr.mxu0 0.0
    %2430 = vmatpush1.xpose.msra.mxu0 0.0
    %2431 = vmatprep.subr.mxu0 0.0
    %2432 = vmatpush1.xpose.msra.mxu0 0.0
    %2433 = vmatprep.subr.mxu0 0.0
    %2434 = vmatpush1.xpose.msra.mxu0 0.0
    %2435 = vmatprep.subr.mxu0 0.0
    %2436 = vmatpush1.xpose.msra.mxu0 0.0
    %2437 = vmatprep.subr.mxu0 0.0
    %2438 = vmatpush1.xpose.msra.mxu0 0.0
    %2439 = vmatprep.subr.mxu0 0.0
    %2440 = vmatpush1.xpose.msra.mxu0 0.0
    %2441 = vmatprep.subr.mxu0 0.0
    %2442 = vmatpush1.xpose.msra.mxu0 0.0
    %2443 = vmatprep.subr.mxu0 0.0
    %2444 = vmatpush1.xpose.msra.mxu0 0.0
    %2445 = vmatprep.subr.mxu0 0.0
    %2446 = vmatpush1.xpose.msra.mxu0 0.0
    %2447 = vmatprep.subr.mxu0 0.0
    %2448 = vmatpush1.xpose.msra.mxu0 0.0
    %2449 = vmatprep.subr.mxu0 0.0
    %2450 = vmatpush1.xpose.msra.mxu0 0.0
    %2451 = vmatprep.subr.mxu0 0.0
    %2452 = vmatpush1.xpose.msra.mxu0 0.0
    %2453 = vmatprep.subr.mxu0 0.0
    %2454 = vmatpush1.xpose.msra.mxu0 0.0
    %2455 = vmatprep.subr.mxu0 0.0
    %2456 = vmatpush1.xpose.msra.mxu0 0.0
    %2457 = vmatprep.subr.mxu0 0.0
    %2458 = vmatpush1.xpose.msra.mxu0 0.0
    %2459 = vmatprep.subr.mxu0 0.0
    %2460 = vmatpush1.xpose.msra.mxu0 0.0
    %2461 = vmatprep.subr.mxu0 0.0
    %2462 = vmatpush1.xpose.msra.mxu0 0.0
    %2463 = vmatprep.subr.mxu0 0.0
    %2464 = vmatpush1.xpose.msra.mxu0 0.0
    %2465 = vmatprep.subr.mxu0 0.0
    %2466 = vmatpush1.xpose.msra.mxu0 0.0
    %2467 = vmatprep.mubr.f32.mxu0 0.0
    %2468 = vmatmul.mubr.f32.gmra.mrb[0].mxu0 %v2399
    %v2469 = vpop.f32.mrb[0].mxu0
    %v2470 = vadd.f32 0.5, %v2469
    %v2471 = vpop.f32.mrb[0].mxu0
    %2472 = vdwg.mxu0
    %v2473 = vsel %vm239, %v2470, -inf
    %2474 = vmax.xlane.f32.xlu0 %v2473
    %v2475 = vpop.xlane.xlu0 %2474
    %v2476 = vsub.f32 %v2470, %v2475
    %v2477 = vmul.f32 %v2476, 1.442695
    %v2478 = vpow.pop %v2477
    %v2479 = vsel %vm239, %v2478, 0.0
    %2480 = vadd.xlane.f32.xlu0 %v2479
    %v2481 = vpop.xlane.xlu0 %2480
    %v2482 = vrcp.pop %v2481
    %v2483 = vmul.f32 %v2478, %v2482
    %2484 = vrot.lane.b32.xlu0 %v2393, 44
    %v2485 = vpop.permute.xlu0 %2484
    %v2488 = vsel %vm239, %v2483, 0
    %2490 = vmatprep.subr.mxu0 0.0
    %2491 = vmatpush1.msra.mxu0 %v2485
    %2492 = vmatprep.subr.mxu0 0.0
    %2493 = vmatpush1.msra.mxu0 0.0
    %2494 = vmatprep.subr.mxu0 0.0
    %2495 = vmatpush1.msra.mxu0 0.0
    %2496 = vmatprep.subr.mxu0 0.0
    %2497 = vmatpush1.msra.mxu0 0.0
    %2498 = vmatprep.subr.mxu0 0.0
    %2499 = vmatpush1.msra.mxu0 0.0
    %2500 = vmatprep.subr.mxu0 0.0
    %2501 = vmatpush1.msra.mxu0 0.0
    %2502 = vmatprep.subr.mxu0 0.0
    %2503 = vmatpush1.msra.mxu0 0.0
    %2504 = vmatprep.subr.mxu0 0.0
    %2505 = vmatpush1.msra.mxu0 0.0
    %2506 = vmatprep.subr.mxu0 0.0
    %2507 = vmatpush1.msra.mxu0 0.0
    %2508 = vmatprep.subr.mxu0 0.0
    %2509 = vmatpush1.msra.mxu0 0.0
    %2510 = vmatprep.subr.mxu0 0.0
    %2511 = vmatpush1.msra.mxu0 0.0
    %2512 = vmatprep.subr.mxu0 0.0
    %2513 = vmatpush1.msra.mxu0 0.0
    %2514 = vmatprep.subr.mxu0 0.0
    %2515 = vmatpush1.msra.mxu0 0.0
    %2516 = vmatprep.subr.mxu0 0.0
    %2517 = vmatpush1.msra.mxu0 0.0
    %2518 = vmatprep.subr.mxu0 0.0
    %2519 = vmatpush1.msra.mxu0 0.0
    %2520 = vmatprep.subr.mxu0 0.0
    %2521 = vmatpush1.msra.mxu0 0.0
    %2522 = vmatprep.subr.mxu0 0.0
    %2523 = vmatpush1.msra.mxu0 0.0
    %2524 = vmatprep.subr.mxu0 0.0
    %2525 = vmatpush1.msra.mxu0 0.0
    %2526 = vmatprep.subr.mxu0 0.0
    %2527 = vmatpush1.msra.mxu0 0.0
    %2528 = vmatprep.subr.mxu0 0.0
    %2529 = vmatpush1.msra.mxu0 0.0
    %2530 = vmatprep.subr.mxu0 0.0
    %2531 = vmatpush1.msra.mxu0 0.0
    %2532 = vmatprep.subr.mxu0 0.0
    %2533 = vmatpush1.msra.mxu0 0.0
    %2534 = vmatprep.subr.mxu0 0.0
    %2535 = vmatpush1.msra.mxu0 0.0
    %2536 = vmatprep.subr.mxu0 0.0
    %2537 = vmatpush1.msra.mxu0 0.0
    %2538 = vmatprep.subr.mxu0 0.0
    %2539 = vmatpush1.msra.mxu0 0.0
    %2540 = vmatprep.subr.mxu0 0.0
    %2541 = vmatpush1.msra.mxu0 0.0
    %2542 = vmatprep.subr.mxu0 0.0
    %2543 = vmatpush1.msra.mxu0 0.0
    %2544 = vmatprep.subr.mxu0 0.0
    %2545 = vmatpush1.msra.mxu0 0.0
    %2546 = vmatprep.subr.mxu0 0.0
    %2547 = vmatpush1.msra.mxu0 0.0
    %2548 = vmatprep.subr.mxu0 0.0
    %2549 = vmatpush1.msra.mxu0 0.0
    %2550 = vmatprep.subr.mxu0 0.0
    %2551 = vmatpush1.msra.mxu0 0.0
    %2552 = vmatprep.subr.mxu0 0.0
    %2553 = vmatpush1.msra.mxu0 0.0
    %2554 = vmatprep.mubr.f32.mxu0 0.0
    %2555 = vmatmul.mubr.f32.gmra.mrb[0].mxu0 %v2488
    %v2556 = vpop.f32.mrb[0].mxu0
    %v2557 = vadd.f32 0.0, %v2556
    %v2558 = vpop.f32.mrb[0].mxu0
    %2559 = vdwg.mxu0
    %2561 = vrot.lane.b32.xlu0 %v2557, 20
    %v2562 = vpop.permute.xlu0 %2561
    %2564 = vst.msk [vmem:[#allocation3 + $0x8] sm:$0xff] %vm1191, %v2562
    %v2565 = vld [vmem:[#allocation2 + $0x8] sm:$0xff]
    %2567 = vrot.lane.b32.xlu0 %v2565, 104
    %v2568 = vpop.permute.xlu0 %2567
    %2569 = vrot.lane.b32.xlu0 %v2565, 72
    %v2570 = vpop.permute.xlu0 %2569
    %v2571 = vsel %vm164, %v2568, 0
    %v2573 = vsel %vm164, %v2570, 0
    %2575 = vmatprep.subr.mxu0 0.0
    %2576 = vmatpush1.xpose.msra.mxu0 %v2573
    %2577 = vmatprep.subr.mxu0 0.0
    %2578 = vmatpush1.xpose.msra.mxu0 0.0
    %2579 = vmatprep.subr.mxu0 0.0
    %2580 = vmatpush1.xpose.msra.mxu0 0.0
    %2581 = vmatprep.subr.mxu0 0.0
    %2582 = vmatpush1.xpose.msra.mxu0 0.0
    %2583 = vmatprep.subr.mxu0 0.0
    %2584 = vmatpush1.xpose.msra.mxu0 0.0
    %2585 = vmatprep.subr.mxu0 0.0
    %2586 = vmatpush1.xpose.msra.mxu0 0.0
    %2587 = vmatprep.subr.mxu0 0.0
    %2588 = vmatpush1.xpose.msra.mxu0 0.0
    %2589 = vmatprep.subr.mxu0 0.0
    %2590 = vmatpush1.xpose.msra.mxu0 0.0
    %2591 = vmatprep.subr.mxu0 0.0
    %2592 = vmatpush1.xpose.msra.mxu0 0.0
    %2593 = vmatprep.subr.mxu0 0.0
    %2594 = vmatpush1.xpose.msra.mxu0 0.0
    %2595 = vmatprep.subr.mxu0 0.0
    %2596 = vmatpush1.xpose.msra.mxu0 0.0
    %2597 = vmatprep.subr.mxu0 0.0
    %2598 = vmatpush1.xpose.msra.mxu0 0.0
    %2599 = vmatprep.subr.mxu0 0.0
    %2600 = vmatpush1.xpose.msra.mxu0 0.0
    %2601 = vmatprep.subr.mxu0 0.0
    %2602 = vmatpush1.xpose.msra.mxu0 0.0
    %2603 = vmatprep.subr.mxu0 0.0
    %2604 = vmatpush1.xpose.msra.mxu0 0.0
    %2605 = vmatprep.subr.mxu0 0.0
    %2606 = vmatpush1.xpose.msra.mxu0 0.0
    %2607 = vmatprep.subr.mxu0 0.0
    %2608 = vmatpush1.xpose.msra.mxu0 0.0
    %2609 = vmatprep.subr.mxu0 0.0
    %2610 = vmatpush1.xpose.msra.mxu0 0.0
    %2611 = vmatprep.subr.mxu0 0.0
    %2612 = vmatpush1.xpose.msra.mxu0 0.0
    %2613 = vmatprep.subr.mxu0 0.0
    %2614 = vmatpush1.xpose.msra.mxu0 0.0
    %2615 = vmatprep.subr.mxu0 0.0
    %2616 = vmatpush1.xpose.msra.mxu0 0.0
    %2617 = vmatprep.subr.mxu0 0.0
    %2618 = vmatpush1.xpose.msra.mxu0 0.0
    %2619 = vmatprep.subr.mxu0 0.0
    %2620 = vmatpush1.xpose.msra.mxu0 0.0
    %2621 = vmatprep.subr.mxu0 0.0
    %2622 = vmatpush1.xpose.msra.mxu0 0.0
    %2623 = vmatprep.subr.mxu0 0.0
    %2624 = vmatpush1.xpose.msra.mxu0 0.0
    %2625 = vmatprep.subr.mxu0 0.0
    %2626 = vmatpush1.xpose.msra.mxu0 0.0
    %2627 = vmatprep.subr.mxu0 0.0
    %2628 = vmatpush1.xpose.msra.mxu0 0.0
    %2629 = vmatprep.subr.mxu0 0.0
    %2630 = vmatpush1.xpose.msra.mxu0 0.0
    %2631 = vmatprep.subr.mxu0 0.0
    %2632 = vmatpush1.xpose.msra.mxu0 0.0
    %2633 = vmatprep.subr.mxu0 0.0
    %2634 = vmatpush1.xpose.msra.mxu0 0.0
    %2635 = vmatprep.subr.mxu0 0.0
    %2636 = vmatpush1.xpose.msra.mxu0 0.0
    %2637 = vmatprep.subr.mxu0 0.0
    %2638 = vmatpush1.xpose.msra.mxu0 0.0
    %2639 = vmatprep.mubr.f32.mxu0 0.0
    %2640 = vmatmul.mubr.f32.gmra.mrb[0].mxu0 %v2571
    %v2641 = vpop.f32.mrb[0].mxu0
    %v2642 = vadd.f32 0.5, %v2641
    %v2643 = vpop.f32.mrb[0].mxu0
    %2644 = vdwg.mxu0
    %v2645 = vsel %vm239, %v2642, -inf
    %2646 = vmax.xlane.f32.xlu0 %v2645
    %v2647 = vpop.xlane.xlu0 %2646
    %v2648 = vsub.f32 %v2642, %v2647
    %v2649 = vmul.f32 %v2648, 1.442695
    %v2650 = vpow.pop %v2649
    %v2651 = vsel %vm239, %v2650, 0.0
    %2652 = vadd.xlane.f32.xlu0 %v2651
    %v2653 = vpop.xlane.xlu0 %2652
    %v2654 = vrcp.pop %v2653
    %v2655 = vmul.f32 %v2650, %v2654
    %2656 = vrot.lane.b32.xlu0 %v2565, 40
    %v2657 = vpop.permute.xlu0 %2656
    %v2660 = vsel %vm239, %v2655, 0
    %2662 = vmatprep.subr.mxu0 0.0
    %2663 = vmatpush1.msra.mxu0 %v2657
    %2664 = vmatprep.subr.mxu0 0.0
    %2665 = vmatpush1.msra.mxu0 0.0
    %2666 = vmatprep.subr.mxu0 0.0
    %2667 = vmatpush1.msra.mxu0 0.0
    %2668 = vmatprep.subr.mxu0 0.0
    %2669 = vmatpush1.msra.mxu0 0.0
    %2670 = vmatprep.subr.mxu0 0.0
    %2671 = vmatpush1.msra.mxu0 0.0
    %2672 = vmatprep.subr.mxu0 0.0
    %2673 = vmatpush1.msra.mxu0 0.0
    %2674 = vmatprep.subr.mxu0 0.0
    %2675 = vmatpush1.msra.mxu0 0.0
    %2676 = vmatprep.subr.mxu0 0.0
    %2677 = vmatpush1.msra.mxu0 0.0
    %2678 = vmatprep.subr.mxu0 0.0
    %2679 = vmatpush1.msra.mxu0 0.0
    %2680 = vmatprep.subr.mxu0 0.0
    %2681 = vmatpush1.msra.mxu0 0.0
    %2682 = vmatprep.subr.mxu0 0.0
    %2683 = vmatpush1.msra.mxu0 0.0
    %2684 = vmatprep.subr.mxu0 0.0
    %2685 = vmatpush1.msra.mxu0 0.0
    %2686 = vmatprep.subr.mxu0 0.0
    %2687 = vmatpush1.msra.mxu0 0.0
    %2688 = vmatprep.subr.mxu0 0.0
    %2689 = vmatpush1.msra.mxu0 0.0
    %2690 = vmatprep.subr.mxu0 0.0
    %2691 = vmatpush1.msra.mxu0 0.0
    %2692 = vmatprep.subr.mxu0 0.0
    %2693 = vmatpush1.msra.mxu0 0.0
    %2694 = vmatprep.subr.mxu0 0.0
    %2695 = vmatpush1.msra.mxu0 0.0
    %2696 = vmatprep.subr.mxu0 0.0
    %2697 = vmatpush1.msra.mxu0 0.0
    %2698 = vmatprep.subr.mxu0 0.0
    %2699 = vmatpush1.msra.mxu0 0.0
    %2700 = vmatprep.subr.mxu0 0.0
    %2701 = vmatpush1.msra.mxu0 0.0
    %2702 = vmatprep.subr.mxu0 0.0
    %2703 = vmatpush1.msra.mxu0 0.0
    %2704 = vmatprep.subr.mxu0 0.0
    %2705 = vmatpush1.msra.mxu0 0.0
    %2706 = vmatprep.subr.mxu0 0.0
    %2707 = vmatpush1.msra.mxu0 0.0
    %2708 = vmatprep.subr.mxu0 0.0
    %2709 = vmatpush1.msra.mxu0 0.0
    %2710 = vmatprep.subr.mxu0 0.0
    %2711 = vmatpush1.msra.mxu0 0.0
    %2712 = vmatprep.subr.mxu0 0.0
    %2713 = vmatpush1.msra.mxu0 0.0
    %2714 = vmatprep.subr.mxu0 0.0
    %2715 = vmatpush1.msra.mxu0 0.0
    %2716 = vmatprep.subr.mxu0 0.0
    %2717 = vmatpush1.msra.mxu0 0.0
    %2718 = vmatprep.subr.mxu0 0.0
    %2719 = vmatpush1.msra.mxu0 0.0
    %2720 = vmatprep.subr.mxu0 0.0
    %2721 = vmatpush1.msra.mxu0 0.0
    %2722 = vmatprep.subr.mxu0 0.0
    %2723 = vmatpush1.msra.mxu0 0.0
    %2724 = vmatprep.subr.mxu0 0.0
    %2725 = vmatpush1.msra.mxu0 0.0
    %2726 = vmatprep.mubr.f32.mxu0 0.0
    %2727 = vmatmul.mubr.f32.gmra.mrb[0].mxu0 %v2660
    %v2728 = vpop.f32.mrb[0].mxu0
    %v2729 = vadd.f32 0.0, %v2728
    %v2730 = vpop.f32.mrb[0].mxu0
    %2731 = vdwg.mxu0
    %2733 = vrot.lane.b32.xlu0 %v2729, 24
    %v2734 = vpop.permute.xlu0 %2733
    %2736 = vst.msk [vmem:[#allocation3 + $0x8] sm:$0xff] %vm1364, %v2734
    %v2737 = vld [vmem:[#allocation2 + $0x8] sm:$0xff]
    %2739 = vrot.lane.b32.xlu0 %v2737, 100
    %v2740 = vpop.permute.xlu0 %2739
    %2741 = vrot.lane.b32.xlu0 %v2737, 68
    %v2742 = vpop.permute.xlu0 %2741
    %v2743 = vsel %vm164, %v2740, 0
    %v2745 = vsel %vm164, %v2742, 0
    %2747 = vmatprep.subr.mxu0 0.0
    %2748 = vmatpush1.xpose.msra.mxu0 %v2745
    %2749 = vmatprep.subr.mxu0 0.0
    %2750 = vmatpush1.xpose.msra.mxu0 0.0
    %2751 = vmatprep.subr.mxu0 0.0
    %2752 = vmatpush1.xpose.msra.mxu0 0.0
    %2753 = vmatprep.subr.mxu0 0.0
    %2754 = vmatpush1.xpose.msra.mxu0 0.0
    %2755 = vmatprep.subr.mxu0 0.0
    %2756 = vmatpush1.xpose.msra.mxu0 0.0
    %2757 = vmatprep.subr.mxu0 0.0
    %2758 = vmatpush1.xpose.msra.mxu0 0.0
    %2759 = vmatprep.subr.mxu0 0.0
    %2760 = vmatpush1.xpose.msra.mxu0 0.0
    %2761 = vmatprep.subr.mxu0 0.0
    %2762 = vmatpush1.xpose.msra.mxu0 0.0
    %2763 = vmatprep.subr.mxu0 0.0
    %2764 = vmatpush1.xpose.msra.mxu0 0.0
    %2765 = vmatprep.subr.mxu0 0.0
    %2766 = vmatpush1.xpose.msra.mxu0 0.0
    %2767 = vmatprep.subr.mxu0 0.0
    %2768 = vmatpush1.xpose.msra.mxu0 0.0
    %2769 = vmatprep.subr.mxu0 0.0
    %2770 = vmatpush1.xpose.msra.mxu0 0.0
    %2771 = vmatprep.subr.mxu0 0.0
    %2772 = vmatpush1.xpose.msra.mxu0 0.0
    %2773 = vmatprep.subr.mxu0 0.0
    %2774 = vmatpush1.xpose.msra.mxu0 0.0
    %2775 = vmatprep.subr.mxu0 0.0
    %2776 = vmatpush1.xpose.msra.mxu0 0.0
    %2777 = vmatprep.subr.mxu0 0.0
    %2778 = vmatpush1.xpose.msra.mxu0 0.0
    %2779 = vmatprep.subr.mxu0 0.0
    %2780 = vmatpush1.xpose.msra.mxu0 0.0
    %2781 = vmatprep.subr.mxu0 0.0
    %2782 = vmatpush1.xpose.msra.mxu0 0.0
    %2783 = vmatprep.subr.mxu0 0.0
    %2784 = vmatpush1.xpose.msra.mxu0 0.0
    %2785 = vmatprep.subr.mxu0 0.0
    %2786 = vmatpush1.xpose.msra.mxu0 0.0
    %2787 = vmatprep.subr.mxu0 0.0
    %2788 = vmatpush1.xpose.msra.mxu0 0.0
    %2789 = vmatprep.subr.mxu0 0.0
    %2790 = vmatpush1.xpose.msra.mxu0 0.0
    %2791 = vmatprep.subr.mxu0 0.0
    %2792 = vmatpush1.xpose.msra.mxu0 0.0
    %2793 = vmatprep.subr.mxu0 0.0
    %2794 = vmatpush1.xpose.msra.mxu0 0.0
    %2795 = vmatprep.subr.mxu0 0.0
    %2796 = vmatpush1.xpose.msra.mxu0 0.0
    %2797 = vmatprep.subr.mxu0 0.0
    %2798 = vmatpush1.xpose.msra.mxu0 0.0
    %2799 = vmatprep.subr.mxu0 0.0
    %2800 = vmatpush1.xpose.msra.mxu0 0.0
    %2801 = vmatprep.subr.mxu0 0.0
    %2802 = vmatpush1.xpose.msra.mxu0 0.0
    %2803 = vmatprep.subr.mxu0 0.0
    %2804 = vmatpush1.xpose.msra.mxu0 0.0
    %2805 = vmatprep.subr.mxu0 0.0
    %2806 = vmatpush1.xpose.msra.mxu0 0.0
    %2807 = vmatprep.subr.mxu0 0.0
    %2808 = vmatpush1.xpose.msra.mxu0 0.0
    %2809 = vmatprep.subr.mxu0 0.0
    %2810 = vmatpush1.xpose.msra.mxu0 0.0
    %2811 = vmatprep.mubr.f32.mxu0 0.0
    %2812 = vmatmul.mubr.f32.gmra.mrb[0].mxu0 %v2743
    %v2813 = vpop.f32.mrb[0].mxu0
    %v2814 = vadd.f32 0.5, %v2813
    %v2815 = vpop.f32.mrb[0].mxu0
    %2816 = vdwg.mxu0
    %v2817 = vsel %vm239, %v2814, -inf
    %2818 = vmax.xlane.f32.xlu0 %v2817
    %v2819 = vpop.xlane.xlu0 %2818
    %v2820 = vsub.f32 %v2814, %v2819
    %v2821 = vmul.f32 %v2820, 1.442695
    %v2822 = vpow.pop %v2821
    %v2823 = vsel %vm239, %v2822, 0.0
    %2824 = vadd.xlane.f32.xlu0 %v2823
    %v2825 = vpop.xlane.xlu0 %2824
    %v2826 = vrcp.pop %v2825
    %v2827 = vmul.f32 %v2822, %v2826
    %2828 = vrot.lane.b32.xlu0 %v2737, 36
    %v2829 = vpop.permute.xlu0 %2828
    %v2832 = vsel %vm239, %v2827, 0
    %2834 = vmatprep.subr.mxu0 0.0
    %2835 = vmatpush1.msra.mxu0 %v2829
    %2836 = vmatprep.subr.mxu0 0.0
    %2837 = vmatpush1.msra.mxu0 0.0
    %2838 = vmatprep.subr.mxu0 0.0
    %2839 = vmatpush1.msra.mxu0 0.0
    %2840 = vmatprep.subr.mxu0 0.0
    %2841 = vmatpush1.msra.mxu0 0.0
    %2842 = vmatprep.subr.mxu0 0.0
    %2843 = vmatpush1.msra.mxu0 0.0
    %2844 = vmatprep.subr.mxu0 0.0
    %2845 = vmatpush1.msra.mxu0 0.0
    %2846 = vmatprep.subr.mxu0 0.0
    %2847 = vmatpush1.msra.mxu0 0.0
    %2848 = vmatprep.subr.mxu0 0.0
    %2849 = vmatpush1.msra.mxu0 0.0
    %2850 = vmatprep.subr.mxu0 0.0
    %2851 = vmatpush1.msra.mxu0 0.0
    %2852 = vmatprep.subr.mxu0 0.0
    %2853 = vmatpush1.msra.mxu0 0.0
    %2854 = vmatprep.subr.mxu0 0.0
    %2855 = vmatpush1.msra.mxu0 0.0
    %2856 = vmatprep.subr.mxu0 0.0
    %2857 = vmatpush1.msra.mxu0 0.0
    %2858 = vmatprep.subr.mxu0 0.0
    %2859 = vmatpush1.msra.mxu0 0.0
    %2860 = vmatprep.subr.mxu0 0.0
    %2861 = vmatpush1.msra.mxu0 0.0
    %2862 = vmatprep.subr.mxu0 0.0
    %2863 = vmatpush1.msra.mxu0 0.0
    %2864 = vmatprep.subr.mxu0 0.0
    %2865 = vmatpush1.msra.mxu0 0.0
    %2866 = vmatprep.subr.mxu0 0.0
    %2867 = vmatpush1.msra.mxu0 0.0
    %2868 = vmatprep.subr.mxu0 0.0
    %2869 = vmatpush1.msra.mxu0 0.0
    %2870 = vmatprep.subr.mxu0 0.0
    %2871 = vmatpush1.msra.mxu0 0.0
    %2872 = vmatprep.subr.mxu0 0.0
    %2873 = vmatpush1.msra.mxu0 0.0
    %2874 = vmatprep.subr.mxu0 0.0
    %2875 = vmatpush1.msra.mxu0 0.0
    %2876 = vmatprep.subr.mxu0 0.0
    %2877 = vmatpush1.msra.mxu0 0.0
    %2878 = vmatprep.subr.mxu0 0.0
    %2879 = vmatpush1.msra.mxu0 0.0
    %2880 = vmatprep.subr.mxu0 0.0
    %2881 = vmatpush1.msra.mxu0 0.0
    %2882 = vmatprep.subr.mxu0 0.0
    %2883 = vmatpush1.msra.mxu0 0.0
    %2884 = vmatprep.subr.mxu0 0.0
    %2885 = vmatpush1.msra.mxu0 0.0
    %2886 = vmatprep.subr.mxu0 0.0
    %2887 = vmatpush1.msra.mxu0 0.0
    %2888 = vmatprep.subr.mxu0 0.0
    %2889 = vmatpush1.msra.mxu0 0.0
    %2890 = vmatprep.subr.mxu0 0.0
    %2891 = vmatpush1.msra.mxu0 0.0
    %2892 = vmatprep.subr.mxu0 0.0
    %2893 = vmatpush1.msra.mxu0 0.0
    %2894 = vmatprep.subr.mxu0 0.0
    %2895 = vmatpush1.msra.mxu0 0.0
    %2896 = vmatprep.subr.mxu0 0.0
    %2897 = vmatpush1.msra.mxu0 0.0
    %2898 = vmatprep.mubr.f32.mxu0 0.0
    %2899 = vmatmul.mubr.f32.gmra.mrb[0].mxu0 %v2832
    %v2900 = vpop.f32.mrb[0].mxu0
    %v2901 = vadd.f32 0.0, %v2900
    %v2902 = vpop.f32.mrb[0].mxu0
    %2903 = vdwg.mxu0
    %2905 = vrot.lane.b32.xlu0 %v2901, 28
    %v2906 = vpop.permute.xlu0 %2905
    %2908 = vst.msk [vmem:[#allocation3 + $0x8] sm:$0xff] %vm1537, %v2906
    %v2909 = vld [vmem:[#allocation3] sm:$0xff]
    %v2910 = vld [vmem:[#allocation3 + $0x8] sm:$0xff]
    %v2911 = vld [vmem:[#allocation9] sm:$0xff]
    %v2912 = vld [vmem:[#allocation9 + $0x8] sm:$0xff]
    %v2913 = vld [vmem:[#allocation9 + $0x10] sm:$0xff]
    %v2914 = vld [vmem:[#allocation9 + $0x18] sm:$0xff]
    %v2915 = vld [vmem:[%s4] sm:$0x1]
    %v2917 = vlaneseq
    %v2918 = vshrl.u32 %v2917, 7
    %v2919 = vsub.s32 0, %v2918
    %v2920 = vrot.slane %v2915, %v2919
    %v2923 = vsel %vm75, %v2909, 0
    %v2926 = vsel %vm75, %v2910, 0
    %2928 = vmatprep.subr.mxu0 0.0
    %2929 = vmatpush1.msra.mxu0 %v2911
    %2930 = vmatprep.subr.mxu0 0.0
    %2931 = vmatpush1.msra.mxu0 %v2912
    %2932 = vmatprep.subr.mxu0 0.0
    %2933 = vmatpush1.msra.mxu0 %v2913
    %2934 = vmatprep.subr.mxu0 0.0
    %2935 = vmatpush1.msra.mxu0 %v2914
    %2936 = vmatprep.subr.mxu0 0.0
    %2937 = vmatpush1.msra.mxu0 0.0
    %2938 = vmatprep.subr.mxu0 0.0
    %2939 = vmatpush1.msra.mxu0 0.0
    %2940 = vmatprep.subr.mxu0 0.0
    %2941 = vmatpush1.msra.mxu0 0.0
    %2942 = vmatprep.subr.mxu0 0.0
    %2943 = vmatpush1.msra.mxu0 0.0
    %2944 = vmatprep.subr.mxu0 0.0
    %2945 = vmatpush1.msra.mxu0 0.0
    %2946 = vmatprep.subr.mxu0 0.0
    %2947 = vmatpush1.msra.mxu0 0.0
    %2948 = vmatprep.subr.mxu0 0.0
    %2949 = vmatpush1.msra.mxu0 0.0
    %2950 = vmatprep.subr.mxu0 0.0
    %2951 = vmatpush1.msra.mxu0 0.0
    %2952 = vmatprep.subr.mxu0 0.0
    %2953 = vmatpush1.msra.mxu0 0.0
    %2954 = vmatprep.subr.mxu0 0.0
    %2955 = vmatpush1.msra.mxu0 0.0
    %2956 = vmatprep.subr.mxu0 0.0
    %2957 = vmatpush1.msra.mxu0 0.0
    %2958 = vmatprep.subr.mxu0 0.0
    %2959 = vmatpush1.msra.mxu0 0.0
    %2960 = vmatprep.subr.mxu0 0.0
    %2961 = vmatpush1.msra.mxu0 0.0
    %2962 = vmatprep.subr.mxu0 0.0
    %2963 = vmatpush1.msra.mxu0 0.0
    %2964 = vmatprep.subr.mxu0 0.0
    %2965 = vmatpush1.msra.mxu0 0.0
    %2966 = vmatprep.subr.mxu0 0.0
    %2967 = vmatpush1.msra.mxu0 0.0
    %2968 = vmatprep.subr.mxu0 0.0
    %2969 = vmatpush1.msra.mxu0 0.0
    %2970 = vmatprep.subr.mxu0 0.0
    %2971 = vmatpush1.msra.mxu0 0.0
    %2972 = vmatprep.subr.mxu0 0.0
    %2973 = vmatpush1.msra.mxu0 0.0
    %2974 = vmatprep.subr.mxu0 0.0
    %2975 = vmatpush1.msra.mxu0 0.0
    %2976 = vmatprep.subr.mxu0 0.0
    %2977 = vmatpush1.msra.mxu0 0.0
    %2978 = vmatprep.subr.mxu0 0.0
    %2979 = vmatpush1.msra.mxu0 0.0
    %2980 = vmatprep.subr.mxu0 0.0
    %2981 = vmatpush1.msra.mxu0 0.0
    %2982 = vmatprep.subr.mxu0 0.0
    %2983 = vmatpush1.msra.mxu0 0.0
    %2984 = vmatprep.subr.mxu0 0.0
    %2985 = vmatpush1.msra.mxu0 0.0
    %2986 = vmatprep.subr.mxu0 0.0
    %2987 = vmatpush1.msra.mxu0 0.0
    %2988 = vmatprep.subr.mxu0 0.0
    %2989 = vmatpush1.msra.mxu0 0.0
    %2990 = vmatprep.subr.mxu0 0.0
    %2991 = vmatpush1.msra.mxu0 0.0
    %2992 = vmatprep.mubr.f32.mxu0 0.0
    %2993 = vmatmul.mubr.f32.gmra.mrb[0].mxu0 %v2923
    %v2994 = vpop.f32.mrb[0].mxu0
    %v2995 = vadd.f32 %v2920, %v2994
    %v2996 = vpop.f32.mrb[0].mxu0
    %2997 = vmatprep.mubr.f32.mxu0 0.0
    %2998 = vmatmul.mubr.f32.gmra.mrb[0].mxu0 %v2926
    %v2999 = vpop.f32.mrb[0].mxu0
    %v3000 = vadd.f32 %v2920, %v2999
    %v3001 = vpop.f32.mrb[0].mxu0
    %3002 = vdwg.mxu0
    %3003 = vst.msk [vmem:[#allocation10] sm:$0xff] %vm75, %v2995
    %3004 = vst.msk [vmem:[#allocation10 + $0x8] sm:$0xff] %vm75, %v3000
    // Predicated region
    $region34: #{tpu_custom_call.1} parent=1 // pred_check
      _
    $region35: #{tpu_custom_call.1} parent=1 // pred_check_branch
      %3006 = sbr.rel (0) target = $region37
    $region36: #{tpu_custom_call.1} parent=1 // pred_region
      %s3008 = ssub.s32 256, 256
      %3009 = vsyncadd [#allocation6], %s3008
      %s3010 = sshll.u32 [#allocation10], 4
      %s3011 = int_to_ptr.vmem [resolvable:$true] %s3010
      %3016 = dma.vmem_to_hbm [thread:$0]  %s3011, 256, %s5, [#allocation6], 128, 128, 8
    $region37: #{tpu_custom_call.1} parent=1 // pred_fallthru
      _
    // Predicated region
    $region38: #{tpu_custom_call.1} parent=1 // pred_check
      _
    $region39: #{tpu_custom_call.1} parent=1 // pred_check_branch
      %3018 = sbr.rel (0) target = $region41
    $region40: #{tpu_custom_call.1} parent=1 // pred_region
      %3019 = dma.done [#allocation6], 256
    $region41: #{tpu_custom_call.1} parent=1 // pred_fallthru
      _
    %3020 = vsyncpa [#allocation5], 1
    %3021 = vsyncpa [#allocation8], 1
    %3022 = vsyncpa [#allocation6], 1

</llo_original>
